<compile_context>
chip_gen: v7x
topology: tpu7x:2x2x1
jax: 0.10.0
libtpu: 0.0.40
codegen_flags: <defaults>
</compile_context>

<pallas_src>
import jax
import jax.numpy as jnp
from jax import lax
from jax.experimental import pallas as pl
from jax.experimental.pallas import tpu as pltpu

LABEL_SIZE = 4

# Geometry implied by the module: fc1 expects 12*5*25 = 1500 features, so the
# spatial input must be 32x112:
#   conv1: 32x112 -> 28x108 ; pool -> 14x54
#   conv2: 14x54  -> 10x50  ; pool -> 5x25 ; 12*5*25 = 1500
N_IMG, C_IN, H_IN, W_IN = 4, 3, 32, 112
NB = 2                                    # images per grid step (lane-stacked)
C1, C2, KSZ, HIDDEN = 6, 12, 5, 150

OH1, OW1 = H_IN - KSZ + 1, W_IN - KSZ + 1      # 28, 108
PH1, PW1 = OH1 // 2, OW1 // 2                  # 14, 54
OH2, OW2 = PH1 - KSZ + 1, PW1 - KSZ + 1        # 10, 50
PH2, PW2 = OH2 // 2, OW2 // 2                  # 5, 25

R0 = C_IN * H_IN                               # 96  rows of conv1 input
R1 = C1 * OH1                                  # 168 rows of conv1 output
RP1 = C1 * PH1                                 # 84  rows of pool1 output
R2 = C2 * OH2                                  # 120 rows of conv2 output
RP2 = C2 * PH2                                 # 60  rows of pool2 output

W0 = NB * W_IN                                 # 224 lanes of conv1 input
WOUT1 = W0 - (KSZ - 1)                         # 220 lanes of conv1 output
WP1 = NB * PW1                                 # 108 lanes of pool1 output
WOUT2 = WP1 - (KSZ - 1)                        # 104 lanes of conv2 output

# 2x2 pooling never straddles a channel / image boundary only because these
# extents are all even -- static guard (correctness-review item).
assert OH1 % 2 == 0 and OW1 % 2 == 0 and OH2 % 2 == 0 and OW2 % 2 == 0
assert C2 * PH2 * PW2 == 1500
assert N_IMG % NB == 0


# ---------------------------------------------------------------------------
# The single fused Pallas kernel (one grid step == one block of NB images)
# ---------------------------------------------------------------------------
def _net_fused_kernel(a0_ref, t1_ref, b1_ref, sh1_ref, sw1_ref,
                      t2_ref, b2_ref, sh2_ref, sw2_ref,
                      wfc1_ref, bfc1_ref, wfc3_ref, bfc3_ref, out_ref):
    f32, bf16 = jnp.float32, jnp.bfloat16

    # ---- conv1 + bias + relu : one deep-K matmul (kj folded into K) --------
    a0 = a0_ref[0]                                            # (96, 224) bf16
    a1 = jnp.concatenate([a0[:, kj:kj + WOUT1] for kj in range(KSZ)],
                         axis=0)                              # (480, 220)
    c1 = jnp.dot(t1_ref[...], a1, preferred_element_type=f32)  # (168, 220)
    c1 = jnp.maximum(c1 + b1_ref[...], 0.0)

    # ---- maxpool1: row pair-max -> row select -> col pair-max -> col select
    rmax1 = jnp.maximum(c1[:-1, :], c1[1:, :])                # (167, 220) f32
    rsel1 = jnp.dot(sh1_ref[...], rmax1.astype(bf16),
                    preferred_element_type=f32)               # (84, 220)
    cmax1 = jnp.maximum(rsel1[:, :-1], rsel1[:, 1:])          # (84, 219)
    p1 = jnp.dot(cmax1.astype(bf16), sw1_ref[...],
                 preferred_element_type=f32).astype(bf16)     # (84, 108)

    # ---- conv2 + bias + relu ------------------------------------------------
    a2 = jnp.concatenate([p1[:, kj:kj + WOUT2] for kj in range(KSZ)],
                         axis=0)                              # (420, 104)
    c2 = jnp.dot(t2_ref[...], a2, preferred_element_type=f32)  # (120, 104)
    c2 = jnp.maximum(c2 + b2_ref[...], 0.0)

    # ---- maxpool2 -----------------------------------------------------------
    rmax2 = jnp.maximum(c2[:-1, :], c2[1:, :])                # (119, 104)
    rsel2 = jnp.dot(sh2_ref[...], rmax2.astype(bf16),
                    preferred_element_type=f32)               # (60, 104)
    cmax2 = jnp.maximum(rsel2[:, :-1], rsel2[:, 1:])          # (60, 103)
    p2 = jnp.dot(cmax2.astype(bf16), sw2_ref[...],
                 preferred_element_type=f32).astype(bf16)     # (60, 50)
    # p2: rows = (c2, oh3), cols = ow3*NB + n  (image-interleaved lane order)

    # ---- fc1 + relu + fc3, batched over the NB images of this block --------
    # Gather the 25 (60, NB) column pairs into the contraction axis: one
    # (150, 1500) @ (1500, NB) matmul replaces the old block-diagonal trick.
    g = jnp.concatenate([p2[:, NB * ow:NB * ow + NB] for ow in range(PW2)],
                        axis=0)                               # (1500, NB) bf16
    h = jnp.dot(wfc1_ref[...], g, preferred_element_type=f32)  # (150, NB)
    h = jnp.maximum(h + bfc1_ref[...], 0.0).astype(bf16)
    o = jnp.dot(wfc3_ref[...], h, preferred_element_type=f32) + bfc3_ref[...]
    out_ref[0] = o                                            # (4, NB)


# ---------------------------------------------------------------------------
# One-time weight re-layout (done at init, NOT per forward call)
# ---------------------------------------------------------------------------
def _conv_mix_matrix(w, h_in):
    """Batch-independent structured matrix implementing the (ci, ki) part of a
    VALID KxK conv as a left matmul on the (Cin*Hin, lanes=W) activation
    layout; the 5 kj blocks are concatenated along the contraction axis."""
    c_out, c_in, k, _ = w.shape
    oh = h_in - k + 1
    rows, cols = c_out * oh, c_in * h_in
    r = jnp.arange(rows)
    co_r, oh_r = r // oh, r % oh
    c = jnp.arange(cols)
    ci_c, h_c = c // h_in, c % h_in
    ki = h_c[None, :] - oh_r[:, None]                         # (rows, cols)
    valid = (ki >= 0) & (ki < k)
    ki_cl = jnp.clip(ki, 0, k - 1)
    blocks = [jnp.where(valid, w[co_r[:, None], ci_c[None, :], ki_cl, kj], 0.0)
              for kj in range(k)]
    return jnp.concatenate(blocks, axis=1)                    # (rows, k*cols)


def _pool_row_selector(rows_out, rows_in):
    """0/1 matrix picking every second row of the pairwise-row-max array."""
    q = jnp.arange(rows_out)
    return (jnp.arange(rows_in)[None, :] == (2 * q)[:, None]).astype(jnp.bfloat16)


def _pool_col_selector(cols_in, in_stride, out_w, interleave):
    """0/1 matrix picking the stride-2 pool anchors per image block and
    re-packing the per-image lane stride (optionally image-interleaved)."""
    m = jnp.arange(NB * out_w)
    if interleave:
        n, pw = m % NB, m // NB
    else:
        n, pw = m // out_w, m % out_w
    src = n * in_stride + 2 * pw
    return (jnp.arange(cols_in)[:, None] == src[None, :]).astype(jnp.bfloat16)


def prepare_params(params):
    """Transform torch-layout params into the kernel's layouts (run once)."""
    bf16 = jnp.bfloat16
    w4 = params["fc1_w"].reshape(C2, PH2, PW2, HIDDEN)        # (c, oh, ow, j)
    wfc1 = jnp.transpose(w4, (3, 2, 0, 1)).reshape(HIDDEN, C2 * PH2 * PW2)
    return {
        "t1": _conv_mix_matrix(params["w1"], H_IN).astype(bf16),      # (168, 480)
        "b1c": jnp.repeat(params["b1"], OH1)[:, None].astype(jnp.float32),
        "sh1": _pool_row_selector(RP1, R1 - 1),                        # (84, 167)
        "sw1": _pool_col_selector(WOUT1 - 1, W_IN, PW1, False),        # (219, 108)
        "t2": _conv_mix_matrix(params["w2"], PH1).astype(bf16),        # (120, 420)
        "b2c": jnp.repeat(params["b2"], OH2)[:, None].astype(jnp.float32),
        "sh2": _pool_row_selector(RP2, R2 - 1),                        # (60, 119)
        "sw2": _pool_col_selector(WOUT2 - 1, PW1, PW2, True),          # (103, 50)
        "wfc1": wfc1.astype(bf16),                                     # (150, 1500)
        "bfc1": params["fc1_b"][:, None].astype(jnp.float32),          # (150, 1)
        "wfc3": params["fc3_w"].T.astype(bf16),                        # (4, 150)
        "bfc3": params["fc3_b"][:, None].astype(jnp.float32),          # (4, 1)
    }


# ---------------------------------------------------------------------------
# Forward pass: one fused pallas_call, parallel grid over image blocks
# ---------------------------------------------------------------------------
def net_forward(kparams, x):
    n, c, h, w = x.shape
    assert (c, h, w) == (C_IN, H_IN, W_IN) and n % NB == 0
    nblk = n // NB

    # Input re-layout to (blocks, Cin*H, NB*W), lane-stacked images (tiny glue).
    a0 = x.reshape(nblk, NB, c, h, w)
    a0 = jnp.transpose(a0, (0, 2, 3, 1, 4)).reshape(nblk, R0, W0)
    a0 = a0.astype(jnp.bfloat16)

    weight_names = ("t1", "b1c", "sh1", "sw1", "t2", "b2c", "sh2", "sw2",
                    "wfc1", "bfc1", "wfc3", "bfc3")
    weights = [kparams[k] for k in weight_names]

    macs = (R1 * (KSZ * R0) * WOUT1 + RP1 * (R1 - 1) * WOUT1
            + RP1 * (WOUT1 - 1) * WP1 + R2 * (KSZ * RP1) * WOUT2
            + RP2 * (R2 - 1) * WOUT2 + RP2 * (WOUT2 - 1) * (NB * PW2)
            + HIDDEN * (C2 * PH2 * PW2) * NB + LABEL_SIZE * HIDDEN * NB)
    flops = int(2 * macs * nblk)
    bytes_accessed = int(a0.size * a0.dtype.itemsize
                         + sum(v.size * v.dtype.itemsize for v in weights)
                         + nblk * LABEL_SIZE * NB * 4)

    in_specs = [pl.BlockSpec((1, R0, W0), lambda i: (i, 0, 0))]
    in_specs += [pl.BlockSpec(v.shape, lambda i: (0, 0)) for v in weights]

    out = pl.pallas_call(
        _net_fused_kernel,
        out_shape=jax.ShapeDtypeStruct((nblk, LABEL_SIZE, NB), jnp.float32),
        grid=(nblk,),
        in_specs=in_specs,
        out_specs=pl.BlockSpec((1, LABEL_SIZE, NB), lambda i: (i, 0, 0)),
        compiler_params=pltpu.CompilerParams(dimension_semantics=("parallel",)),
        cost_estimate=pl.CostEstimate(flops=flops, transcendentals=0,
                                      bytes_accessed=bytes_accessed),
    )(a0, *weights)

    # (nblk, 4, NB) -> (N, 4)   (tiny epilogue relayout outside the kernel)
    return jnp.transpose(out, (0, 2, 1)).reshape(n, LABEL_SIZE)


# ---------------------------------------------------------------------------
# Deterministic parameter init (PyTorch-style uniform(-1/sqrt(fan_in), ...))
# ---------------------------------------------------------------------------
def init_params(key):
    ks = jax.random.split(key, 8)

    def u(k, shape, fan_in):
        bound = 1.0 / float(fan_in) ** 0.5
        return jax.random.uniform(k, shape, jnp.float32, -bound, bound)

    return {
        "w1": u(ks[0], (C1, C_IN, KSZ, KSZ), C_IN * KSZ * KSZ),       # OIHW
        "b1": u(ks[1], (C1,), C_IN * KSZ * KSZ),
        "w2": u(ks[2], (C2, C1, KSZ, KSZ), C1 * KSZ * KSZ),           # OIHW
        "b2": u(ks[3], (C2,), C1 * KSZ * KSZ),
        "fc1_w": u(ks[4], (C2 * PH2 * PW2, HIDDEN), C2 * PH2 * PW2),  # (in, out)
        "fc1_b": u(ks[5], (HIDDEN,), C2 * PH2 * PW2),
        "fc3_w": u(ks[6], (HIDDEN, LABEL_SIZE), HIDDEN),
        "fc3_b": u(ks[7], (LABEL_SIZE,), HIDDEN),
    }


# ---------------------------------------------------------------------------
# Pure-JAX reference (same semantics as the PyTorch forward) for sanity check
# ---------------------------------------------------------------------------
def reference_forward(params, x):
    def conv(x, w, b):
        dn = lax.conv_dimension_numbers(x.shape, w.shape, ("NCHW", "OIHW", "NCHW"))
        h = lax.conv_general_dilated(x, w, (1, 1), "VALID", dimension_numbers=dn)
        return jnp.maximum(h + b[None, :, None, None], 0.0)

    def pool(x):
        return lax.reduce_window(x, -jnp.inf, lax.max,
                                 (1, 1, 2, 2), (1, 1, 2, 2), "VALID")

    h = pool(conv(x, params["w1"], params["b1"]))
    h = pool(conv(h, params["w2"], params["b2"]))
    h = h.reshape(h.shape[0], -1)
    h = jnp.maximum(h @ params["fc1_w"] + params["fc1_b"], 0.0)
    return h @ params["fc3_w"] + params["fc3_b"]


if __name__ == "__main__":
    key = jax.random.PRNGKey(0)
    pkey, xkey = jax.random.split(key)
    params = init_params(pkey)
    kparams = prepare_params(params)        # one-time weight re-layout

    # (N=4, C=3, H=32, W=112): conv/pool stack -> 12 * 5 * 25 = 1500 features.
    x = jax.random.normal(xkey, (N_IMG, C_IN, H_IN, W_IN), jnp.float32)

    fwd = jax.jit(net_forward)
    out = jax.block_until_ready(fwd(kparams, x))

    ref = reference_forward(params, x)
    assert out.shape == (N_IMG, LABEL_SIZE), out.shape
    # bf16 MXU operands with f32 accumulation -> slightly looser tolerance.
    assert jnp.allclose(out, ref, rtol=2e-2, atol=2e-2), (out, ref)

    print("KERNEL_OK")
</pallas_src>

<mosaic_0001>
module attributes {stable_mosaic.version = 11 : i64} {
  func.func @_net_fused_kernel(%arg0: i32, %arg1: memref<1x96x224xbf16, #tpu.memory_space<vmem>>, %arg2: memref<168x480xbf16, #tpu.memory_space<vmem>>, %arg3: memref<168x1xf32, #tpu.memory_space<vmem>>, %arg4: memref<84x167xbf16, #tpu.memory_space<vmem>>, %arg5: memref<219x108xbf16, #tpu.memory_space<vmem>>, %arg6: memref<120x420xbf16, #tpu.memory_space<vmem>>, %arg7: memref<120x1xf32, #tpu.memory_space<vmem>>, %arg8: memref<60x119xbf16, #tpu.memory_space<vmem>>, %arg9: memref<103x50xbf16, #tpu.memory_space<vmem>>, %arg10: memref<150x1500xbf16, #tpu.memory_space<vmem>>, %arg11: memref<150x1xf32, #tpu.memory_space<vmem>>, %arg12: memref<4x150xbf16, #tpu.memory_space<vmem>>, %arg13: memref<4x1xf32, #tpu.memory_space<vmem>>, %arg14: memref<1x4x2xf32, #tpu.memory_space<vmem>>) attributes {dimension_semantics = [#tpu.dimension_semantics<parallel>], iteration_bounds = array<i64: 2>, scalar_prefetch = 0 : i64, scratch_operands = 0 : i64, tpu.core_type = #tpu.core_type<tc>, window_params = [{transform_indices = @transform_0, window_bounds = array<i64: 1, 96, 224>}, {pipeline_mode = #tpu.pipeline_mode<synchronous>, transform_indices = @transform_1, window_bounds = array<i64: 168, 480>}, {pipeline_mode = #tpu.pipeline_mode<synchronous>, transform_indices = @transform_2, window_bounds = array<i64: 168, 1>}, {pipeline_mode = #tpu.pipeline_mode<synchronous>, transform_indices = @transform_3, window_bounds = array<i64: 84, 167>}, {pipeline_mode = #tpu.pipeline_mode<synchronous>, transform_indices = @transform_4, window_bounds = array<i64: 219, 108>}, {pipeline_mode = #tpu.pipeline_mode<synchronous>, transform_indices = @transform_5, window_bounds = array<i64: 120, 420>}, {pipeline_mode = #tpu.pipeline_mode<synchronous>, transform_indices = @transform_6, window_bounds = array<i64: 120, 1>}, {pipeline_mode = #tpu.pipeline_mode<synchronous>, transform_indices = @transform_7, window_bounds = array<i64: 60, 119>}, {pipeline_mode = #tpu.pipeline_mode<synchronous>, transform_indices = @transform_8, window_bounds = array<i64: 103, 50>}, {pipeline_mode = #tpu.pipeline_mode<synchronous>, transform_indices = @transform_9, window_bounds = array<i64: 150, 1500>}, {pipeline_mode = #tpu.pipeline_mode<synchronous>, transform_indices = @transform_10, window_bounds = array<i64: 150, 1>}, {pipeline_mode = #tpu.pipeline_mode<synchronous>, transform_indices = @transform_11, window_bounds = array<i64: 4, 150>}, {pipeline_mode = #tpu.pipeline_mode<synchronous>, transform_indices = @transform_12, window_bounds = array<i64: 4, 1>}, {transform_indices = @transform_13, window_bounds = array<i64: 1, 4, 2>}]} {
    %c0 = arith.constant 0 : index
    %c0_0 = arith.constant 0 : index
    %c0_1 = arith.constant 0 : index
    %0 = vector.load %arg1[%c0, %c0_0, %c0_1] : memref<1x96x224xbf16, #tpu.memory_space<vmem>>, vector<1x96x224xbf16>
    %1 = vector.shape_cast %0 : vector<1x96x224xbf16> to vector<96x224xbf16>
    %2 = vector.extract_strided_slice %1 {offsets = [0, 0], sizes = [96, 220], strides = [1, 1]} : vector<96x224xbf16> to vector<96x220xbf16>
    %3 = vector.extract_strided_slice %1 {offsets = [0, 1], sizes = [96, 220], strides = [1, 1]} : vector<96x224xbf16> to vector<96x220xbf16>
    %4 = vector.extract_strided_slice %1 {offsets = [0, 2], sizes = [96, 220], strides = [1, 1]} : vector<96x224xbf16> to vector<96x220xbf16>
    %5 = vector.extract_strided_slice %1 {offsets = [0, 3], sizes = [96, 220], strides = [1, 1]} : vector<96x224xbf16> to vector<96x220xbf16>
    %6 = vector.extract_strided_slice %1 {offsets = [0, 4], sizes = [96, 220], strides = [1, 1]} : vector<96x224xbf16> to vector<96x220xbf16>
    %7 = tpu.concatenate %2, %3, %4, %5, %6 in 0 : vector<96x220xbf16>, vector<96x220xbf16>, vector<96x220xbf16>, vector<96x220xbf16>, vector<96x220xbf16> -> vector<480x220xbf16>
    %c0_2 = arith.constant 0 : index
    %c0_3 = arith.constant 0 : index
    %8 = vector.load %arg2[%c0_2, %c0_3] : memref<168x480xbf16, #tpu.memory_space<vmem>>, vector<168x480xbf16>
    %cst = arith.constant dense<0.000000e+00> : vector<168x220xf32>
    %9 = tpu.matmul %8, %7, %cst {dimension_numbers = #tpu.dot_dimension_numbers<[1], [0], [0], [1], [0, 0, 1, 1], [], []>} : vector<168x480xbf16>, vector<480x220xbf16>, vector<168x220xf32> -> vector<168x220xf32>
    %c0_4 = arith.constant 0 : index
    %c0_5 = arith.constant 0 : index
    %10 = vector.load %arg3[%c0_4, %c0_5] : memref<168x1xf32, #tpu.memory_space<vmem>>, vector<168x1xf32>
    %11 = vector.broadcast %10 : vector<168x1xf32> to vector<168x220xf32>
    %12 = arith.addf %9, %11 : vector<168x220xf32>
    %cst_6 = arith.constant 0.000000e+00 : f32
    %13 = vector.broadcast %cst_6 : f32 to vector<168x220xf32>
    %14 = arith.maximumf %12, %13 : vector<168x220xf32>
    %15 = vector.extract_strided_slice %14 {offsets = [0, 0], sizes = [167, 220], strides = [1, 1]} : vector<168x220xf32> to vector<167x220xf32>
    %16 = vector.extract_strided_slice %14 {offsets = [1, 0], sizes = [167, 220], strides = [1, 1]} : vector<168x220xf32> to vector<167x220xf32>
    %17 = arith.maximumf %15, %16 : vector<167x220xf32>
    %c0_7 = arith.constant 0 : index
    %c0_8 = arith.constant 0 : index
    %18 = vector.load %arg4[%c0_7, %c0_8] : memref<84x167xbf16, #tpu.memory_space<vmem>>, vector<84x167xbf16>
    %19 = arith.truncf %17 : vector<167x220xf32> to vector<167x220xbf16>
    %cst_9 = arith.constant dense<0.000000e+00> : vector<84x220xf32>
    %20 = tpu.matmul %18, %19, %cst_9 {dimension_numbers = #tpu.dot_dimension_numbers<[1], [0], [0], [1], [0, 0, 1, 1], [], []>} : vector<84x167xbf16>, vector<167x220xbf16>, vector<84x220xf32> -> vector<84x220xf32>
    %21 = vector.extract_strided_slice %20 {offsets = [0, 0], sizes = [84, 219], strides = [1, 1]} : vector<84x220xf32> to vector<84x219xf32>
    %22 = vector.extract_strided_slice %20 {offsets = [0, 1], sizes = [84, 219], strides = [1, 1]} : vector<84x220xf32> to vector<84x219xf32>
    %23 = arith.maximumf %21, %22 : vector<84x219xf32>
    %24 = arith.truncf %23 : vector<84x219xf32> to vector<84x219xbf16>
    %c0_10 = arith.constant 0 : index
    %c0_11 = arith.constant 0 : index
    %25 = vector.load %arg5[%c0_10, %c0_11] : memref<219x108xbf16, #tpu.memory_space<vmem>>, vector<219x108xbf16>
    %cst_12 = arith.constant dense<0.000000e+00> : vector<84x108xf32>
    %26 = tpu.matmul %24, %25, %cst_12 {dimension_numbers = #tpu.dot_dimension_numbers<[1], [0], [0], [1], [0, 0, 1, 1], [], []>} : vector<84x219xbf16>, vector<219x108xbf16>, vector<84x108xf32> -> vector<84x108xf32>
    %27 = arith.truncf %26 : vector<84x108xf32> to vector<84x108xbf16>
    %28 = vector.extract_strided_slice %27 {offsets = [0, 0], sizes = [84, 104], strides = [1, 1]} : vector<84x108xbf16> to vector<84x104xbf16>
    %29 = vector.extract_strided_slice %27 {offsets = [0, 1], sizes = [84, 104], strides = [1, 1]} : vector<84x108xbf16> to vector<84x104xbf16>
    %30 = vector.extract_strided_slice %27 {offsets = [0, 2], sizes = [84, 104], strides = [1, 1]} : vector<84x108xbf16> to vector<84x104xbf16>
    %31 = vector.extract_strided_slice %27 {offsets = [0, 3], sizes = [84, 104], strides = [1, 1]} : vector<84x108xbf16> to vector<84x104xbf16>
    %32 = vector.extract_strided_slice %27 {offsets = [0, 4], sizes = [84, 104], strides = [1, 1]} : vector<84x108xbf16> to vector<84x104xbf16>
    %33 = tpu.concatenate %28, %29, %30, %31, %32 in 0 : vector<84x104xbf16>, vector<84x104xbf16>, vector<84x104xbf16>, vector<84x104xbf16>, vector<84x104xbf16> -> vector<420x104xbf16>
    %c0_13 = arith.constant 0 : index
    %c0_14 = arith.constant 0 : index
    %34 = vector.load %arg6[%c0_13, %c0_14] : memref<120x420xbf16, #tpu.memory_space<vmem>>, vector<120x420xbf16>
    %cst_15 = arith.constant dense<0.000000e+00> : vector<120x104xf32>
    %35 = tpu.matmul %34, %33, %cst_15 {dimension_numbers = #tpu.dot_dimension_numbers<[1], [0], [0], [1], [0, 0, 1, 1], [], []>} : vector<120x420xbf16>, vector<420x104xbf16>, vector<120x104xf32> -> vector<120x104xf32>
    %c0_16 = arith.constant 0 : index
    %c0_17 = arith.constant 0 : index
    %36 = vector.load %arg7[%c0_16, %c0_17] : memref<120x1xf32, #tpu.memory_space<vmem>>, vector<120x1xf32>
    %37 = vector.broadcast %36 : vector<120x1xf32> to vector<120x104xf32>
    %38 = arith.addf %35, %37 : vector<120x104xf32>
    %cst_18 = arith.constant 0.000000e+00 : f32
    %39 = vector.broadcast %cst_18 : f32 to vector<120x104xf32>
    %40 = arith.maximumf %38, %39 : vector<120x104xf32>
    %41 = vector.extract_strided_slice %40 {offsets = [0, 0], sizes = [119, 104], strides = [1, 1]} : vector<120x104xf32> to vector<119x104xf32>
    %42 = vector.extract_strided_slice %40 {offsets = [1, 0], sizes = [119, 104], strides = [1, 1]} : vector<120x104xf32> to vector<119x104xf32>
    %43 = arith.maximumf %41, %42 : vector<119x104xf32>
    %c0_19 = arith.constant 0 : index
    %c0_20 = arith.constant 0 : index
    %44 = vector.load %arg8[%c0_19, %c0_20] : memref<60x119xbf16, #tpu.memory_space<vmem>>, vector<60x119xbf16>
    %45 = arith.truncf %43 : vector<119x104xf32> to vector<119x104xbf16>
    %cst_21 = arith.constant dense<0.000000e+00> : vector<60x104xf32>
    %46 = tpu.matmul %44, %45, %cst_21 {dimension_numbers = #tpu.dot_dimension_numbers<[1], [0], [0], [1], [0, 0, 1, 1], [], []>} : vector<60x119xbf16>, vector<119x104xbf16>, vector<60x104xf32> -> vector<60x104xf32>
    %47 = vector.extract_strided_slice %46 {offsets = [0, 0], sizes = [60, 103], strides = [1, 1]} : vector<60x104xf32> to vector<60x103xf32>
    %48 = vector.extract_strided_slice %46 {offsets = [0, 1], sizes = [60, 103], strides = [1, 1]} : vector<60x104xf32> to vector<60x103xf32>
    %49 = arith.maximumf %47, %48 : vector<60x103xf32>
    %50 = arith.truncf %49 : vector<60x103xf32> to vector<60x103xbf16>
    %c0_22 = arith.constant 0 : index
    %c0_23 = arith.constant 0 : index
    %51 = vector.load %arg9[%c0_22, %c0_23] : memref<103x50xbf16, #tpu.memory_space<vmem>>, vector<103x50xbf16>
    %cst_24 = arith.constant dense<0.000000e+00> : vector<60x50xf32>
    %52 = tpu.matmul %50, %51, %cst_24 {dimension_numbers = #tpu.dot_dimension_numbers<[1], [0], [0], [1], [0, 0, 1, 1], [], []>} : vector<60x103xbf16>, vector<103x50xbf16>, vector<60x50xf32> -> vector<60x50xf32>
    %53 = arith.truncf %52 : vector<60x50xf32> to vector<60x50xbf16>
    %54 = vector.extract_strided_slice %53 {offsets = [0, 0], sizes = [60, 2], strides = [1, 1]} : vector<60x50xbf16> to vector<60x2xbf16>
    %55 = vector.extract_strided_slice %53 {offsets = [0, 2], sizes = [60, 2], strides = [1, 1]} : vector<60x50xbf16> to vector<60x2xbf16>
    %56 = vector.extract_strided_slice %53 {offsets = [0, 4], sizes = [60, 2], strides = [1, 1]} : vector<60x50xbf16> to vector<60x2xbf16>
    %57 = vector.extract_strided_slice %53 {offsets = [0, 6], sizes = [60, 2], strides = [1, 1]} : vector<60x50xbf16> to vector<60x2xbf16>
    %58 = vector.extract_strided_slice %53 {offsets = [0, 8], sizes = [60, 2], strides = [1, 1]} : vector<60x50xbf16> to vector<60x2xbf16>
    %59 = vector.extract_strided_slice %53 {offsets = [0, 10], sizes = [60, 2], strides = [1, 1]} : vector<60x50xbf16> to vector<60x2xbf16>
    %60 = vector.extract_strided_slice %53 {offsets = [0, 12], sizes = [60, 2], strides = [1, 1]} : vector<60x50xbf16> to vector<60x2xbf16>
    %61 = vector.extract_strided_slice %53 {offsets = [0, 14], sizes = [60, 2], strides = [1, 1]} : vector<60x50xbf16> to vector<60x2xbf16>
    %62 = vector.extract_strided_slice %53 {offsets = [0, 16], sizes = [60, 2], strides = [1, 1]} : vector<60x50xbf16> to vector<60x2xbf16>
    %63 = vector.extract_strided_slice %53 {offsets = [0, 18], sizes = [60, 2], strides = [1, 1]} : vector<60x50xbf16> to vector<60x2xbf16>
    %64 = vector.extract_strided_slice %53 {offsets = [0, 20], sizes = [60, 2], strides = [1, 1]} : vector<60x50xbf16> to vector<60x2xbf16>
    %65 = vector.extract_strided_slice %53 {offsets = [0, 22], sizes = [60, 2], strides = [1, 1]} : vector<60x50xbf16> to vector<60x2xbf16>
    %66 = vector.extract_strided_slice %53 {offsets = [0, 24], sizes = [60, 2], strides = [1, 1]} : vector<60x50xbf16> to vector<60x2xbf16>
    %67 = vector.extract_strided_slice %53 {offsets = [0, 26], sizes = [60, 2], strides = [1, 1]} : vector<60x50xbf16> to vector<60x2xbf16>
    %68 = vector.extract_strided_slice %53 {offsets = [0, 28], sizes = [60, 2], strides = [1, 1]} : vector<60x50xbf16> to vector<60x2xbf16>
    %69 = vector.extract_strided_slice %53 {offsets = [0, 30], sizes = [60, 2], strides = [1, 1]} : vector<60x50xbf16> to vector<60x2xbf16>
    %70 = vector.extract_strided_slice %53 {offsets = [0, 32], sizes = [60, 2], strides = [1, 1]} : vector<60x50xbf16> to vector<60x2xbf16>
    %71 = vector.extract_strided_slice %53 {offsets = [0, 34], sizes = [60, 2], strides = [1, 1]} : vector<60x50xbf16> to vector<60x2xbf16>
    %72 = vector.extract_strided_slice %53 {offsets = [0, 36], sizes = [60, 2], strides = [1, 1]} : vector<60x50xbf16> to vector<60x2xbf16>
    %73 = vector.extract_strided_slice %53 {offsets = [0, 38], sizes = [60, 2], strides = [1, 1]} : vector<60x50xbf16> to vector<60x2xbf16>
    %74 = vector.extract_strided_slice %53 {offsets = [0, 40], sizes = [60, 2], strides = [1, 1]} : vector<60x50xbf16> to vector<60x2xbf16>
    %75 = vector.extract_strided_slice %53 {offsets = [0, 42], sizes = [60, 2], strides = [1, 1]} : vector<60x50xbf16> to vector<60x2xbf16>
    %76 = vector.extract_strided_slice %53 {offsets = [0, 44], sizes = [60, 2], strides = [1, 1]} : vector<60x50xbf16> to vector<60x2xbf16>
    %77 = vector.extract_strided_slice %53 {offsets = [0, 46], sizes = [60, 2], strides = [1, 1]} : vector<60x50xbf16> to vector<60x2xbf16>
    %78 = vector.extract_strided_slice %53 {offsets = [0, 48], sizes = [60, 2], strides = [1, 1]} : vector<60x50xbf16> to vector<60x2xbf16>
    %79 = tpu.concatenate %54, %55, %56, %57, %58, %59, %60, %61, %62, %63, %64, %65, %66, %67, %68, %69 in 0 : vector<60x2xbf16>, vector<60x2xbf16>, vector<60x2xbf16>, vector<60x2xbf16>, vector<60x2xbf16>, vector<60x2xbf16>, vector<60x2xbf16>, vector<60x2xbf16>, vector<60x2xbf16>, vector<60x2xbf16>, vector<60x2xbf16>, vector<60x2xbf16>, vector<60x2xbf16>, vector<60x2xbf16>, vector<60x2xbf16>, vector<60x2xbf16> -> vector<960x2xbf16>
    %80 = tpu.concatenate %70, %71, %72, %73, %74, %75, %76, %77, %78 in 0 : vector<60x2xbf16>, vector<60x2xbf16>, vector<60x2xbf16>, vector<60x2xbf16>, vector<60x2xbf16>, vector<60x2xbf16>, vector<60x2xbf16>, vector<60x2xbf16>, vector<60x2xbf16> -> vector<540x2xbf16>
    %81 = tpu.concatenate %79, %80 in 0 : vector<960x2xbf16>, vector<540x2xbf16> -> vector<1500x2xbf16>
    %c0_25 = arith.constant 0 : index
    %c0_26 = arith.constant 0 : index
    %82 = vector.load %arg10[%c0_25, %c0_26] : memref<150x1500xbf16, #tpu.memory_space<vmem>>, vector<150x1500xbf16>
    %cst_27 = arith.constant dense<0.000000e+00> : vector<150x2xf32>
    %83 = tpu.matmul %82, %81, %cst_27 {dimension_numbers = #tpu.dot_dimension_numbers<[1], [0], [0], [1], [0, 0, 1, 1], [], []>} : vector<150x1500xbf16>, vector<1500x2xbf16>, vector<150x2xf32> -> vector<150x2xf32>
    %c0_28 = arith.constant 0 : index
    %c0_29 = arith.constant 0 : index
    %84 = vector.load %arg11[%c0_28, %c0_29] : memref<150x1xf32, #tpu.memory_space<vmem>>, vector<150x1xf32>
    %85 = vector.broadcast %84 : vector<150x1xf32> to vector<150x2xf32>
    %86 = arith.addf %83, %85 : vector<150x2xf32>
    %cst_30 = arith.constant 0.000000e+00 : f32
    %87 = vector.broadcast %cst_30 : f32 to vector<150x2xf32>
    %88 = arith.maximumf %86, %87 : vector<150x2xf32>
    %89 = arith.truncf %88 : vector<150x2xf32> to vector<150x2xbf16>
    %c0_31 = arith.constant 0 : index
    %c0_32 = arith.constant 0 : index
    %90 = vector.load %arg12[%c0_31, %c0_32] : memref<4x150xbf16, #tpu.memory_space<vmem>>, vector<4x150xbf16>
    %cst_33 = arith.constant dense<0.000000e+00> : vector<4x2xf32>
    %91 = tpu.matmul %90, %89, %cst_33 {dimension_numbers = #tpu.dot_dimension_numbers<[1], [0], [0], [1], [0, 0, 1, 1], [], []>} : vector<4x150xbf16>, vector<150x2xbf16>, vector<4x2xf32> -> vector<4x2xf32>
    %c0_34 = arith.constant 0 : index
    %c0_35 = arith.constant 0 : index
    %92 = vector.load %arg13[%c0_34, %c0_35] : memref<4x1xf32, #tpu.memory_space<vmem>>, vector<4x1xf32>
    %93 = vector.broadcast %92 : vector<4x1xf32> to vector<4x2xf32>
    %94 = arith.addf %91, %93 : vector<4x2xf32>
    %c0_36 = arith.constant 0 : index
    %c0_37 = arith.constant 0 : index
    %c0_38 = arith.constant 0 : index
    %95 = vector.load %arg14[%c0_36, %c0_37, %c0_38] : memref<1x4x2xf32, #tpu.memory_space<vmem>>, vector<1x4x2xf32>
    %96 = vector.shape_cast %95 : vector<1x4x2xf32> to vector<4x2xf32>
    %97 = vector.shape_cast %94 : vector<4x2xf32> to vector<1x4x2xf32>
    tpu.vector_store %arg14[%c0_36, %c0_37, %c0_38], %97 {strides = array<i32>} : memref<1x4x2xf32, #tpu.memory_space<vmem>>, vector<1x4x2xf32>,
    return
  }
  func.func @transform_0(%arg0: i32) -> (i32, i32, i32) {
    %c0_i32 = arith.constant 0 : i32
    %c0_i32_0 = arith.constant 0 : i32
    %c0_i32_1 = arith.constant 0 : i32
    return %arg0, %c0_i32, %c0_i32_0 : i32, i32, i32
  }
  func.func @transform_1(%arg0: i32) -> (i32, i32) {
    %c0_i32 = arith.constant 0 : i32
    %c0_i32_0 = arith.constant 0 : i32
    %c0_i32_1 = arith.constant 0 : i32
    return %c0_i32, %c0_i32_0 : i32, i32
  }
  func.func @transform_2(%arg0: i32) -> (i32, i32) {
    %c0_i32 = arith.constant 0 : i32
    %c0_i32_0 = arith.constant 0 : i32
    %c0_i32_1 = arith.constant 0 : i32
    return %c0_i32, %c0_i32_0 : i32, i32
  }
  func.func @transform_3(%arg0: i32) -> (i32, i32) {
    %c0_i32 = arith.constant 0 : i32
    %c0_i32_0 = arith.constant 0 : i32
    %c0_i32_1 = arith.constant 0 : i32
    return %c0_i32, %c0_i32_0 : i32, i32
  }
  func.func @transform_4(%arg0: i32) -> (i32, i32) {
    %c0_i32 = arith.constant 0 : i32
    %c0_i32_0 = arith.constant 0 : i32
    %c0_i32_1 = arith.constant 0 : i32
    return %c0_i32, %c0_i32_0 : i32, i32
  }
  func.func @transform_5(%arg0: i32) -> (i32, i32) {
    %c0_i32 = arith.constant 0 : i32
    %c0_i32_0 = arith.constant 0 : i32
    %c0_i32_1 = arith.constant 0 : i32
    return %c0_i32, %c0_i32_0 : i32, i32
  }
  func.func @transform_6(%arg0: i32) -> (i32, i32) {
    %c0_i32 = arith.constant 0 : i32
    %c0_i32_0 = arith.constant 0 : i32
    %c0_i32_1 = arith.constant 0 : i32
    return %c0_i32, %c0_i32_0 : i32, i32
  }
  func.func @transform_7(%arg0: i32) -> (i32, i32) {
    %c0_i32 = arith.constant 0 : i32
    %c0_i32_0 = arith.constant 0 : i32
    %c0_i32_1 = arith.constant 0 : i32
    return %c0_i32, %c0_i32_0 : i32, i32
  }
  func.func @transform_8(%arg0: i32) -> (i32, i32) {
    %c0_i32 = arith.constant 0 : i32
    %c0_i32_0 = arith.constant 0 : i32
    %c0_i32_1 = arith.constant 0 : i32
    return %c0_i32, %c0_i32_0 : i32, i32
  }
  func.func @transform_9(%arg0: i32) -> (i32, i32) {
    %c0_i32 = arith.constant 0 : i32
    %c0_i32_0 = arith.constant 0 : i32
    %c0_i32_1 = arith.constant 0 : i32
    return %c0_i32, %c0_i32_0 : i32, i32
  }
  func.func @transform_10(%arg0: i32) -> (i32, i32) {
    %c0_i32 = arith.constant 0 : i32
    %c0_i32_0 = arith.constant 0 : i32
    %c0_i32_1 = arith.constant 0 : i32
    return %c0_i32, %c0_i32_0 : i32, i32
  }
  func.func @transform_11(%arg0: i32) -> (i32, i32) {
    %c0_i32 = arith.constant 0 : i32
    %c0_i32_0 = arith.constant 0 : i32
    %c0_i32_1 = arith.constant 0 : i32
    return %c0_i32, %c0_i32_0 : i32, i32
  }
  func.func @transform_12(%arg0: i32) -> (i32, i32) {
    %c0_i32 = arith.constant 0 : i32
    %c0_i32_0 = arith.constant 0 : i32
    %c0_i32_1 = arith.constant 0 : i32
    return %c0_i32, %c0_i32_0 : i32, i32
  }
  func.func @transform_13(%arg0: i32) -> (i32, i32, i32) {
    %c0_i32 = arith.constant 0 : i32
    %c0_i32_0 = arith.constant 0 : i32
    %c0_i32_1 = arith.constant 0 : i32
    return %arg0, %c0_i32, %c0_i32_0 : i32, i32, i32
  }
}

</mosaic_0001>

<llo_original>
// kernel: net_forward.1
$region0: #{net_forward.1}
  #allocation0 [shape = 'u32[]', space=smem, size = 0x4, offset = 0x4, fixed_abs, tag = 'smem constant byte address 0x4 - core index']
  #allocation1 [shape = 'u32[144,128]{1,0:T(1,128)}', space=vmem, size = 0x12000, scoped, tag = 'internal scratch']
  %s0 = inlined_call_operand.vmem [shape: bf16[2,96,224], index: 0, kind: input, shape index: {}]
  %s1 = inlined_call_operand.vmem [shape: bf16[168,480], index: 1, kind: input, shape index: {}]
  %s2 = inlined_call_operand.vmem [shape: f32[168,1], index: 2, kind: input, shape index: {}]
  %s3 = inlined_call_operand.vmem [shape: bf16[84,167], index: 3, kind: input, shape index: {}]
  %s4 = inlined_call_operand.vmem [shape: bf16[219,108], index: 4, kind: input, shape index: {}]
  %s5 = inlined_call_operand.vmem [shape: bf16[120,420], index: 5, kind: input, shape index: {}]
  %s6 = inlined_call_operand.vmem [shape: f32[120,1], index: 6, kind: input, shape index: {}]
  %s7 = inlined_call_operand.vmem [shape: bf16[60,119], index: 7, kind: input, shape index: {}]
  %s8 = inlined_call_operand.vmem [shape: bf16[103,50], index: 8, kind: input, shape index: {}]
  %s9 = inlined_call_operand.vmem [shape: bf16[150,1500], index: 9, kind: input, shape index: {}]
  %s10 = inlined_call_operand.vmem [shape: f32[150,1], index: 10, kind: input, shape index: {}]
  %s11 = inlined_call_operand.vmem [shape: bf16[4,150], index: 11, kind: input, shape index: {}]
  %s12 = inlined_call_operand.vmem [shape: f32[4,1], index: 12, kind: input, shape index: {}]
  %s13 = inlined_call_operand.vmem [shape: f32[2,4,2], index: 13, kind: output, shape index: {}]
  %s14 = sld [smem:[#allocation0]]
  $region85: #{net_forward.1} parent=0
    _
  %s16 = ssub.s32 1, %s14
  %s17 = scalar_select 0, %s16, %s14
  loop: start=0, step=1, limit=4
  $region2: #{net_forward.1} parent=0 // loop_pre_header
    _
  $region3: #{net_forward.1} parent=0 // loop_header
    %s19 = sphi 0, %s23
    %p20 = scmp.ge.s32.totalorder %s19, 4
    %s29 = sphi 0, %s31
    %s32 = sphi 0, %s29
    %s33 = sphi 0, %s32
    %s49 = sphi 0, %s33
    %s53 = sphi 0, %s53
    %s55 = sphi 0, %s53
    %s56 = sphi 0, %s55
    %s70 = sphi 0, %s56
    %s74 = sphi 0, %s74
    %s76 = sphi 0, %s74
    %s77 = sphi 0, %s76
    %s91 = sphi 0, %s77
    %s95 = sphi 0, %s95
    %s97 = sphi 0, %s95
    %s98 = sphi 0, %s97
    %s112 = sphi 0, %s98
    %s116 = sphi 0, %s116
    %s118 = sphi 0, %s116
    %s119 = sphi 0, %s118
    %s133 = sphi 0, %s119
    %s137 = sphi 0, %s137
    %s139 = sphi 0, %s137
    %s140 = sphi 0, %s139
    %s154 = sphi 0, %s140
    %s158 = sphi 0, %s158
    %s160 = sphi 0, %s158
    %s161 = sphi 0, %s160
    %s175 = sphi 0, %s161
    %s179 = sphi 0, %s179
    %s181 = sphi 0, %s179
    %s182 = sphi 0, %s181
    %s196 = sphi 0, %s182
    %s200 = sphi 0, %s200
    %s202 = sphi 0, %s200
    %s203 = sphi 0, %s202
    %s217 = sphi 0, %s203
    %s221 = sphi 0, %s221
    %s223 = sphi 0, %s221
    %s224 = sphi 0, %s223
    %s238 = sphi 0, %s224
    %s242 = sphi 0, %s242
    %s244 = sphi 0, %s242
    %s245 = sphi 0, %s244
    %s259 = sphi 0, %s245
    %s263 = sphi 0, %s263
    %s265 = sphi 0, %s263
    %s266 = sphi 0, %s265
    %s280 = sphi 0, %s266
    %s284 = sphi 0, %s284
    %s286 = sphi 0, %s284
    %s287 = sphi 0, %s286
    %s301 = sphi 0, %s287
    %s307 = sphi 0, %s309
    %s310 = sphi 0, %s307
    %s311 = sphi 0, %s310
    %s327 = sphi 0, %s311
  $region4: #{net_forward.1} parent=0 // loop_header_branch
    %22 = sbr.rel (%p20) target = $region8
  $region5: #{net_forward.1} parent=0 // loop_body
    %s24 = ssub.s32 %s19, 1
    %s25 = ssub.s32 %s19, 2
    %s26 = sadd.s32 %s19, 1
    %s27 = ssub.s32 %s19, %s26
    %p28 = scmp.eq.s32.totalorder %s27, 0
    %s30 = sadd.s32 %s29, 1
    %s31 = scalar_select %p28, %s29, %s30
    %p34 = pneg %p28
    %p35 = scmp.eq.s32.totalorder %s19, 1
    %p36 = por %p34, %p35
    %p37 = scmp.ne.s32.totalorder %s29, %s32
    %p38 = scmp.eq.s32.totalorder %s19, 0
    %p39 = por %p37, %p38
    %p40 = scmp.ne.s32.totalorder %s29, %s32
    %p41 = scmp.eq.s32.totalorder %s24, 1
    %p42 = por %p40, %p41
    %p43 = scmp.ne.s32.totalorder %s32, %s33
    %p44 = scmp.eq.s32.totalorder %s24, 0
    %p45 = por %p43, %p44
    %p46 = scmp.ne.s32.totalorder %s32, %s33
    %p47 = scmp.eq.s32.totalorder %s25, 1
    %p48 = por %p46, %p47
    %p50 = scmp.ne.s32.totalorder %s33, %s49
    %p51 = scmp.eq.s32.totalorder %s25, 0
    %p52 = por %p50, %p51
    %s54 = sadd.s32 %s53, 1
    %p57 = scmp.eq.s32.totalorder %s19, 1
    %p58 = scmp.ne.s32.totalorder %s53, %s55
    %p59 = scmp.eq.s32.totalorder %s19, 0
    %p60 = por %p58, %p59
    %p61 = scmp.ne.s32.totalorder %s53, %s55
    %p62 = scmp.eq.s32.totalorder %s24, 1
    %p63 = por %p61, %p62
    %p64 = scmp.ne.s32.totalorder %s55, %s56
    %p65 = scmp.eq.s32.totalorder %s24, 0
    %p66 = por %p64, %p65
    %p67 = scmp.ne.s32.totalorder %s55, %s56
    %p68 = scmp.eq.s32.totalorder %s25, 1
    %p69 = por %p67, %p68
    %p71 = scmp.ne.s32.totalorder %s56, %s70
    %p72 = scmp.eq.s32.totalorder %s25, 0
    %p73 = por %p71, %p72
    %s75 = sadd.s32 %s74, 1
    %p78 = scmp.eq.s32.totalorder %s19, 1
    %p79 = scmp.ne.s32.totalorder %s74, %s76
    %p80 = scmp.eq.s32.totalorder %s19, 0
    %p81 = por %p79, %p80
    %p82 = scmp.ne.s32.totalorder %s74, %s76
    %p83 = scmp.eq.s32.totalorder %s24, 1
    %p84 = por %p82, %p83
    %p85 = scmp.ne.s32.totalorder %s76, %s77
    %p86 = scmp.eq.s32.totalorder %s24, 0
    %p87 = por %p85, %p86
    %p88 = scmp.ne.s32.totalorder %s76, %s77
    %p89 = scmp.eq.s32.totalorder %s25, 1
    %p90 = por %p88, %p89
    %p92 = scmp.ne.s32.totalorder %s77, %s91
    %p93 = scmp.eq.s32.totalorder %s25, 0
    %p94 = por %p92, %p93
    %s96 = sadd.s32 %s95, 1
    %p99 = scmp.eq.s32.totalorder %s19, 1
    %p100 = scmp.ne.s32.totalorder %s95, %s97
    %p101 = scmp.eq.s32.totalorder %s19, 0
    %p102 = por %p100, %p101
    %p103 = scmp.ne.s32.totalorder %s95, %s97
    %p104 = scmp.eq.s32.totalorder %s24, 1
    %p105 = por %p103, %p104
    %p106 = scmp.ne.s32.totalorder %s97, %s98
    %p107 = scmp.eq.s32.totalorder %s24, 0
    %p108 = por %p106, %p107
    %p109 = scmp.ne.s32.totalorder %s97, %s98
    %p110 = scmp.eq.s32.totalorder %s25, 1
    %p111 = por %p109, %p110
    %p113 = scmp.ne.s32.totalorder %s98, %s112
    %p114 = scmp.eq.s32.totalorder %s25, 0
    %p115 = por %p113, %p114
    %s117 = sadd.s32 %s116, 1
    %p120 = scmp.eq.s32.totalorder %s19, 1
    %p121 = scmp.ne.s32.totalorder %s116, %s118
    %p122 = scmp.eq.s32.totalorder %s19, 0
    %p123 = por %p121, %p122
    %p124 = scmp.ne.s32.totalorder %s116, %s118
    %p125 = scmp.eq.s32.totalorder %s24, 1
    %p126 = por %p124, %p125
    %p127 = scmp.ne.s32.totalorder %s118, %s119
    %p128 = scmp.eq.s32.totalorder %s24, 0
    %p129 = por %p127, %p128
    %p130 = scmp.ne.s32.totalorder %s118, %s119
    %p131 = scmp.eq.s32.totalorder %s25, 1
    %p132 = por %p130, %p131
    %p134 = scmp.ne.s32.totalorder %s119, %s133
    %p135 = scmp.eq.s32.totalorder %s25, 0
    %p136 = por %p134, %p135
    %s138 = sadd.s32 %s137, 1
    %p141 = scmp.eq.s32.totalorder %s19, 1
    %p142 = scmp.ne.s32.totalorder %s137, %s139
    %p143 = scmp.eq.s32.totalorder %s19, 0
    %p144 = por %p142, %p143
    %p145 = scmp.ne.s32.totalorder %s137, %s139
    %p146 = scmp.eq.s32.totalorder %s24, 1
    %p147 = por %p145, %p146
    %p148 = scmp.ne.s32.totalorder %s139, %s140
    %p149 = scmp.eq.s32.totalorder %s24, 0
    %p150 = por %p148, %p149
    %p151 = scmp.ne.s32.totalorder %s139, %s140
    %p152 = scmp.eq.s32.totalorder %s25, 1
    %p153 = por %p151, %p152
    %p155 = scmp.ne.s32.totalorder %s140, %s154
    %p156 = scmp.eq.s32.totalorder %s25, 0
    %p157 = por %p155, %p156
    %s159 = sadd.s32 %s158, 1
    %p162 = scmp.eq.s32.totalorder %s19, 1
    %p163 = scmp.ne.s32.totalorder %s158, %s160
    %p164 = scmp.eq.s32.totalorder %s19, 0
    %p165 = por %p163, %p164
    %p166 = scmp.ne.s32.totalorder %s158, %s160
    %p167 = scmp.eq.s32.totalorder %s24, 1
    %p168 = por %p166, %p167
    %p169 = scmp.ne.s32.totalorder %s160, %s161
    %p170 = scmp.eq.s32.totalorder %s24, 0
    %p171 = por %p169, %p170
    %p172 = scmp.ne.s32.totalorder %s160, %s161
    %p173 = scmp.eq.s32.totalorder %s25, 1
    %p174 = por %p172, %p173
    %p176 = scmp.ne.s32.totalorder %s161, %s175
    %p177 = scmp.eq.s32.totalorder %s25, 0
    %p178 = por %p176, %p177
    %s180 = sadd.s32 %s179, 1
    %p183 = scmp.eq.s32.totalorder %s19, 1
    %p184 = scmp.ne.s32.totalorder %s179, %s181
    %p185 = scmp.eq.s32.totalorder %s19, 0
    %p186 = por %p184, %p185
    %p187 = scmp.ne.s32.totalorder %s179, %s181
    %p188 = scmp.eq.s32.totalorder %s24, 1
    %p189 = por %p187, %p188
    %p190 = scmp.ne.s32.totalorder %s181, %s182
    %p191 = scmp.eq.s32.totalorder %s24, 0
    %p192 = por %p190, %p191
    %p193 = scmp.ne.s32.totalorder %s181, %s182
    %p194 = scmp.eq.s32.totalorder %s25, 1
    %p195 = por %p193, %p194
    %p197 = scmp.ne.s32.totalorder %s182, %s196
    %p198 = scmp.eq.s32.totalorder %s25, 0
    %p199 = por %p197, %p198
    %s201 = sadd.s32 %s200, 1
    %p204 = scmp.eq.s32.totalorder %s19, 1
    %p205 = scmp.ne.s32.totalorder %s200, %s202
    %p206 = scmp.eq.s32.totalorder %s19, 0
    %p207 = por %p205, %p206
    %p208 = scmp.ne.s32.totalorder %s200, %s202
    %p209 = scmp.eq.s32.totalorder %s24, 1
    %p210 = por %p208, %p209
    %p211 = scmp.ne.s32.totalorder %s202, %s203
    %p212 = scmp.eq.s32.totalorder %s24, 0
    %p213 = por %p211, %p212
    %p214 = scmp.ne.s32.totalorder %s202, %s203
    %p215 = scmp.eq.s32.totalorder %s25, 1
    %p216 = por %p214, %p215
    %p218 = scmp.ne.s32.totalorder %s203, %s217
    %p219 = scmp.eq.s32.totalorder %s25, 0
    %p220 = por %p218, %p219
    %s222 = sadd.s32 %s221, 1
    %p225 = scmp.eq.s32.totalorder %s19, 1
    %p226 = scmp.ne.s32.totalorder %s221, %s223
    %p227 = scmp.eq.s32.totalorder %s19, 0
    %p228 = por %p226, %p227
    %p229 = scmp.ne.s32.totalorder %s221, %s223
    %p230 = scmp.eq.s32.totalorder %s24, 1
    %p231 = por %p229, %p230
    %p232 = scmp.ne.s32.totalorder %s223, %s224
    %p233 = scmp.eq.s32.totalorder %s24, 0
    %p234 = por %p232, %p233
    %p235 = scmp.ne.s32.totalorder %s223, %s224
    %p236 = scmp.eq.s32.totalorder %s25, 1
    %p237 = por %p235, %p236
    %p239 = scmp.ne.s32.totalorder %s224, %s238
    %p240 = scmp.eq.s32.totalorder %s25, 0
    %p241 = por %p239, %p240
    %s243 = sadd.s32 %s242, 1
    %p246 = scmp.eq.s32.totalorder %s19, 1
    %p247 = scmp.ne.s32.totalorder %s242, %s244
    %p248 = scmp.eq.s32.totalorder %s19, 0
    %p249 = por %p247, %p248
    %p250 = scmp.ne.s32.totalorder %s242, %s244
    %p251 = scmp.eq.s32.totalorder %s24, 1
    %p252 = por %p250, %p251
    %p253 = scmp.ne.s32.totalorder %s244, %s245
    %p254 = scmp.eq.s32.totalorder %s24, 0
    %p255 = por %p253, %p254
    %p256 = scmp.ne.s32.totalorder %s244, %s245
    %p257 = scmp.eq.s32.totalorder %s25, 1
    %p258 = por %p256, %p257
    %p260 = scmp.ne.s32.totalorder %s245, %s259
    %p261 = scmp.eq.s32.totalorder %s25, 0
    %p262 = por %p260, %p261
    %s264 = sadd.s32 %s263, 1
    %p267 = scmp.eq.s32.totalorder %s19, 1
    %p268 = scmp.ne.s32.totalorder %s263, %s265
    %p269 = scmp.eq.s32.totalorder %s19, 0
    %p270 = por %p268, %p269
    %p271 = scmp.ne.s32.totalorder %s263, %s265
    %p272 = scmp.eq.s32.totalorder %s24, 1
    %p273 = por %p271, %p272
    %p274 = scmp.ne.s32.totalorder %s265, %s266
    %p275 = scmp.eq.s32.totalorder %s24, 0
    %p276 = por %p274, %p275
    %p277 = scmp.ne.s32.totalorder %s265, %s266
    %p278 = scmp.eq.s32.totalorder %s25, 1
    %p279 = por %p277, %p278
    %p281 = scmp.ne.s32.totalorder %s266, %s280
    %p282 = scmp.eq.s32.totalorder %s25, 0
    %p283 = por %p281, %p282
    %s285 = sadd.s32 %s284, 1
    %p288 = scmp.eq.s32.totalorder %s19, 1
    %p289 = scmp.ne.s32.totalorder %s284, %s286
    %p290 = scmp.eq.s32.totalorder %s19, 0
    %p291 = por %p289, %p290
    %p292 = scmp.ne.s32.totalorder %s284, %s286
    %p293 = scmp.eq.s32.totalorder %s24, 1
    %p294 = por %p292, %p293
    %p295 = scmp.ne.s32.totalorder %s286, %s287
    %p296 = scmp.eq.s32.totalorder %s24, 0
    %p297 = por %p295, %p296
    %p298 = scmp.ne.s32.totalorder %s286, %s287
    %p299 = scmp.eq.s32.totalorder %s25, 1
    %p300 = por %p298, %p299
    %p302 = scmp.ne.s32.totalorder %s287, %s301
    %p303 = scmp.eq.s32.totalorder %s25, 0
    %p304 = por %p302, %p303
    %s305 = ssub.s32 %s19, %s26
    %p306 = scmp.eq.s32.totalorder %s305, 0
    %s308 = sadd.s32 %s307, 1
    %s309 = scalar_select %p306, %s307, %s308
    %p312 = pneg %p306
    %p313 = scmp.eq.s32.totalorder %s19, 1
    %p314 = por %p312, %p313
    %p315 = scmp.ne.s32.totalorder %s307, %s310
    %p316 = scmp.eq.s32.totalorder %s19, 0
    %p317 = por %p315, %p316
    %p318 = scmp.ne.s32.totalorder %s307, %s310
    %p319 = scmp.eq.s32.totalorder %s24, 1
    %p320 = por %p318, %p319
    %p321 = scmp.ne.s32.totalorder %s310, %s311
    %p322 = scmp.eq.s32.totalorder %s24, 0
    %p323 = por %p321, %p322
    %p324 = scmp.ne.s32.totalorder %s310, %s311
    %p325 = scmp.eq.s32.totalorder %s25, 1
    %p326 = por %p324, %p325
    %p328 = scmp.ne.s32.totalorder %s311, %s327
    %p329 = scmp.eq.s32.totalorder %s25, 0
    %p330 = por %p328, %p329
    %p331 = scmp.le.s32.totalorder 1, %s19
    %p332 = scmp.lt.s32.totalorder %s19, 3
    %p333 = pnand %p331, %p332
    %p334 = pneg %p333
    // Predicated region
    $region9: #{net_forward.1} parent=5 // pred_check
      _
    $region10: #{net_forward.1} parent=5 // pred_check_branch
      %336 = sbr.rel (%p333) target = $region12
    $region11: #{net_forward.1} parent=5 // pred_region
      %s337 = ssub.s32 %s19, 1
      // Predicated region
      $region13: #{net_forward.1} parent=11 // pred_check
        %p338 = pneg %p66
      $region14: #{net_forward.1} parent=11 // pred_check_branch
        %340 = sbr.rel (%p338) target = $region16
      $region15: #{net_forward.1} parent=11 // pred_region
        _
      $region16: #{net_forward.1} parent=11 // pred_fallthru
        _
      // Predicated region
      $region17: #{net_forward.1} parent=11 // pred_check
        %p341 = pneg %p87
      $region18: #{net_forward.1} parent=11 // pred_check_branch
        %343 = sbr.rel (%p341) target = $region20
      $region19: #{net_forward.1} parent=11 // pred_region
        _
      $region20: #{net_forward.1} parent=11 // pred_fallthru
        _
      // Predicated region
      $region21: #{net_forward.1} parent=11 // pred_check
        %p344 = pneg %p108
      $region22: #{net_forward.1} parent=11 // pred_check_branch
        %346 = sbr.rel (%p344) target = $region24
      $region23: #{net_forward.1} parent=11 // pred_region
        _
      $region24: #{net_forward.1} parent=11 // pred_fallthru
        _
      // Predicated region
      $region25: #{net_forward.1} parent=11 // pred_check
        %p347 = pneg %p129
      $region26: #{net_forward.1} parent=11 // pred_check_branch
        %349 = sbr.rel (%p347) target = $region28
      $region27: #{net_forward.1} parent=11 // pred_region
        _
      $region28: #{net_forward.1} parent=11 // pred_fallthru
        _
      // Predicated region
      $region29: #{net_forward.1} parent=11 // pred_check
        %p350 = pneg %p150
      $region30: #{net_forward.1} parent=11 // pred_check_branch
        %352 = sbr.rel (%p350) target = $region32
      $region31: #{net_forward.1} parent=11 // pred_region
        _
      $region32: #{net_forward.1} parent=11 // pred_fallthru
        _
      // Predicated region
      $region33: #{net_forward.1} parent=11 // pred_check
        %p353 = pneg %p171
      $region34: #{net_forward.1} parent=11 // pred_check_branch
        %355 = sbr.rel (%p353) target = $region36
      $region35: #{net_forward.1} parent=11 // pred_region
        _
      $region36: #{net_forward.1} parent=11 // pred_fallthru
        _
      // Predicated region
      $region37: #{net_forward.1} parent=11 // pred_check
        %p356 = pneg %p192
      $region38: #{net_forward.1} parent=11 // pred_check_branch
        %358 = sbr.rel (%p356) target = $region40
      $region39: #{net_forward.1} parent=11 // pred_region
        _
      $region40: #{net_forward.1} parent=11 // pred_fallthru
        _
      // Predicated region
      $region41: #{net_forward.1} parent=11 // pred_check
        %p359 = pneg %p213
      $region42: #{net_forward.1} parent=11 // pred_check_branch
        %361 = sbr.rel (%p359) target = $region44
      $region43: #{net_forward.1} parent=11 // pred_region
        _
      $region44: #{net_forward.1} parent=11 // pred_fallthru
        _
      // Predicated region
      $region45: #{net_forward.1} parent=11 // pred_check
        %p362 = pneg %p234
      $region46: #{net_forward.1} parent=11 // pred_check_branch
        %364 = sbr.rel (%p362) target = $region48
      $region47: #{net_forward.1} parent=11 // pred_region
        _
      $region48: #{net_forward.1} parent=11 // pred_fallthru
        _
      // Predicated region
      $region49: #{net_forward.1} parent=11 // pred_check
        %p365 = pneg %p255
      $region50: #{net_forward.1} parent=11 // pred_check_branch
        %367 = sbr.rel (%p365) target = $region52
      $region51: #{net_forward.1} parent=11 // pred_region
        _
      $region52: #{net_forward.1} parent=11 // pred_fallthru
        _
      // Predicated region
      $region53: #{net_forward.1} parent=11 // pred_check
        %p368 = pneg %p276
      $region54: #{net_forward.1} parent=11 // pred_check_branch
        %370 = sbr.rel (%p368) target = $region56
      $region55: #{net_forward.1} parent=11 // pred_region
        _
      $region56: #{net_forward.1} parent=11 // pred_fallthru
        _
      // Predicated region
      $region57: #{net_forward.1} parent=11 // pred_check
        %p371 = pneg %p297
      $region58: #{net_forward.1} parent=11 // pred_check_branch
        %373 = sbr.rel (%p371) target = $region60
      $region59: #{net_forward.1} parent=11 // pred_region
        _
      $region60: #{net_forward.1} parent=11 // pred_fallthru
        _
    $region12: #{net_forward.1} parent=5 // pred_fallthru
      _
    %p374 = scmp.lt.s32.totalorder %s19, 2
    // Predicated region
    $region61: #{net_forward.1} parent=5 // pred_check
      %p375 = pneg %p374
    $region62: #{net_forward.1} parent=5 // pred_check_branch
      %377 = sbr.rel (%p375) target = $region64
    $region63: #{net_forward.1} parent=5 // pred_region
      // Predicated region
      $region65: #{net_forward.1} parent=63 // pred_check
        %p378 = pneg %p39
      $region66: #{net_forward.1} parent=63 // pred_check_branch
        %380 = sbr.rel (%p378) target = $region68
      $region67: #{net_forward.1} parent=63 // pred_region
        %p381 = scmp.lt.s32.totalorder %s19, 1
        %s382 = scalar_select %p381, %s19, 1
        %s383 = smul.addr %s382, 24
        %s384 = smul.addr %s383, 4
        %s385 = scalar_lea.vmem %s0, %s384
      $region68: #{net_forward.1} parent=63 // pred_fallthru
        _
    $region64: #{net_forward.1} parent=5 // pred_fallthru
      _
    %p386 = scmp.le.s32.totalorder 1, %s19
    %p387 = scmp.lt.s32.totalorder %s19, 3
    %p388 = pnand %p386, %p387
    %p389 = pneg %p388
    // Predicated region
    $region69: #{net_forward.1} parent=5 // pred_check
      _
    $region70: #{net_forward.1} parent=5 // pred_check_branch
      %391 = sbr.rel (%p388) target = $region72
    $region71: #{net_forward.1} parent=5 // pred_region
      %s392 = ssub.s32 %s19, 1
      %p393 = scmp.lt.s32.totalorder %s24, 1
      %s394 = scalar_select %p393, %s24, 1
      %s395 = smul.addr %s394, 24
      %s396 = smul.addr %s395, 4
      %s397 = scalar_lea.vmem %s0, %s396
      %p398 = pneg %p45
      %p399 = pneg %p42
      %p400 = pneg %p66
      %p401 = pneg %p63
      %p402 = pneg %p87
      %p403 = pneg %p84
      %p404 = pneg %p108
      %p405 = pneg %p105
      %p406 = pneg %p129
      %p407 = pneg %p126
      %p408 = pneg %p150
      %p409 = pneg %p147
      %p410 = pneg %p171
      %p411 = pneg %p168
      %p412 = pneg %p192
      %p413 = pneg %p189
      %p414 = pneg %p213
      %p415 = pneg %p210
      %p416 = pneg %p234
      %p417 = pneg %p231
      %p418 = pneg %p255
      %p419 = pneg %p252
      %p420 = pneg %p276
      %p421 = pneg %p273
      %p422 = pneg %p297
      %p423 = pneg %p294
      %p424 = pneg %p323
      %p425 = pneg %p320
      %p426 = scmp.lt.s32.totalorder %s24, 1
      %s427 = scalar_select %p426, %s24, 1
      %s428 = smul.addr %s427, 4
      %s429 = scalar_lea.vmem %s13, %s428
      %p430 = scmp.lt.s32.totalorder %s24, 1
      %s431 = scalar_select %p430, %s24, 1
      %s432 = smul.addr %s431, 24
      %s433 = smul.addr %s432, 4
      %s434 = scalar_lea.vmem %s0, %s433
      %p435 = scmp.lt.s32.totalorder %s24, 1
      %s436 = scalar_select %p435, %s24, 1
      %s437 = smul.addr %s436, 4
      %s438 = scalar_lea.vmem %s13, %s437
      %v440 = vld [vmem:[%s434] sm:$0xff]
      %v441 = vld [vmem:[%s434 + $0x8] sm:$0xff]
      %v442 = vld [vmem:[%s434 + $0x10] sm:$0xff]
      %v443 = vld [vmem:[%s434 + $0x18] sm:$0xff]
      %v444 = vld [vmem:[%s434 + $0x20] sm:$0xff]
      %v445 = vld [vmem:[%s434 + $0x28] sm:$0xff]
      %v446 = vld [vmem:[%s434 + $0x30] sm:$0xff]
      %v447 = vld [vmem:[%s434 + $0x38] sm:$0xff]
      %v448 = vld [vmem:[%s434 + $0x40] sm:$0xff]
      %v449 = vld [vmem:[%s434 + $0x48] sm:$0xff]
      %v450 = vld [vmem:[%s434 + $0x50] sm:$0xff]
      %v451 = vld [vmem:[%s434 + $0x58] sm:$0xff]
      %v464 = vunpack.c.l.b16 %v440
      %v465 = vunpack.c.h.b16 %v440
      %v466 = vunpack.c.l.b16 %v441
      %v467 = vunpack.c.h.b16 %v441
      %v468 = vunpack.c.l.b16 %v442
      %v469 = vunpack.c.h.b16 %v442
      %v470 = vunpack.c.l.b16 %v443
      %v471 = vunpack.c.h.b16 %v443
      %v472 = vunpack.c.l.b16 %v444
      %v473 = vunpack.c.h.b16 %v444
      %v474 = vunpack.c.l.b16 %v445
      %v475 = vunpack.c.h.b16 %v445
      %v476 = vunpack.c.l.b16 %v446
      %v477 = vunpack.c.h.b16 %v446
      %v478 = vunpack.c.l.b16 %v447
      %v479 = vunpack.c.h.b16 %v447
      %v480 = vunpack.c.l.b16 %v448
      %v481 = vunpack.c.h.b16 %v448
      %v482 = vunpack.c.l.b16 %v449
      %v483 = vunpack.c.h.b16 %v449
      %v484 = vunpack.c.l.b16 %v450
      %v485 = vunpack.c.h.b16 %v450
      %v486 = vunpack.c.l.b16 %v451
      %v487 = vunpack.c.h.b16 %v451
      %v488 = vpack.c.b16 %v466, %v464
      %v489 = vpack.c.b16 %v467, %v465
      %v490 = vpack.c.b16 %v470, %v468
      %v491 = vpack.c.b16 %v471, %v469
      %v492 = vpack.c.b16 %v474, %v472
      %v493 = vpack.c.b16 %v475, %v473
      %v494 = vpack.c.b16 %v478, %v476
      %v495 = vpack.c.b16 %v479, %v477
      %v496 = vpack.c.b16 %v482, %v480
      %v497 = vpack.c.b16 %v483, %v481
      %v498 = vpack.c.b16 %v486, %v484
      %v499 = vpack.c.b16 %v487, %v485
      %512 = vrot.lane.b32.xlu0 %v488, 127
      %v513 = vpop.permute.xlu0 %512
      %514 = vrot.lane.b32.xlu0 %v489, 127
      %v515 = vpop.permute.xlu0 %514
      %516 = vrot.lane.b32.xlu0 %v490, 127
      %v517 = vpop.permute.xlu0 %516
      %518 = vrot.lane.b32.xlu0 %v491, 127
      %v519 = vpop.permute.xlu0 %518
      %520 = vrot.lane.b32.xlu0 %v492, 127
      %v521 = vpop.permute.xlu0 %520
      %522 = vrot.lane.b32.xlu0 %v493, 127
      %v523 = vpop.permute.xlu0 %522
      %524 = vrot.lane.b32.xlu0 %v494, 127
      %v525 = vpop.permute.xlu0 %524
      %526 = vrot.lane.b32.xlu0 %v495, 127
      %v527 = vpop.permute.xlu0 %526
      %528 = vrot.lane.b32.xlu0 %v496, 127
      %v529 = vpop.permute.xlu0 %528
      %530 = vrot.lane.b32.xlu0 %v497, 127
      %v531 = vpop.permute.xlu0 %530
      %532 = vrot.lane.b32.xlu0 %v498, 127
      %v533 = vpop.permute.xlu0 %532
      %534 = vrot.lane.b32.xlu0 %v499, 127
      %v535 = vpop.permute.xlu0 %534
      %vm536 = vcmask 1039360
      %v537 = vsel %vm536, %v513, %v515
      %v538 = vsel %vm536, %v517, %v519
      %v539 = vsel %vm536, %v521, %v523
      %v540 = vsel %vm536, %v525, %v527
      %v541 = vsel %vm536, %v529, %v531
      %v542 = vsel %vm536, %v533, %v535
      %555 = vrot.lane.b32.xlu0 %v488, 126
      %v556 = vpop.permute.xlu0 %555
      %557 = vrot.lane.b32.xlu0 %v489, 126
      %v558 = vpop.permute.xlu0 %557
      %559 = vrot.lane.b32.xlu0 %v490, 126
      %v560 = vpop.permute.xlu0 %559
      %561 = vrot.lane.b32.xlu0 %v491, 126
      %v562 = vpop.permute.xlu0 %561
      %563 = vrot.lane.b32.xlu0 %v492, 126
      %v564 = vpop.permute.xlu0 %563
      %565 = vrot.lane.b32.xlu0 %v493, 126
      %v566 = vpop.permute.xlu0 %565
      %567 = vrot.lane.b32.xlu0 %v494, 126
      %v568 = vpop.permute.xlu0 %567
      %569 = vrot.lane.b32.xlu0 %v495, 126
      %v570 = vpop.permute.xlu0 %569
      %571 = vrot.lane.b32.xlu0 %v496, 126
      %v572 = vpop.permute.xlu0 %571
      %573 = vrot.lane.b32.xlu0 %v497, 126
      %v574 = vpop.permute.xlu0 %573
      %575 = vrot.lane.b32.xlu0 %v498, 126
      %v576 = vpop.permute.xlu0 %575
      %577 = vrot.lane.b32.xlu0 %v499, 126
      %v578 = vpop.permute.xlu0 %577
      %vm579 = vcmask 1031168
      %v580 = vsel %vm579, %v556, %v558
      %v581 = vsel %vm579, %v560, %v562
      %v582 = vsel %vm579, %v564, %v566
      %v583 = vsel %vm579, %v568, %v570
      %v584 = vsel %vm579, %v572, %v574
      %v585 = vsel %vm579, %v576, %v578
      %598 = vrot.lane.b32.xlu0 %v488, 125
      %v599 = vpop.permute.xlu0 %598
      %600 = vrot.lane.b32.xlu0 %v489, 125
      %v601 = vpop.permute.xlu0 %600
      %602 = vrot.lane.b32.xlu0 %v490, 125
      %v603 = vpop.permute.xlu0 %602
      %604 = vrot.lane.b32.xlu0 %v491, 125
      %v605 = vpop.permute.xlu0 %604
      %606 = vrot.lane.b32.xlu0 %v492, 125
      %v607 = vpop.permute.xlu0 %606
      %608 = vrot.lane.b32.xlu0 %v493, 125
      %v609 = vpop.permute.xlu0 %608
      %610 = vrot.lane.b32.xlu0 %v494, 125
      %v611 = vpop.permute.xlu0 %610
      %612 = vrot.lane.b32.xlu0 %v495, 125
      %v613 = vpop.permute.xlu0 %612
      %614 = vrot.lane.b32.xlu0 %v496, 125
      %v615 = vpop.permute.xlu0 %614
      %616 = vrot.lane.b32.xlu0 %v497, 125
      %v617 = vpop.permute.xlu0 %616
      %618 = vrot.lane.b32.xlu0 %v498, 125
      %v619 = vpop.permute.xlu0 %618
      %620 = vrot.lane.b32.xlu0 %v499, 125
      %v621 = vpop.permute.xlu0 %620
      %vm622 = vcmask 1022976
      %v623 = vsel %vm622, %v599, %v601
      %v624 = vsel %vm622, %v603, %v605
      %v625 = vsel %vm622, %v607, %v609
      %v626 = vsel %vm622, %v611, %v613
      %v627 = vsel %vm622, %v615, %v617
      %v628 = vsel %vm622, %v619, %v621
      %641 = vrot.lane.b32.xlu0 %v488, 124
      %v642 = vpop.permute.xlu0 %641
      %643 = vrot.lane.b32.xlu0 %v489, 124
      %v644 = vpop.permute.xlu0 %643
      %645 = vrot.lane.b32.xlu0 %v490, 124
      %v646 = vpop.permute.xlu0 %645
      %647 = vrot.lane.b32.xlu0 %v491, 124
      %v648 = vpop.permute.xlu0 %647
      %649 = vrot.lane.b32.xlu0 %v492, 124
      %v650 = vpop.permute.xlu0 %649
      %651 = vrot.lane.b32.xlu0 %v493, 124
      %v652 = vpop.permute.xlu0 %651
      %653 = vrot.lane.b32.xlu0 %v494, 124
      %v654 = vpop.permute.xlu0 %653
      %655 = vrot.lane.b32.xlu0 %v495, 124
      %v656 = vpop.permute.xlu0 %655
      %657 = vrot.lane.b32.xlu0 %v496, 124
      %v658 = vpop.permute.xlu0 %657
      %659 = vrot.lane.b32.xlu0 %v497, 124
      %v660 = vpop.permute.xlu0 %659
      %661 = vrot.lane.b32.xlu0 %v498, 124
      %v662 = vpop.permute.xlu0 %661
      %663 = vrot.lane.b32.xlu0 %v499, 124
      %v664 = vpop.permute.xlu0 %663
      %vm665 = vcmask 1014784
      %v666 = vsel %vm665, %v642, %v644
      %v667 = vsel %vm665, %v646, %v648
      %v668 = vsel %vm665, %v650, %v652
      %v669 = vsel %vm665, %v654, %v656
      %v670 = vsel %vm665, %v658, %v660
      %v671 = vsel %vm665, %v662, %v664
      %v684 = vld [vmem:[%s1] sm:$0xff]
      %v685 = vld [vmem:[%s1 + $0x8] sm:$0xff]
      %v686 = vld [vmem:[%s1 + $0x10] sm:$0xff]
      %v687 = vld [vmem:[%s1 + $0x18] sm:$0xff]
      %v688 = vld [vmem:[%s1 + $0x20] sm:$0xff]
      %v689 = vld [vmem:[%s1 + $0x28] sm:$0xff]
      %v690 = vld [vmem:[%s1 + $0x30] sm:$0xff]
      %v691 = vld [vmem:[%s1 + $0x38] sm:$0xff]
      %v692 = vld [vmem:[%s1 + $0x40] sm:$0xff]
      %v693 = vld [vmem:[%s1 + $0x48] sm:$0xff]
      %v694 = vld [vmem:[%s1 + $0x50] sm:$0xff]
      %v695 = vld [vmem:[%s1 + $0x58] sm:$0xff]
      %v696 = vld [vmem:[%s1 + $0x60] sm:$0xff]
      %v697 = vld [vmem:[%s1 + $0x68] sm:$0xff]
      %v698 = vld [vmem:[%s1 + $0x70] sm:$0xff]
      %v699 = vld [vmem:[%s1 + $0x78] sm:$0xff]
      %v700 = vld [vmem:[%s1 + $0x80] sm:$0xff]
      %v701 = vld [vmem:[%s1 + $0x88] sm:$0xff]
      %v702 = vld [vmem:[%s1 + $0x90] sm:$0xff]
      %v703 = vld [vmem:[%s1 + $0x98] sm:$0xff]
      %v704 = vld [vmem:[%s1 + $0xa0] sm:$0xff]
      %v705 = vld [vmem:[%s1 + $0xa8] sm:$0xff]
      %v706 = vld [vmem:[%s1 + $0xb0] sm:$0xff]
      %v707 = vld [vmem:[%s1 + $0xb8] sm:$0xff]
      %v708 = vld [vmem:[%s1 + $0xc0] sm:$0xff]
      %v709 = vld [vmem:[%s1 + $0xc8] sm:$0xff]
      %v710 = vld [vmem:[%s1 + $0xd0] sm:$0xff]
      %v711 = vld [vmem:[%s1 + $0xd8] sm:$0xff]
      %v712 = vld [vmem:[%s1 + $0xe0] sm:$0xff]
      %v713 = vld [vmem:[%s1 + $0xe8] sm:$0xff]
      %v714 = vld [vmem:[%s1 + $0xf0] sm:$0xff]
      %v715 = vld [vmem:[%s1 + $0xf8] sm:$0xff]
      %v716 = vld [vmem:[%s1 + $0x100] sm:$0xff]
      %v717 = vld [vmem:[%s1 + $0x108] sm:$0xff]
      %v718 = vld [vmem:[%s1 + $0x110] sm:$0xff]
      %v719 = vld [vmem:[%s1 + $0x118] sm:$0xff]
      %v720 = vld [vmem:[%s1 + $0x120] sm:$0xff]
      %v721 = vld [vmem:[%s1 + $0x128] sm:$0xff]
      %v722 = vld [vmem:[%s1 + $0x130] sm:$0xff]
      %v723 = vld [vmem:[%s1 + $0x138] sm:$0xff]
      %v724 = vld [vmem:[%s1 + $0x140] sm:$0xff]
      %v725 = vld [vmem:[%s1 + $0x148] sm:$0xff]
      %v726 = vld [vmem:[%s2] sm:$0xff]
      %v727 = vld [vmem:[%s2 + $0x8] sm:$0xff]
      %v728 = vld [vmem:[%s2 + $0x10] sm:$0xff]
      %v729 = vld [vmem:[%s2 + $0x18] sm:$0xff]
      %v730 = vld [vmem:[%s2 + $0x20] sm:$0xff]
      %v731 = vld [vmem:[%s2 + $0x28] sm:$0xff]
      %v732 = vld [vmem:[%s2 + $0x30] sm:$0xff]
      %v733 = vld [vmem:[%s2 + $0x38] sm:$0xff]
      %v734 = vld [vmem:[%s2 + $0x40] sm:$0xff]
      %v735 = vld [vmem:[%s2 + $0x48] sm:$0xff]
      %v736 = vld [vmem:[%s2 + $0x50] sm:$0xff]
      %v737 = vld [vmem:[%s2 + $0x58] sm:$0xff]
      %v738 = vld [vmem:[%s2 + $0x60] sm:$0xff]
      %v739 = vld [vmem:[%s2 + $0x68] sm:$0xff]
      %v740 = vld [vmem:[%s2 + $0x70] sm:$0xff]
      %v741 = vld [vmem:[%s2 + $0x78] sm:$0xff]
      %v742 = vld [vmem:[%s2 + $0x80] sm:$0xff]
      %v743 = vld [vmem:[%s2 + $0x88] sm:$0xff]
      %v744 = vld [vmem:[%s2 + $0x90] sm:$0xff]
      %v745 = vld [vmem:[%s2 + $0x98] sm:$0xff]
      %v746 = vld [vmem:[%s2 + $0xa0] sm:$0xff]
      %748 = vset.pattern.permute.xlu0 0
      %749 = vperm.xlu0 %748, %v726
      %v750 = vpop.permute.xlu0 %749
      %753 = vset.pattern.permute.xlu0 0
      %754 = vperm.xlu0 %753, %v727
      %v755 = vpop.permute.xlu0 %754
      %758 = vset.pattern.permute.xlu0 0
      %759 = vperm.xlu0 %758, %v728
      %v760 = vpop.permute.xlu0 %759
      %763 = vset.pattern.permute.xlu0 0
      %764 = vperm.xlu0 %763, %v729
      %v765 = vpop.permute.xlu0 %764
      %768 = vset.pattern.permute.xlu0 0
      %769 = vperm.xlu0 %768, %v730
      %v770 = vpop.permute.xlu0 %769
      %773 = vset.pattern.permute.xlu0 0
      %774 = vperm.xlu0 %773, %v731
      %v775 = vpop.permute.xlu0 %774
      %778 = vset.pattern.permute.xlu0 0
      %779 = vperm.xlu0 %778, %v732
      %v780 = vpop.permute.xlu0 %779
      %783 = vset.pattern.permute.xlu0 0
      %784 = vperm.xlu0 %783, %v733
      %v785 = vpop.permute.xlu0 %784
      %788 = vset.pattern.permute.xlu0 0
      %789 = vperm.xlu0 %788, %v734
      %v790 = vpop.permute.xlu0 %789
      %793 = vset.pattern.permute.xlu0 0
      %794 = vperm.xlu0 %793, %v735
      %v795 = vpop.permute.xlu0 %794
      %798 = vset.pattern.permute.xlu0 0
      %799 = vperm.xlu0 %798, %v736
      %v800 = vpop.permute.xlu0 %799
      %803 = vset.pattern.permute.xlu0 0
      %804 = vperm.xlu0 %803, %v737
      %v805 = vpop.permute.xlu0 %804
      %808 = vset.pattern.permute.xlu0 0
      %809 = vperm.xlu0 %808, %v738
      %v810 = vpop.permute.xlu0 %809
      %813 = vset.pattern.permute.xlu0 0
      %814 = vperm.xlu0 %813, %v739
      %v815 = vpop.permute.xlu0 %814
      %818 = vset.pattern.permute.xlu0 0
      %819 = vperm.xlu0 %818, %v740
      %v820 = vpop.permute.xlu0 %819
      %823 = vset.pattern.permute.xlu0 0
      %824 = vperm.xlu0 %823, %v741
      %v825 = vpop.permute.xlu0 %824
      %828 = vset.pattern.permute.xlu0 0
      %829 = vperm.xlu0 %828, %v742
      %v830 = vpop.permute.xlu0 %829
      %833 = vset.pattern.permute.xlu0 0
      %834 = vperm.xlu0 %833, %v743
      %v835 = vpop.permute.xlu0 %834
      %838 = vset.pattern.permute.xlu0 0
      %839 = vperm.xlu0 %838, %v744
      %v840 = vpop.permute.xlu0 %839
      %843 = vset.pattern.permute.xlu0 0
      %844 = vperm.xlu0 %843, %v745
      %v845 = vpop.permute.xlu0 %844
      %848 = vset.pattern.permute.xlu0 0
      %849 = vperm.xlu0 %848, %v746
      %v850 = vpop.permute.xlu0 %849
      %v894 = vunpack.c.l.b16 %v684
      %v895 = vunpack.c.h.b16 %v684
      %v896 = vunpack.c.l.b16 %v685
      %v897 = vunpack.c.h.b16 %v685
      %v898 = vunpack.c.l.b16 %v686
      %v899 = vunpack.c.h.b16 %v686
      %v900 = vunpack.c.l.b16 %v687
      %v901 = vunpack.c.h.b16 %v687
      %v902 = vunpack.c.l.b16 %v688
      %v903 = vunpack.c.h.b16 %v688
      %v904 = vunpack.c.l.b16 %v689
      %v905 = vunpack.c.h.b16 %v689
      %v906 = vunpack.c.l.b16 %v690
      %v907 = vunpack.c.h.b16 %v690
      %v908 = vunpack.c.l.b16 %v691
      %v909 = vunpack.c.h.b16 %v691
      %v910 = vunpack.c.l.b16 %v692
      %v911 = vunpack.c.h.b16 %v692
      %v912 = vunpack.c.l.b16 %v693
      %v913 = vunpack.c.h.b16 %v693
      %v914 = vunpack.c.l.b16 %v694
      %v915 = vunpack.c.h.b16 %v694
      %v916 = vunpack.c.l.b16 %v695
      %v917 = vunpack.c.h.b16 %v695
      %v918 = vunpack.c.l.b16 %v696
      %v919 = vunpack.c.h.b16 %v696
      %v920 = vunpack.c.l.b16 %v697
      %v921 = vunpack.c.h.b16 %v697
      %v922 = vunpack.c.l.b16 %v698
      %v923 = vunpack.c.h.b16 %v698
      %v924 = vunpack.c.l.b16 %v699
      %v925 = vunpack.c.h.b16 %v699
      %v926 = vunpack.c.l.b16 %v700
      %v927 = vunpack.c.h.b16 %v700
      %v928 = vunpack.c.l.b16 %v701
      %v929 = vunpack.c.h.b16 %v701
      %v930 = vunpack.c.l.b16 %v702
      %v931 = vunpack.c.h.b16 %v702
      %v932 = vunpack.c.l.b16 %v703
      %v933 = vunpack.c.h.b16 %v703
      %v934 = vunpack.c.l.b16 %v704
      %v935 = vunpack.c.h.b16 %v704
      %v936 = vunpack.c.l.b16 %v705
      %v937 = vunpack.c.h.b16 %v705
      %v938 = vunpack.c.l.b16 %v706
      %v939 = vunpack.c.h.b16 %v706
      %v940 = vunpack.c.l.b16 %v707
      %v941 = vunpack.c.h.b16 %v707
      %v942 = vunpack.c.l.b16 %v708
      %v943 = vunpack.c.h.b16 %v708
      %v944 = vunpack.c.l.b16 %v709
      %v945 = vunpack.c.h.b16 %v709
      %v946 = vunpack.c.l.b16 %v710
      %v947 = vunpack.c.h.b16 %v710
      %v948 = vunpack.c.l.b16 %v711
      %v949 = vunpack.c.h.b16 %v711
      %v950 = vunpack.c.l.b16 %v712
      %v951 = vunpack.c.h.b16 %v712
      %v952 = vunpack.c.l.b16 %v713
      %v953 = vunpack.c.h.b16 %v713
      %v954 = vunpack.c.l.b16 %v714
      %v955 = vunpack.c.h.b16 %v714
      %v956 = vunpack.c.l.b16 %v715
      %v957 = vunpack.c.h.b16 %v715
      %v958 = vunpack.c.l.b16 %v716
      %v959 = vunpack.c.h.b16 %v716
      %v960 = vunpack.c.l.b16 %v717
      %v961 = vunpack.c.h.b16 %v717
      %v962 = vunpack.c.l.b16 %v718
      %v963 = vunpack.c.h.b16 %v718
      %v964 = vunpack.c.l.b16 %v719
      %v965 = vunpack.c.h.b16 %v719
      %v966 = vunpack.c.l.b16 %v720
      %v967 = vunpack.c.h.b16 %v720
      %v968 = vunpack.c.l.b16 %v721
      %v969 = vunpack.c.h.b16 %v721
      %v970 = vunpack.c.l.b16 %v722
      %v971 = vunpack.c.h.b16 %v722
      %v972 = vunpack.c.l.b16 %v723
      %v973 = vunpack.c.h.b16 %v723
      %v974 = vunpack.c.l.b16 %v724
      %v975 = vunpack.c.h.b16 %v724
      %v976 = vunpack.c.l.b16 %v725
      %v977 = vunpack.c.h.b16 %v725
      %v978 = vpack.c.b16 %v898, %v894
      %v979 = vpack.c.b16 %v899, %v895
      %v980 = vpack.c.b16 %v900, %v896
      %v981 = vpack.c.b16 %v901, %v897
      %v982 = vpack.c.b16 %v906, %v902
      %v983 = vpack.c.b16 %v907, %v903
      %v984 = vpack.c.b16 %v908, %v904
      %v985 = vpack.c.b16 %v909, %v905
      %v986 = vpack.c.b16 %v914, %v910
      %v987 = vpack.c.b16 %v915, %v911
      %v988 = vpack.c.b16 %v916, %v912
      %v989 = vpack.c.b16 %v917, %v913
      %v990 = vpack.c.b16 %v922, %v918
      %v991 = vpack.c.b16 %v923, %v919
      %v992 = vpack.c.b16 %v924, %v920
      %v993 = vpack.c.b16 %v925, %v921
      %v994 = vpack.c.b16 %v930, %v926
      %v995 = vpack.c.b16 %v931, %v927
      %v996 = vpack.c.b16 %v932, %v928
      %v997 = vpack.c.b16 %v933, %v929
      %v998 = vpack.c.b16 %v938, %v934
      %v999 = vpack.c.b16 %v939, %v935
      %v1000 = vpack.c.b16 %v940, %v936
      %v1001 = vpack.c.b16 %v941, %v937
      %v1002 = vpack.c.b16 %v946, %v942
      %v1003 = vpack.c.b16 %v947, %v943
      %v1004 = vpack.c.b16 %v948, %v944
      %v1005 = vpack.c.b16 %v949, %v945
      %v1006 = vpack.c.b16 %v954, %v950
      %v1007 = vpack.c.b16 %v955, %v951
      %v1008 = vpack.c.b16 %v956, %v952
      %v1009 = vpack.c.b16 %v957, %v953
      %v1010 = vpack.c.b16 %v962, %v958
      %v1011 = vpack.c.b16 %v963, %v959
      %v1012 = vpack.c.b16 %v964, %v960
      %v1013 = vpack.c.b16 %v965, %v961
      %v1014 = vpack.c.b16 %v970, %v966
      %v1015 = vpack.c.b16 %v971, %v967
      %v1016 = vpack.c.b16 %v972, %v968
      %v1017 = vpack.c.b16 %v973, %v969
      %v1018 = vpack.c.b16 %v974, %v974
      %v1019 = vpack.c.b16 %v975, %v975
      %v1020 = vpack.c.b16 %v976, %v976
      %v1021 = vpack.c.b16 %v977, %v977
      %vm1055 = vcmask 785408
      %v1057 = vsel %vm1055, %v981, 0
      %v1060 = vsel %vm1055, %v985, 0
      %v1063 = vsel %vm1055, %v989, 0
      %v1066 = vsel %vm1055, %v993, 0
      %v1069 = vsel %vm1055, %v997, 0
      %v1072 = vsel %vm1055, %v1001, 0
      %v1075 = vsel %vm1055, %v1005, 0
      %v1078 = vsel %vm1055, %v1009, 0
      %v1081 = vsel %vm1055, %v1013, 0
      %v1084 = vsel %vm1055, %v1017, 0
      %v1087 = vsel %vm1055, %v1021, 0
      %1089 = vmatprep.subr.bf16.mxu0 %v489
      %1090 = vmatpush1.bf16.msra.mxu0 %v488
      %1091 = vmatprep.subr.bf16.mxu0 %v491
      %1092 = vmatpush1.bf16.msra.mxu0 %v490
      %1093 = vmatprep.subr.bf16.mxu0 %v493
      %1094 = vmatpush1.bf16.msra.mxu0 %v492
      %1095 = vmatprep.subr.bf16.mxu0 %v495
      %1096 = vmatpush1.bf16.msra.mxu0 %v494
      %1097 = vmatprep.subr.bf16.mxu0 %v497
      %1098 = vmatpush1.bf16.msra.mxu0 %v496
      %1099 = vmatprep.subr.bf16.mxu0 %v499
      %1100 = vmatpush1.bf16.msra.mxu0 %v498
      %1101 = vmatprep.subr.bf16.mxu0 %v515
      %1102 = vmatpush1.bf16.msra.mxu0 %v537
      %1103 = vmatprep.subr.bf16.mxu0 %v519
      %1104 = vmatpush1.bf16.msra.mxu0 %v538
      %1105 = vmatprep.subr.bf16.mxu0 %v523
      %1106 = vmatpush1.bf16.msra.mxu0 %v539
      %1107 = vmatprep.subr.bf16.mxu0 %v527
      %1108 = vmatpush1.bf16.msra.mxu0 %v540
      %1109 = vmatprep.subr.bf16.mxu0 %v531
      %1110 = vmatpush1.bf16.msra.mxu0 %v541
      %1111 = vmatprep.subr.bf16.mxu0 %v535
      %1112 = vmatpush1.bf16.msra.mxu0 %v542
      %1113 = vmatprep.subr.bf16.mxu0 %v558
      %1114 = vmatpush1.bf16.msra.mxu0 %v580
      %1115 = vmatprep.subr.bf16.mxu0 %v562
      %1116 = vmatpush1.bf16.msra.mxu0 %v581
      %1117 = vmatprep.subr.bf16.mxu0 %v566
      %1118 = vmatpush1.bf16.msra.mxu0 %v582
      %1119 = vmatprep.subr.bf16.mxu0 %v570
      %1120 = vmatpush1.bf16.msra.mxu0 %v583
      %1121 = vmatprep.mubr.bf16.mxu0 %v979
      %1122 = vmatmul.mubr.bf16.gmra.mrb[0].mxu0 %v978
      %v1123 = vpop.f32.mrb[0].mxu0
      %v1124 = vadd.f32 %v750, %v1123
      %v1125 = vpop.f32.mrb[0].mxu0
      %v1126 = vadd.f32 %v750, %v1125
      %v1127 = vpop.f32.mrb[0].mxu0
      %v1128 = vadd.f32 %v755, %v1127
      %v1129 = vpop.f32.mrb[0].mxu0
      %v1130 = vadd.f32 %v755, %v1129
      %1131 = vmatprep.mubr.bf16.mxu0 %v983
      %1132 = vmatmul.mubr.bf16.gmra.mrb[0].mxu0 %v982
      %v1133 = vpop.f32.mrb[0].mxu0
      %v1134 = vadd.f32 %v760, %v1133
      %v1135 = vpop.f32.mrb[0].mxu0
      %v1136 = vadd.f32 %v760, %v1135
      %v1137 = vpop.f32.mrb[0].mxu0
      %v1138 = vadd.f32 %v765, %v1137
      %v1139 = vpop.f32.mrb[0].mxu0
      %v1140 = vadd.f32 %v765, %v1139
      %1141 = vmatprep.mubr.bf16.mxu0 %v987
      %1142 = vmatmul.mubr.bf16.gmra.mrb[0].mxu0 %v986
      %v1143 = vpop.f32.mrb[0].mxu0
      %v1144 = vadd.f32 %v770, %v1143
      %v1145 = vpop.f32.mrb[0].mxu0
      %v1146 = vadd.f32 %v770, %v1145
      %v1147 = vpop.f32.mrb[0].mxu0
      %v1148 = vadd.f32 %v775, %v1147
      %v1149 = vpop.f32.mrb[0].mxu0
      %v1150 = vadd.f32 %v775, %v1149
      %1151 = vmatprep.mubr.bf16.mxu0 %v991
      %1152 = vmatmul.mubr.bf16.gmra.mrb[0].mxu0 %v990
      %v1153 = vpop.f32.mrb[0].mxu0
      %v1154 = vadd.f32 %v780, %v1153
      %v1155 = vpop.f32.mrb[0].mxu0
      %v1156 = vadd.f32 %v780, %v1155
      %v1157 = vpop.f32.mrb[0].mxu0
      %v1158 = vadd.f32 %v785, %v1157
      %v1159 = vpop.f32.mrb[0].mxu0
      %v1160 = vadd.f32 %v785, %v1159
      %1161 = vmatprep.mubr.bf16.mxu0 %v995
      %1162 = vmatmul.mubr.bf16.gmra.mrb[0].mxu0 %v994
      %v1163 = vpop.f32.mrb[0].mxu0
      %v1164 = vadd.f32 %v790, %v1163
      %v1165 = vpop.f32.mrb[0].mxu0
      %v1166 = vadd.f32 %v790, %v1165
      %v1167 = vpop.f32.mrb[0].mxu0
      %v1168 = vadd.f32 %v795, %v1167
      %v1169 = vpop.f32.mrb[0].mxu0
      %v1170 = vadd.f32 %v795, %v1169
      %1171 = vmatprep.mubr.bf16.mxu0 %v999
      %1172 = vmatmul.mubr.bf16.gmra.mrb[0].mxu0 %v998
      %v1173 = vpop.f32.mrb[0].mxu0
      %v1174 = vadd.f32 %v800, %v1173
      %v1175 = vpop.f32.mrb[0].mxu0
      %v1176 = vadd.f32 %v800, %v1175
      %v1177 = vpop.f32.mrb[0].mxu0
      %v1178 = vadd.f32 %v805, %v1177
      %v1179 = vpop.f32.mrb[0].mxu0
      %v1180 = vadd.f32 %v805, %v1179
      %1181 = vmatprep.mubr.bf16.mxu0 %v1003
      %1182 = vmatmul.mubr.bf16.gmra.mrb[0].mxu0 %v1002
      %v1183 = vpop.f32.mrb[0].mxu0
      %v1184 = vadd.f32 %v810, %v1183
      %v1185 = vpop.f32.mrb[0].mxu0
      %v1186 = vadd.f32 %v810, %v1185
      %v1187 = vpop.f32.mrb[0].mxu0
      %v1188 = vadd.f32 %v815, %v1187
      %v1189 = vpop.f32.mrb[0].mxu0
      %v1190 = vadd.f32 %v815, %v1189
      %1191 = vmatprep.mubr.bf16.mxu0 %v1007
      %1192 = vmatmul.mubr.bf16.gmra.mrb[0].mxu0 %v1006
      %v1193 = vpop.f32.mrb[0].mxu0
      %v1194 = vadd.f32 %v820, %v1193
      %v1195 = vpop.f32.mrb[0].mxu0
      %v1196 = vadd.f32 %v820, %v1195
      %v1197 = vpop.f32.mrb[0].mxu0
      %v1198 = vadd.f32 %v825, %v1197
      %v1199 = vpop.f32.mrb[0].mxu0
      %v1200 = vadd.f32 %v825, %v1199
      %1201 = vmatprep.mubr.bf16.mxu0 %v1011
      %1202 = vmatmul.mubr.bf16.gmra.mrb[0].mxu0 %v1010
      %v1203 = vpop.f32.mrb[0].mxu0
      %v1204 = vadd.f32 %v830, %v1203
      %v1205 = vpop.f32.mrb[0].mxu0
      %v1206 = vadd.f32 %v830, %v1205
      %v1207 = vpop.f32.mrb[0].mxu0
      %v1208 = vadd.f32 %v835, %v1207
      %v1209 = vpop.f32.mrb[0].mxu0
      %v1210 = vadd.f32 %v835, %v1209
      %1211 = vmatprep.mubr.bf16.mxu0 %v1015
      %1212 = vmatmul.mubr.bf16.gmra.mrb[0].mxu0 %v1014
      %v1213 = vpop.f32.mrb[0].mxu0
      %v1214 = vadd.f32 %v840, %v1213
      %v1215 = vpop.f32.mrb[0].mxu0
      %v1216 = vadd.f32 %v840, %v1215
      %v1217 = vpop.f32.mrb[0].mxu0
      %v1218 = vadd.f32 %v845, %v1217
      %v1219 = vpop.f32.mrb[0].mxu0
      %v1220 = vadd.f32 %v845, %v1219
      %1221 = vmatprep.mubr.bf16.mxu0 %v1019
      %1222 = vmatmul.mubr.bf16.gmra.mrb[0].mxu0 %v1018
      %v1223 = vpop.f32.mrb[0].mxu0
      %v1224 = vadd.f32 %v850, %v1223
      %v1225 = vpop.f32.mrb[0].mxu0
      %v1226 = vadd.f32 %v850, %v1225
      %v1227 = vpop.f32.mrb[0].mxu0
      %v1228 = vpop.f32.mrb[0].mxu0
      %1229 = vdwg.mxu0
      %1230 = vmatprep.subr.bf16.mxu0 %v574
      %1231 = vmatpush1.bf16.msra.mxu0 %v584
      %1232 = vmatprep.subr.bf16.mxu0 %v578
      %1233 = vmatpush1.bf16.msra.mxu0 %v585
      %1234 = vmatprep.subr.bf16.mxu0 %v601
      %1235 = vmatpush1.bf16.msra.mxu0 %v623
      %1236 = vmatprep.subr.bf16.mxu0 %v605
      %1237 = vmatpush1.bf16.msra.mxu0 %v624
      %1238 = vmatprep.subr.bf16.mxu0 %v609
      %1239 = vmatpush1.bf16.msra.mxu0 %v625
      %1240 = vmatprep.subr.bf16.mxu0 %v613
      %1241 = vmatpush1.bf16.msra.mxu0 %v626
      %1242 = vmatprep.subr.bf16.mxu0 %v617
      %1243 = vmatpush1.bf16.msra.mxu0 %v627
      %1244 = vmatprep.subr.bf16.mxu0 %v621
      %1245 = vmatpush1.bf16.msra.mxu0 %v628
      %1246 = vmatprep.subr.bf16.mxu0 %v644
      %1247 = vmatpush1.bf16.msra.mxu0 %v666
      %1248 = vmatprep.subr.bf16.mxu0 %v648
      %1249 = vmatpush1.bf16.msra.mxu0 %v667
      %1250 = vmatprep.subr.bf16.mxu0 %v652
      %1251 = vmatpush1.bf16.msra.mxu0 %v668
      %1252 = vmatprep.subr.bf16.mxu0 %v656
      %1253 = vmatpush1.bf16.msra.mxu0 %v669
      %1254 = vmatprep.subr.bf16.mxu0 %v660
      %1255 = vmatpush1.bf16.msra.mxu0 %v670
      %1256 = vmatprep.subr.bf16.mxu0 %v664
      %1257 = vmatpush1.bf16.msra.mxu0 %v671
      %1258 = vmatprep.subr.bf16.mxu0 0
      %1259 = vmatpush1.bf16.msra.mxu0 0
      %1260 = vmatprep.subr.bf16.mxu0 0
      %1261 = vmatpush1.bf16.msra.mxu0 0
      %1262 = vmatprep.mubr.bf16.mxu0 %v1057
      %1263 = vmatmul.mubr.bf16.gmra.mrb[0].mxu0 %v980
      %v1264 = vpop.f32.mrb[0].mxu0
      %v1265 = vadd.f32 %v1124, %v1264
      %v1266 = vpop.f32.mrb[0].mxu0
      %v1267 = vadd.f32 %v1126, %v1266
      %v1268 = vpop.f32.mrb[0].mxu0
      %v1269 = vadd.f32 %v1128, %v1268
      %v1270 = vpop.f32.mrb[0].mxu0
      %v1271 = vadd.f32 %v1130, %v1270
      %1272 = vmatprep.mubr.bf16.mxu0 %v1060
      %1273 = vmatmul.mubr.bf16.gmra.mrb[0].mxu0 %v984
      %v1274 = vpop.f32.mrb[0].mxu0
      %v1275 = vadd.f32 %v1134, %v1274
      %v1276 = vpop.f32.mrb[0].mxu0
      %v1277 = vadd.f32 %v1136, %v1276
      %v1278 = vpop.f32.mrb[0].mxu0
      %v1279 = vadd.f32 %v1138, %v1278
      %v1280 = vpop.f32.mrb[0].mxu0
      %v1281 = vadd.f32 %v1140, %v1280
      %1282 = vmatprep.mubr.bf16.mxu0 %v1063
      %1283 = vmatmul.mubr.bf16.gmra.mrb[0].mxu0 %v988
      %v1284 = vpop.f32.mrb[0].mxu0
      %v1285 = vadd.f32 %v1144, %v1284
      %v1286 = vpop.f32.mrb[0].mxu0
      %v1287 = vadd.f32 %v1146, %v1286
      %v1288 = vpop.f32.mrb[0].mxu0
      %v1289 = vadd.f32 %v1148, %v1288
      %v1290 = vpop.f32.mrb[0].mxu0
      %v1291 = vadd.f32 %v1150, %v1290
      %1292 = vmatprep.mubr.bf16.mxu0 %v1066
      %1293 = vmatmul.mubr.bf16.gmra.mrb[0].mxu0 %v992
      %v1294 = vpop.f32.mrb[0].mxu0
      %v1295 = vadd.f32 %v1154, %v1294
      %v1296 = vpop.f32.mrb[0].mxu0
      %v1297 = vadd.f32 %v1156, %v1296
      %v1298 = vpop.f32.mrb[0].mxu0
      %v1299 = vadd.f32 %v1158, %v1298
      %v1300 = vpop.f32.mrb[0].mxu0
      %v1301 = vadd.f32 %v1160, %v1300
      %1302 = vmatprep.mubr.bf16.mxu0 %v1069
      %1303 = vmatmul.mubr.bf16.gmra.mrb[0].mxu0 %v996
      %v1304 = vpop.f32.mrb[0].mxu0
      %v1305 = vadd.f32 %v1164, %v1304
      %v1306 = vpop.f32.mrb[0].mxu0
      %v1307 = vadd.f32 %v1166, %v1306
      %v1308 = vpop.f32.mrb[0].mxu0
      %v1309 = vadd.f32 %v1168, %v1308
      %v1310 = vpop.f32.mrb[0].mxu0
      %v1311 = vadd.f32 %v1170, %v1310
      %1312 = vmatprep.mubr.bf16.mxu0 %v1072
      %1313 = vmatmul.mubr.bf16.gmra.mrb[0].mxu0 %v1000
      %v1314 = vpop.f32.mrb[0].mxu0
      %v1315 = vadd.f32 %v1174, %v1314
      %v1316 = vpop.f32.mrb[0].mxu0
      %v1317 = vadd.f32 %v1176, %v1316
      %v1318 = vpop.f32.mrb[0].mxu0
      %v1319 = vadd.f32 %v1178, %v1318
      %v1320 = vpop.f32.mrb[0].mxu0
      %v1321 = vadd.f32 %v1180, %v1320
      %1322 = vmatprep.mubr.bf16.mxu0 %v1075
      %1323 = vmatmul.mubr.bf16.gmra.mrb[0].mxu0 %v1004
      %v1324 = vpop.f32.mrb[0].mxu0
      %v1325 = vadd.f32 %v1184, %v1324
      %v1326 = vpop.f32.mrb[0].mxu0
      %v1327 = vadd.f32 %v1186, %v1326
      %v1328 = vpop.f32.mrb[0].mxu0
      %v1329 = vadd.f32 %v1188, %v1328
      %v1330 = vpop.f32.mrb[0].mxu0
      %v1331 = vadd.f32 %v1190, %v1330
      %1332 = vmatprep.mubr.bf16.mxu0 %v1078
      %1333 = vmatmul.mubr.bf16.gmra.mrb[0].mxu0 %v1008
      %v1334 = vpop.f32.mrb[0].mxu0
      %v1335 = vadd.f32 %v1194, %v1334
      %v1336 = vpop.f32.mrb[0].mxu0
      %v1337 = vadd.f32 %v1196, %v1336
      %v1338 = vpop.f32.mrb[0].mxu0
      %v1339 = vadd.f32 %v1198, %v1338
      %v1340 = vpop.f32.mrb[0].mxu0
      %v1341 = vadd.f32 %v1200, %v1340
      %1342 = vmatprep.mubr.bf16.mxu0 %v1081
      %1343 = vmatmul.mubr.bf16.gmra.mrb[0].mxu0 %v1012
      %v1344 = vpop.f32.mrb[0].mxu0
      %v1345 = vadd.f32 %v1204, %v1344
      %v1346 = vpop.f32.mrb[0].mxu0
      %v1347 = vadd.f32 %v1206, %v1346
      %v1348 = vpop.f32.mrb[0].mxu0
      %v1349 = vadd.f32 %v1208, %v1348
      %v1350 = vpop.f32.mrb[0].mxu0
      %v1351 = vadd.f32 %v1210, %v1350
      %1352 = vmatprep.mubr.bf16.mxu0 %v1084
      %1353 = vmatmul.mubr.bf16.gmra.mrb[0].mxu0 %v1016
      %v1354 = vpop.f32.mrb[0].mxu0
      %v1355 = vadd.f32 %v1214, %v1354
      %v1356 = vpop.f32.mrb[0].mxu0
      %v1357 = vadd.f32 %v1216, %v1356
      %v1358 = vpop.f32.mrb[0].mxu0
      %v1359 = vadd.f32 %v1218, %v1358
      %v1360 = vpop.f32.mrb[0].mxu0
      %v1361 = vadd.f32 %v1220, %v1360
      %1362 = vmatprep.mubr.bf16.mxu0 %v1087
      %1363 = vmatmul.mubr.bf16.gmra.mrb[0].mxu0 %v1020
      %v1364 = vpop.f32.mrb[0].mxu0
      %v1365 = vadd.f32 %v1224, %v1364
      %v1366 = vpop.f32.mrb[0].mxu0
      %v1367 = vadd.f32 %v1226, %v1366
      %v1368 = vpop.f32.mrb[0].mxu0
      %v1369 = vpop.f32.mrb[0].mxu0
      %1370 = vdwg.mxu0
      %v1371 = vmax.f32 %v1265, 0.0
      %v1372 = vmax.f32 %v1267, 0.0
      %v1373 = vmax.f32 %v1269, 0.0
      %v1374 = vmax.f32 %v1271, 0.0
      %v1375 = vmax.f32 %v1275, 0.0
      %v1376 = vmax.f32 %v1277, 0.0
      %v1377 = vmax.f32 %v1279, 0.0
      %v1378 = vmax.f32 %v1281, 0.0
      %v1379 = vmax.f32 %v1285, 0.0
      %v1380 = vmax.f32 %v1287, 0.0
      %v1381 = vmax.f32 %v1289, 0.0
      %v1382 = vmax.f32 %v1291, 0.0
      %v1383 = vmax.f32 %v1295, 0.0
      %v1384 = vmax.f32 %v1297, 0.0
      %v1385 = vmax.f32 %v1299, 0.0
      %v1386 = vmax.f32 %v1301, 0.0
      %v1387 = vmax.f32 %v1305, 0.0
      %v1388 = vmax.f32 %v1307, 0.0
      %v1389 = vmax.f32 %v1309, 0.0
      %v1390 = vmax.f32 %v1311, 0.0
      %v1391 = vmax.f32 %v1315, 0.0
      %v1392 = vmax.f32 %v1317, 0.0
      %v1393 = vmax.f32 %v1319, 0.0
      %v1394 = vmax.f32 %v1321, 0.0
      %v1395 = vmax.f32 %v1325, 0.0
      %v1396 = vmax.f32 %v1327, 0.0
      %v1397 = vmax.f32 %v1329, 0.0
      %v1398 = vmax.f32 %v1331, 0.0
      %v1399 = vmax.f32 %v1335, 0.0
      %v1400 = vmax.f32 %v1337, 0.0
      %v1401 = vmax.f32 %v1339, 0.0
      %v1402 = vmax.f32 %v1341, 0.0
      %v1403 = vmax.f32 %v1345, 0.0
      %v1404 = vmax.f32 %v1347, 0.0
      %v1405 = vmax.f32 %v1349, 0.0
      %v1406 = vmax.f32 %v1351, 0.0
      %v1407 = vmax.f32 %v1355, 0.0
      %v1408 = vmax.f32 %v1357, 0.0
      %v1409 = vmax.f32 %v1359, 0.0
      %v1410 = vmax.f32 %v1361, 0.0
      %v1411 = vmax.f32 %v1365, 0.0
      %v1412 = vmax.f32 %v1367, 0.0
      %vm1455 = vcmask 1046528
      %v1456 = vrot.slane %v1371, 1
      %v1457 = vrot.slane %v1373, 1
      %v1458 = vsel %vm1455, %v1456, %v1457
      %v1459 = vrot.slane %v1372, 1
      %v1460 = vrot.slane %v1374, 1
      %v1461 = vsel %vm1455, %v1459, %v1460
      %v1462 = vrot.slane %v1375, 1
      %v1463 = vsel %vm1455, %v1457, %v1462
      %v1464 = vrot.slane %v1376, 1
      %v1465 = vsel %vm1455, %v1460, %v1464
      %v1466 = vrot.slane %v1377, 1
      %v1467 = vsel %vm1455, %v1462, %v1466
      %v1468 = vrot.slane %v1378, 1
      %v1469 = vsel %vm1455, %v1464, %v1468
      %v1470 = vrot.slane %v1379, 1
      %v1471 = vsel %vm1455, %v1466, %v1470
      %v1472 = vrot.slane %v1380, 1
      %v1473 = vsel %vm1455, %v1468, %v1472
      %v1474 = vrot.slane %v1381, 1
      %v1475 = vsel %vm1455, %v1470, %v1474
      %v1476 = vrot.slane %v1382, 1
      %v1477 = vsel %vm1455, %v1472, %v1476
      %v1478 = vrot.slane %v1383, 1
      %v1479 = vsel %vm1455, %v1474, %v1478
      %v1480 = vrot.slane %v1384, 1
      %v1481 = vsel %vm1455, %v1476, %v1480
      %v1482 = vrot.slane %v1385, 1
      %v1483 = vsel %vm1455, %v1478, %v1482
      %v1484 = vrot.slane %v1386, 1
      %v1485 = vsel %vm1455, %v1480, %v1484
      %v1486 = vrot.slane %v1387, 1
      %v1487 = vsel %vm1455, %v1482, %v1486
      %v1488 = vrot.slane %v1388, 1
      %v1489 = vsel %vm1455, %v1484, %v1488
      %v1490 = vrot.slane %v1389, 1
      %v1491 = vsel %vm1455, %v1486, %v1490
      %v1492 = vrot.slane %v1390, 1
      %v1493 = vsel %vm1455, %v1488, %v1492
      %v1494 = vrot.slane %v1391, 1
      %v1495 = vsel %vm1455, %v1490, %v1494
      %v1496 = vrot.slane %v1392, 1
      %v1497 = vsel %vm1455, %v1492, %v1496
      %v1498 = vrot.slane %v1393, 1
      %v1499 = vsel %vm1455, %v1494, %v1498
      %v1500 = vrot.slane %v1394, 1
      %v1501 = vsel %vm1455, %v1496, %v1500
      %v1502 = vrot.slane %v1395, 1
      %v1503 = vsel %vm1455, %v1498, %v1502
      %v1504 = vrot.slane %v1396, 1
      %v1505 = vsel %vm1455, %v1500, %v1504
      %v1506 = vrot.slane %v1397, 1
      %v1507 = vsel %vm1455, %v1502, %v1506
      %v1508 = vrot.slane %v1398, 1
      %v1509 = vsel %vm1455, %v1504, %v1508
      %v1510 = vrot.slane %v1399, 1
      %v1511 = vsel %vm1455, %v1506, %v1510
      %v1512 = vrot.slane %v1400, 1
      %v1513 = vsel %vm1455, %v1508, %v1512
      %v1514 = vrot.slane %v1401, 1
      %v1515 = vsel %vm1455, %v1510, %v1514
      %v1516 = vrot.slane %v1402, 1
      %v1517 = vsel %vm1455, %v1512, %v1516
      %v1518 = vrot.slane %v1403, 1
      %v1519 = vsel %vm1455, %v1514, %v1518
      %v1520 = vrot.slane %v1404, 1
      %v1521 = vsel %vm1455, %v1516, %v1520
      %v1522 = vrot.slane %v1405, 1
      %v1523 = vsel %vm1455, %v1518, %v1522
      %v1524 = vrot.slane %v1406, 1
      %v1525 = vsel %vm1455, %v1520, %v1524
      %v1526 = vrot.slane %v1407, 1
      %v1527 = vsel %vm1455, %v1522, %v1526
      %v1528 = vrot.slane %v1408, 1
      %v1529 = vsel %vm1455, %v1524, %v1528
      %v1530 = vrot.slane %v1409, 1
      %v1531 = vsel %vm1455, %v1526, %v1530
      %v1532 = vrot.slane %v1410, 1
      %v1533 = vsel %vm1455, %v1528, %v1532
      %v1534 = vrot.slane %v1411, 1
      %v1535 = vsel %vm1455, %v1530, %v1534
      %v1536 = vrot.slane %v1412, 1
      %v1537 = vsel %vm1455, %v1532, %v1536
      %v1580 = vmax.f32 %v1371, %v1458
      %v1581 = vmax.f32 %v1372, %v1461
      %v1582 = vmax.f32 %v1373, %v1463
      %v1583 = vmax.f32 %v1374, %v1465
      %v1584 = vmax.f32 %v1375, %v1467
      %v1585 = vmax.f32 %v1376, %v1469
      %v1586 = vmax.f32 %v1377, %v1471
      %v1587 = vmax.f32 %v1378, %v1473
      %v1588 = vmax.f32 %v1379, %v1475
      %v1589 = vmax.f32 %v1380, %v1477
      %v1590 = vmax.f32 %v1381, %v1479
      %v1591 = vmax.f32 %v1382, %v1481
      %v1592 = vmax.f32 %v1383, %v1483
      %v1593 = vmax.f32 %v1384, %v1485
      %v1594 = vmax.f32 %v1385, %v1487
      %v1595 = vmax.f32 %v1386, %v1489
      %v1596 = vmax.f32 %v1387, %v1491
      %v1597 = vmax.f32 %v1388, %v1493
      %v1598 = vmax.f32 %v1389, %v1495
      %v1599 = vmax.f32 %v1390, %v1497
      %v1600 = vmax.f32 %v1391, %v1499
      %v1601 = vmax.f32 %v1392, %v1501
      %v1602 = vmax.f32 %v1393, %v1503
      %v1603 = vmax.f32 %v1394, %v1505
      %v1604 = vmax.f32 %v1395, %v1507
      %v1605 = vmax.f32 %v1396, %v1509
      %v1606 = vmax.f32 %v1397, %v1511
      %v1607 = vmax.f32 %v1398, %v1513
      %v1608 = vmax.f32 %v1399, %v1515
      %v1609 = vmax.f32 %v1400, %v1517
      %v1610 = vmax.f32 %v1401, %v1519
      %v1611 = vmax.f32 %v1402, %v1521
      %v1612 = vmax.f32 %v1403, %v1523
      %v1613 = vmax.f32 %v1404, %v1525
      %v1614 = vmax.f32 %v1405, %v1527
      %v1615 = vmax.f32 %v1406, %v1529
      %v1616 = vmax.f32 %v1407, %v1531
      %v1617 = vmax.f32 %v1408, %v1533
      %v1618 = vmax.f32 %v1409, %v1535
      %v1619 = vmax.f32 %v1410, %v1537
      %v1620 = vmax.f32 %v1411, %v1534
      %v1621 = vmax.f32 %v1412, %v1536
      %v1622 = vld [vmem:[%s3] sm:$0xff]
      %v1623 = vld [vmem:[%s3 + $0x8] sm:$0xff]
      %v1624 = vld [vmem:[%s3 + $0x10] sm:$0xff]
      %v1625 = vld [vmem:[%s3 + $0x18] sm:$0xff]
      %v1626 = vld [vmem:[%s3 + $0x20] sm:$0xff]
      %v1627 = vld [vmem:[%s3 + $0x28] sm:$0xff]
      %v1628 = vld [vmem:[%s3 + $0x30] sm:$0xff]
      %v1629 = vld [vmem:[%s3 + $0x38] sm:$0xff]
      %v1630 = vld [vmem:[%s3 + $0x40] sm:$0xff]
      %v1631 = vld [vmem:[%s3 + $0x48] sm:$0xff]
      %v1632 = vld [vmem:[%s3 + $0x50] sm:$0x33]
      %v1633 = vpack.c.bf16 %v1582, %v1580
      %v1634 = vpack.c.bf16 %v1583, %v1581
      %v1635 = vpack.c.bf16 %v1586, %v1584
      %v1636 = vpack.c.bf16 %v1587, %v1585
      %v1637 = vpack.c.bf16 %v1590, %v1588
      %v1638 = vpack.c.bf16 %v1591, %v1589
      %v1639 = vpack.c.bf16 %v1594, %v1592
      %v1640 = vpack.c.bf16 %v1595, %v1593
      %v1641 = vpack.c.bf16 %v1598, %v1596
      %v1642 = vpack.c.bf16 %v1599, %v1597
      %v1643 = vpack.c.bf16 %v1602, %v1600
      %v1644 = vpack.c.bf16 %v1603, %v1601
      %v1645 = vpack.c.bf16 %v1606, %v1604
      %v1646 = vpack.c.bf16 %v1607, %v1605
      %v1647 = vpack.c.bf16 %v1610, %v1608
      %v1648 = vpack.c.bf16 %v1611, %v1609
      %v1649 = vpack.c.bf16 %v1614, %v1612
      %v1650 = vpack.c.bf16 %v1615, %v1613
      %v1651 = vpack.c.bf16 %v1618, %v1616
      %v1652 = vpack.c.bf16 %v1619, %v1617
      %v1653 = vpack.c.bf16 %v1620, %v1620
      %v1654 = vpack.c.bf16 %v1621, %v1621
      %v1666 = vunpack.c.l.b16 %v1622
      %v1667 = vunpack.c.h.b16 %v1622
      %v1668 = vunpack.c.l.b16 %v1623
      %v1669 = vunpack.c.h.b16 %v1623
      %v1670 = vunpack.c.l.b16 %v1624
      %v1671 = vunpack.c.h.b16 %v1624
      %v1672 = vunpack.c.l.b16 %v1625
      %v1673 = vunpack.c.h.b16 %v1625
      %v1674 = vunpack.c.l.b16 %v1626
      %v1675 = vunpack.c.h.b16 %v1626
      %v1676 = vunpack.c.l.b16 %v1627
      %v1677 = vunpack.c.h.b16 %v1627
      %v1678 = vunpack.c.l.b16 %v1628
      %v1679 = vunpack.c.h.b16 %v1628
      %v1680 = vunpack.c.l.b16 %v1629
      %v1681 = vunpack.c.h.b16 %v1629
      %v1682 = vunpack.c.l.b16 %v1630
      %v1683 = vunpack.c.h.b16 %v1630
      %v1684 = vunpack.c.l.b16 %v1631
      %v1685 = vunpack.c.h.b16 %v1631
      %v1686 = vunpack.c.l.b16 %v1632
      %v1687 = vunpack.c.h.b16 %v1632
      %v1688 = vpack.c.b16 %v1668, %v1666
      %v1689 = vpack.c.b16 %v1669, %v1667
      %v1690 = vpack.c.b16 %v1672, %v1670
      %v1691 = vpack.c.b16 %v1673, %v1671
      %v1692 = vpack.c.b16 %v1676, %v1674
      %v1693 = vpack.c.b16 %v1677, %v1675
      %v1694 = vpack.c.b16 %v1680, %v1678
      %v1695 = vpack.c.b16 %v1681, %v1679
      %v1696 = vpack.c.b16 %v1684, %v1682
      %v1697 = vpack.c.b16 %v1685, %v1683
      %v1698 = vpack.c.b16 %v1686, %v1686
      %v1699 = vpack.c.b16 %v1687, %v1687
      %vm1706 = vcmask 318464
      %v1708 = vsel %vm1706, %v1689, 0
      %v1711 = vsel %vm1706, %v1691, 0
      %v1714 = vsel %vm1706, %v1693, 0
      %v1717 = vsel %vm1706, %v1695, 0
      %v1720 = vsel %vm1706, %v1697, 0
      %v1723 = vsel %vm1706, %v1699, 0
      %vm1725 = vcmask 1042432
      %vm1726 = vcmask 1043456
      %v1727 = vsel %vm1725, 4294967295, 65535
      %v1728 = vsel %vm1726, %v1727, 0
      %v1730 = vand.u32 %v1653, %v1728
      %v1733 = vand.u32 %v1654, %v1728
      %1735 = vmatprep.subr.bf16.mxu0 %v1634
      %1736 = vmatpush1.bf16.msra.mxu0 %v1633
      %1737 = vmatprep.subr.bf16.mxu0 %v1636
      %1738 = vmatpush1.bf16.msra.mxu0 %v1635
      %1739 = vmatprep.subr.bf16.mxu0 %v1638
      %1740 = vmatpush1.bf16.msra.mxu0 %v1637
      %1741 = vmatprep.subr.bf16.mxu0 %v1640
      %1742 = vmatpush1.bf16.msra.mxu0 %v1639
      %1743 = vmatprep.subr.bf16.mxu0 %v1642
      %1744 = vmatpush1.bf16.msra.mxu0 %v1641
      %1745 = vmatprep.subr.bf16.mxu0 %v1644
      %1746 = vmatpush1.bf16.msra.mxu0 %v1643
      %1747 = vmatprep.subr.bf16.mxu0 %v1646
      %1748 = vmatpush1.bf16.msra.mxu0 %v1645
      %1749 = vmatprep.subr.bf16.mxu0 %v1648
      %1750 = vmatpush1.bf16.msra.mxu0 %v1647
      %1751 = vmatprep.subr.bf16.mxu0 %v1650
      %1752 = vmatpush1.bf16.msra.mxu0 %v1649
      %1753 = vmatprep.subr.bf16.mxu0 %v1652
      %1754 = vmatpush1.bf16.msra.mxu0 %v1651
      %1755 = vmatprep.subr.bf16.mxu0 %v1733
      %1756 = vmatpush1.bf16.msra.mxu0 %v1730
      %1757 = vmatprep.subr.bf16.mxu0 0
      %1758 = vmatpush1.bf16.msra.mxu0 0
      %1759 = vmatprep.subr.bf16.mxu0 0
      %1760 = vmatpush1.bf16.msra.mxu0 0
      %1761 = vmatprep.subr.bf16.mxu0 0
      %1762 = vmatpush1.bf16.msra.mxu0 0
      %1763 = vmatprep.subr.bf16.mxu0 0
      %1764 = vmatpush1.bf16.msra.mxu0 0
      %1765 = vmatprep.subr.bf16.mxu0 0
      %1766 = vmatpush1.bf16.msra.mxu0 0
      %1767 = vmatprep.mubr.bf16.mxu0 %v1708
      %1768 = vmatmul.mubr.bf16.gmra.mrb[0].mxu0 %v1688
      %v1769 = vpop.f32.mrb[0].mxu0
      %v1770 = vadd.f32 0.0, %v1769
      %v1771 = vpop.f32.mrb[0].mxu0
      %v1772 = vadd.f32 0.0, %v1771
      %v1773 = vpop.f32.mrb[0].mxu0
      %v1774 = vadd.f32 0.0, %v1773
      %v1775 = vpop.f32.mrb[0].mxu0
      %v1776 = vadd.f32 0.0, %v1775
      %1777 = vmatprep.mubr.bf16.mxu0 %v1711
      %1778 = vmatmul.mubr.bf16.gmra.mrb[0].mxu0 %v1690
      %v1779 = vpop.f32.mrb[0].mxu0
      %v1780 = vadd.f32 0.0, %v1779
      %v1781 = vpop.f32.mrb[0].mxu0
      %v1782 = vadd.f32 0.0, %v1781
      %v1783 = vpop.f32.mrb[0].mxu0
      %v1784 = vadd.f32 0.0, %v1783
      %v1785 = vpop.f32.mrb[0].mxu0
      %v1786 = vadd.f32 0.0, %v1785
      %1787 = vmatprep.mubr.bf16.mxu0 %v1714
      %1788 = vmatmul.mubr.bf16.gmra.mrb[0].mxu0 %v1692
      %v1789 = vpop.f32.mrb[0].mxu0
      %v1790 = vadd.f32 0.0, %v1789
      %v1791 = vpop.f32.mrb[0].mxu0
      %v1792 = vadd.f32 0.0, %v1791
      %v1793 = vpop.f32.mrb[0].mxu0
      %v1794 = vadd.f32 0.0, %v1793
      %v1795 = vpop.f32.mrb[0].mxu0
      %v1796 = vadd.f32 0.0, %v1795
      %1797 = vmatprep.mubr.bf16.mxu0 %v1717
      %1798 = vmatmul.mubr.bf16.gmra.mrb[0].mxu0 %v1694
      %v1799 = vpop.f32.mrb[0].mxu0
      %v1800 = vadd.f32 0.0, %v1799
      %v1801 = vpop.f32.mrb[0].mxu0
      %v1802 = vadd.f32 0.0, %v1801
      %v1803 = vpop.f32.mrb[0].mxu0
      %v1804 = vadd.f32 0.0, %v1803
      %v1805 = vpop.f32.mrb[0].mxu0
      %v1806 = vadd.f32 0.0, %v1805
      %1807 = vmatprep.mubr.bf16.mxu0 %v1720
      %1808 = vmatmul.mubr.bf16.gmra.mrb[0].mxu0 %v1696
      %v1809 = vpop.f32.mrb[0].mxu0
      %v1810 = vadd.f32 0.0, %v1809
      %v1811 = vpop.f32.mrb[0].mxu0
      %v1812 = vadd.f32 0.0, %v1811
      %v1813 = vpop.f32.mrb[0].mxu0
      %v1814 = vadd.f32 0.0, %v1813
      %v1815 = vpop.f32.mrb[0].mxu0
      %v1816 = vadd.f32 0.0, %v1815
      %1817 = vmatprep.mubr.bf16.mxu0 %v1723
      %1818 = vmatmul.mubr.bf16.gmra.mrb[0].mxu0 %v1698
      %v1819 = vpop.f32.mrb[0].mxu0
      %v1820 = vadd.f32 0.0, %v1819
      %v1821 = vpop.f32.mrb[0].mxu0
      %v1822 = vadd.f32 0.0, %v1821
      %v1823 = vpop.f32.mrb[0].mxu0
      %v1824 = vpop.f32.mrb[0].mxu0
      %1825 = vdwg.mxu0
      %1848 = vrot.lane.b32.xlu0 %v1770, 127
      %v1849 = vpop.permute.xlu0 %1848
      %1850 = vrot.lane.b32.xlu0 %v1772, 127
      %v1851 = vpop.permute.xlu0 %1850
      %1852 = vrot.lane.b32.xlu0 %v1774, 127
      %v1853 = vpop.permute.xlu0 %1852
      %1854 = vrot.lane.b32.xlu0 %v1776, 127
      %v1855 = vpop.permute.xlu0 %1854
      %1856 = vrot.lane.b32.xlu0 %v1780, 127
      %v1857 = vpop.permute.xlu0 %1856
      %1858 = vrot.lane.b32.xlu0 %v1782, 127
      %v1859 = vpop.permute.xlu0 %1858
      %1860 = vrot.lane.b32.xlu0 %v1784, 127
      %v1861 = vpop.permute.xlu0 %1860
      %1862 = vrot.lane.b32.xlu0 %v1786, 127
      %v1863 = vpop.permute.xlu0 %1862
      %1864 = vrot.lane.b32.xlu0 %v1790, 127
      %v1865 = vpop.permute.xlu0 %1864
      %1866 = vrot.lane.b32.xlu0 %v1792, 127
      %v1867 = vpop.permute.xlu0 %1866
      %1868 = vrot.lane.b32.xlu0 %v1794, 127
      %v1869 = vpop.permute.xlu0 %1868
      %1870 = vrot.lane.b32.xlu0 %v1796, 127
      %v1871 = vpop.permute.xlu0 %1870
      %1872 = vrot.lane.b32.xlu0 %v1800, 127
      %v1873 = vpop.permute.xlu0 %1872
      %1874 = vrot.lane.b32.xlu0 %v1802, 127
      %v1875 = vpop.permute.xlu0 %1874
      %1876 = vrot.lane.b32.xlu0 %v1804, 127
      %v1877 = vpop.permute.xlu0 %1876
      %1878 = vrot.lane.b32.xlu0 %v1806, 127
      %v1879 = vpop.permute.xlu0 %1878
      %1880 = vrot.lane.b32.xlu0 %v1810, 127
      %v1881 = vpop.permute.xlu0 %1880
      %1882 = vrot.lane.b32.xlu0 %v1812, 127
      %v1883 = vpop.permute.xlu0 %1882
      %1884 = vrot.lane.b32.xlu0 %v1814, 127
      %v1885 = vpop.permute.xlu0 %1884
      %1886 = vrot.lane.b32.xlu0 %v1816, 127
      %v1887 = vpop.permute.xlu0 %1886
      %1888 = vrot.lane.b32.xlu0 %v1820, 127
      %v1889 = vpop.permute.xlu0 %1888
      %1890 = vrot.lane.b32.xlu0 %v1822, 127
      %v1891 = vpop.permute.xlu0 %1890
      %vm1892 = vcmask 1039360
      %v1893 = vsel %vm1892, %v1849, %v1851
      %v1894 = vsel %vm1892, %v1853, %v1855
      %v1895 = vsel %vm1892, %v1857, %v1859
      %v1896 = vsel %vm1892, %v1861, %v1863
      %v1897 = vsel %vm1892, %v1865, %v1867
      %v1898 = vsel %vm1892, %v1869, %v1871
      %v1899 = vsel %vm1892, %v1873, %v1875
      %v1900 = vsel %vm1892, %v1877, %v1879
      %v1901 = vsel %vm1892, %v1881, %v1883
      %v1902 = vsel %vm1892, %v1885, %v1887
      %v1903 = vsel %vm1892, %v1889, %v1891
      %v1926 = vmax.f32 %v1770, %v1893
      %v1927 = vmax.f32 %v1772, %v1851
      %v1928 = vmax.f32 %v1774, %v1894
      %v1929 = vmax.f32 %v1776, %v1855
      %v1930 = vmax.f32 %v1780, %v1895
      %v1931 = vmax.f32 %v1782, %v1859
      %v1932 = vmax.f32 %v1784, %v1896
      %v1933 = vmax.f32 %v1786, %v1863
      %v1934 = vmax.f32 %v1790, %v1897
      %v1935 = vmax.f32 %v1792, %v1867
      %v1936 = vmax.f32 %v1794, %v1898
      %v1937 = vmax.f32 %v1796, %v1871
      %v1938 = vmax.f32 %v1800, %v1899
      %v1939 = vmax.f32 %v1802, %v1875
      %v1940 = vmax.f32 %v1804, %v1900
      %v1941 = vmax.f32 %v1806, %v1879
      %v1942 = vmax.f32 %v1810, %v1901
      %v1943 = vmax.f32 %v1812, %v1883
      %v1944 = vmax.f32 %v1814, %v1902
      %v1945 = vmax.f32 %v1816, %v1887
      %v1946 = vmax.f32 %v1820, %v1903
      %v1947 = vmax.f32 %v1822, %v1891
      %v1948 = vpack.c.bf16 %v1928, %v1926
      %v1949 = vpack.c.bf16 %v1929, %v1927
      %v1950 = vpack.c.bf16 %v1932, %v1930
      %v1951 = vpack.c.bf16 %v1933, %v1931
      %v1952 = vpack.c.bf16 %v1936, %v1934
      %v1953 = vpack.c.bf16 %v1937, %v1935
      %v1954 = vpack.c.bf16 %v1940, %v1938
      %v1955 = vpack.c.bf16 %v1941, %v1939
      %v1956 = vpack.c.bf16 %v1944, %v1942
      %v1957 = vpack.c.bf16 %v1945, %v1943
      %v1958 = vpack.c.bf16 %v1946, %v1946
      %v1959 = vpack.c.bf16 %v1947, %v1947
      %v1960 = vld [vmem:[%s4] sm:$0xf]
      %v1961 = vld [vmem:[%s4 + $0x4] sm:$0xf]
      %v1962 = vld [vmem:[%s4 + $0x8] sm:$0xf]
      %v1963 = vld [vmem:[%s4 + $0xc] sm:$0xf]
      %v1964 = vld [vmem:[%s4 + $0x10] sm:$0xf]
      %v1965 = vld [vmem:[%s4 + $0x14] sm:$0xf]
      %v1966 = vld [vmem:[%s4 + $0x18] sm:$0xf]
      %v1967 = vld [vmem:[%s4 + $0x1c] sm:$0xf]
      %v1968 = vld [vmem:[%s4 + $0x20] sm:$0xf]
      %v1969 = vld [vmem:[%s4 + $0x24] sm:$0xf]
      %v1970 = vld [vmem:[%s4 + $0x28] sm:$0xf]
      %v1971 = vld [vmem:[%s4 + $0x2c] sm:$0xf]
      %v1972 = vld [vmem:[%s4 + $0x30] sm:$0xf]
      %v1973 = vld [vmem:[%s4 + $0x34] sm:$0xf]
      %v1974 = vld [vmem:[%s4 + $0x38] sm:$0xf]
      %v1975 = vld [vmem:[%s4 + $0x3c] sm:$0xf]
      %v1976 = vld [vmem:[%s4 + $0x40] sm:$0xf]
      %v1977 = vld [vmem:[%s4 + $0x44] sm:$0xf]
      %v1978 = vld [vmem:[%s4 + $0x48] sm:$0xf]
      %v1979 = vld [vmem:[%s4 + $0x4c] sm:$0xf]
      %v1980 = vld [vmem:[%s4 + $0x50] sm:$0xf]
      %v1981 = vld [vmem:[%s4 + $0x54] sm:$0xf]
      %v1982 = vld [vmem:[%s4 + $0x58] sm:$0xf]
      %v1983 = vld [vmem:[%s4 + $0x5c] sm:$0xf]
      %v1984 = vld [vmem:[%s4 + $0x60] sm:$0xf]
      %v1985 = vld [vmem:[%s4 + $0x64] sm:$0xf]
      %v1986 = vld [vmem:[%s4 + $0x68] sm:$0xf]
      %v1987 = vld [vmem:[%s4 + $0x6c] sm:$0x3]
      %v2016 = vunpack.c.l.b16 %v1960
      %v2017 = vunpack.c.l.b16 %v1961
      %v2018 = vunpack.c.l.b16 %v1962
      %v2019 = vunpack.c.l.b16 %v1963
      %v2020 = vunpack.c.l.b16 %v1964
      %v2021 = vunpack.c.l.b16 %v1965
      %v2022 = vunpack.c.l.b16 %v1966
      %v2023 = vunpack.c.l.b16 %v1967
      %v2024 = vunpack.c.l.b16 %v1968
      %v2025 = vunpack.c.l.b16 %v1969
      %v2026 = vunpack.c.l.b16 %v1970
      %v2027 = vunpack.c.l.b16 %v1971
      %v2028 = vunpack.c.l.b16 %v1972
      %v2029 = vunpack.c.l.b16 %v1973
      %v2030 = vunpack.c.l.b16 %v1974
      %v2031 = vunpack.c.l.b16 %v1975
      %v2032 = vunpack.c.l.b16 %v1976
      %v2033 = vunpack.c.l.b16 %v1977
      %v2034 = vunpack.c.l.b16 %v1978
      %v2035 = vunpack.c.l.b16 %v1979
      %v2036 = vunpack.c.l.b16 %v1980
      %v2037 = vunpack.c.l.b16 %v1981
      %v2038 = vunpack.c.l.b16 %v1982
      %v2039 = vunpack.c.l.b16 %v1983
      %v2040 = vunpack.c.l.b16 %v1984
      %v2041 = vunpack.c.l.b16 %v1985
      %v2042 = vunpack.c.l.b16 %v1986
      %v2043 = vunpack.c.l.b16 %v1987
      %v2044 = vpack.c.b16 %v2017, %v2016
      %v2045 = vpack.c.b16 %v2019, %v2018
      %v2046 = vpack.c.b16 %v2021, %v2020
      %v2047 = vpack.c.b16 %v2023, %v2022
      %v2048 = vpack.c.b16 %v2025, %v2024
      %v2049 = vpack.c.b16 %v2027, %v2026
      %v2050 = vpack.c.b16 %v2029, %v2028
      %v2051 = vpack.c.b16 %v2031, %v2030
      %v2052 = vpack.c.b16 %v2033, %v2032
      %v2053 = vpack.c.b16 %v2035, %v2034
      %v2054 = vpack.c.b16 %v2037, %v2036
      %v2055 = vpack.c.b16 %v2039, %v2038
      %v2056 = vpack.c.b16 %v2041, %v2040
      %v2057 = vpack.c.b16 %v2043, %v2042
      %vm2071 = vcmask 744448
      %v2073 = vsel %vm2071, %v1949, 0
      %v2076 = vsel %vm2071, %v1951, 0
      %v2079 = vsel %vm2071, %v1953, 0
      %v2082 = vsel %vm2071, %v1955, 0
      %v2085 = vsel %vm2071, %v1957, 0
      %v2088 = vsel %vm2071, %v1959, 0
      %vm2090 = vcmask 1044480
      %vm2091 = vcmask 1045504
      %v2092 = vsel %vm2090, 4294967295, 65535
      %v2093 = vsel %vm2091, %v2092, 0
      %v2095 = vand.u32 %v2057, %v2093
      %2097 = vmatprep.subr.bf16.mxu0 0
      %2098 = vmatpush1.bf16.msra.mxu0 %v2044
      %2099 = vmatprep.subr.bf16.mxu0 0
      %2100 = vmatpush1.bf16.msra.mxu0 %v2045
      %2101 = vmatprep.subr.bf16.mxu0 0
      %2102 = vmatpush1.bf16.msra.mxu0 %v2046
      %2103 = vmatprep.subr.bf16.mxu0 0
      %2104 = vmatpush1.bf16.msra.mxu0 %v2047
      %2105 = vmatprep.subr.bf16.mxu0 0
      %2106 = vmatpush1.bf16.msra.mxu0 %v2048
      %2107 = vmatprep.subr.bf16.mxu0 0
      %2108 = vmatpush1.bf16.msra.mxu0 %v2049
      %2109 = vmatprep.subr.bf16.mxu0 0
      %2110 = vmatpush1.bf16.msra.mxu0 %v2050
      %2111 = vmatprep.subr.bf16.mxu0 0
      %2112 = vmatpush1.bf16.msra.mxu0 %v2051
      %2113 = vmatprep.subr.bf16.mxu0 0
      %2114 = vmatpush1.bf16.msra.mxu0 %v2052
      %2115 = vmatprep.subr.bf16.mxu0 0
      %2116 = vmatpush1.bf16.msra.mxu0 %v2053
      %2117 = vmatprep.subr.bf16.mxu0 0
      %2118 = vmatpush1.bf16.msra.mxu0 %v2054
      %2119 = vmatprep.subr.bf16.mxu0 0
      %2120 = vmatpush1.bf16.msra.mxu0 %v2055
      %2121 = vmatprep.subr.bf16.mxu0 0
      %2122 = vmatpush1.bf16.msra.mxu0 %v2056
      %2123 = vmatprep.subr.bf16.mxu0 0
      %2124 = vmatpush1.bf16.msra.mxu0 %v2095
      %2125 = vmatprep.subr.bf16.mxu0 0
      %2126 = vmatpush1.bf16.msra.mxu0 0
      %2127 = vmatprep.subr.bf16.mxu0 0
      %2128 = vmatpush1.bf16.msra.mxu0 0
      %2129 = vmatprep.mubr.bf16.mxu0 %v2073
      %2130 = vmatmul.mubr.bf16.gmra.mrb[0].mxu0 %v1948
      %v2131 = vpop.f32.mrb[0].mxu0
      %v2132 = vadd.f32 0.0, %v2131
      %v2133 = vpop.f32.mrb[0].mxu0
      %v2134 = vpop.f32.mrb[0].mxu0
      %v2135 = vadd.f32 0.0, %v2134
      %v2136 = vpop.f32.mrb[0].mxu0
      %2137 = vmatprep.mubr.bf16.mxu0 %v2076
      %2138 = vmatmul.mubr.bf16.gmra.mrb[0].mxu0 %v1950
      %v2139 = vpop.f32.mrb[0].mxu0
      %v2140 = vadd.f32 0.0, %v2139
      %v2141 = vpop.f32.mrb[0].mxu0
      %v2142 = vpop.f32.mrb[0].mxu0
      %v2143 = vadd.f32 0.0, %v2142
      %v2144 = vpop.f32.mrb[0].mxu0
      %2145 = vmatprep.mubr.bf16.mxu0 %v2079
      %2146 = vmatmul.mubr.bf16.gmra.mrb[0].mxu0 %v1952
      %v2147 = vpop.f32.mrb[0].mxu0
      %v2148 = vadd.f32 0.0, %v2147
      %v2149 = vpop.f32.mrb[0].mxu0
      %v2150 = vpop.f32.mrb[0].mxu0
      %v2151 = vadd.f32 0.0, %v2150
      %v2152 = vpop.f32.mrb[0].mxu0
      %2153 = vmatprep.mubr.bf16.mxu0 %v2082
      %2154 = vmatmul.mubr.bf16.gmra.mrb[0].mxu0 %v1954
      %v2155 = vpop.f32.mrb[0].mxu0
      %v2156 = vadd.f32 0.0, %v2155
      %v2157 = vpop.f32.mrb[0].mxu0
      %v2158 = vpop.f32.mrb[0].mxu0
      %v2159 = vadd.f32 0.0, %v2158
      %v2160 = vpop.f32.mrb[0].mxu0
      %2161 = vmatprep.mubr.bf16.mxu0 %v2085
      %2162 = vmatmul.mubr.bf16.gmra.mrb[0].mxu0 %v1956
      %v2163 = vpop.f32.mrb[0].mxu0
      %v2164 = vadd.f32 0.0, %v2163
      %v2165 = vpop.f32.mrb[0].mxu0
      %v2166 = vpop.f32.mrb[0].mxu0
      %v2167 = vadd.f32 0.0, %v2166
      %v2168 = vpop.f32.mrb[0].mxu0
      %2169 = vmatprep.mubr.bf16.mxu0 %v2088
      %2170 = vmatmul.mubr.bf16.gmra.mrb[0].mxu0 %v1958
      %v2171 = vpop.f32.mrb[0].mxu0
      %v2172 = vadd.f32 0.0, %v2171
      %v2173 = vpop.f32.mrb[0].mxu0
      %v2174 = vpop.f32.mrb[0].mxu0
      %v2175 = vpop.f32.mrb[0].mxu0
      %2176 = vdwg.mxu0
      %v2177 = vpack.c.bf16 %v2135, %v2132
      %v2178 = vpack.c.bf16 %v2143, %v2140
      %v2179 = vpack.c.bf16 %v2151, %v2148
      %v2180 = vpack.c.bf16 %v2159, %v2156
      %v2181 = vpack.c.bf16 %v2167, %v2164
      %v2182 = vpack.c.bf16 %v2172, %v2172
      %vm2189 = vcmask 1041408
      %v2190 = vrot.slane %v2177, 6
      %v2191 = vrot.slane %v2178, 6
      %v2192 = vsel %vm2189, %v2190, %v2191
      %v2193 = vrot.slane %v2179, 6
      %v2194 = vsel %vm2189, %v2191, %v2193
      %v2195 = vrot.slane %v2180, 6
      %v2196 = vsel %vm2189, %v2193, %v2195
      %v2197 = vrot.slane %v2181, 6
      %v2198 = vsel %vm2189, %v2195, %v2197
      %v2199 = vrot.slane %v2182, 6
      %v2200 = vsel %vm2189, %v2197, %v2199
      %2201 = vrot.lane.b32.xlu0 %v2190, 127
      %v2202 = vpop.permute.xlu0 %2201
      %2203 = vrot.lane.b32.xlu0 %v2192, 127
      %v2204 = vpop.permute.xlu0 %2203
      %2205 = vrot.lane.b32.xlu0 %v2194, 127
      %v2206 = vpop.permute.xlu0 %2205
      %2207 = vrot.lane.b32.xlu0 %v2196, 127
      %v2208 = vpop.permute.xlu0 %2207
      %2209 = vrot.lane.b32.xlu0 %v2198, 127
      %v2210 = vpop.permute.xlu0 %2209
      %2211 = vrot.lane.b32.xlu0 %v2200, 127
      %v2212 = vpop.permute.xlu0 %2211
      %vm2217 = vcmask 1043456
      %v2218 = vrot.slane %v2177, 4
      %v2219 = vrot.slane %v2178, 4
      %v2220 = vsel %vm2217, %v2218, %v2219
      %v2221 = vrot.slane %v2179, 4
      %v2222 = vsel %vm2217, %v2219, %v2221
      %v2223 = vrot.slane %v2180, 4
      %v2224 = vsel %vm2217, %v2221, %v2223
      %v2225 = vrot.slane %v2181, 4
      %v2226 = vsel %vm2217, %v2223, %v2225
      %v2227 = vrot.slane %v2182, 4
      %v2228 = vsel %vm2217, %v2225, %v2227
      %2229 = vrot.lane.b32.xlu0 %v2218, 126
      %v2230 = vpop.permute.xlu0 %2229
      %2231 = vrot.lane.b32.xlu0 %v2220, 126
      %v2232 = vpop.permute.xlu0 %2231
      %2233 = vrot.lane.b32.xlu0 %v2222, 126
      %v2234 = vpop.permute.xlu0 %2233
      %2235 = vrot.lane.b32.xlu0 %v2224, 126
      %v2236 = vpop.permute.xlu0 %2235
      %2237 = vrot.lane.b32.xlu0 %v2226, 126
      %v2238 = vpop.permute.xlu0 %2237
      %2239 = vrot.lane.b32.xlu0 %v2228, 126
      %v2240 = vpop.permute.xlu0 %2239
      %vm2245 = vcmask 1045504
      %v2246 = vrot.slane %v2177, 2
      %v2247 = vrot.slane %v2178, 2
      %v2248 = vsel %vm2245, %v2246, %v2247
      %v2249 = vrot.slane %v2179, 2
      %v2250 = vsel %vm2245, %v2247, %v2249
      %v2251 = vrot.slane %v2180, 2
      %v2252 = vsel %vm2245, %v2249, %v2251
      %v2253 = vrot.slane %v2181, 2
      %v2254 = vsel %vm2245, %v2251, %v2253
      %v2255 = vrot.slane %v2182, 2
      %v2256 = vsel %vm2245, %v2253, %v2255
      %2257 = vrot.lane.b32.xlu0 %v2246, 125
      %v2258 = vpop.permute.xlu0 %2257
      %2259 = vrot.lane.b32.xlu0 %v2248, 125
      %v2260 = vpop.permute.xlu0 %2259
      %2261 = vrot.lane.b32.xlu0 %v2250, 125
      %v2262 = vpop.permute.xlu0 %2261
      %2263 = vrot.lane.b32.xlu0 %v2252, 125
      %v2264 = vpop.permute.xlu0 %2263
      %2265 = vrot.lane.b32.xlu0 %v2254, 125
      %v2266 = vpop.permute.xlu0 %2265
      %2267 = vrot.lane.b32.xlu0 %v2256, 125
      %v2268 = vpop.permute.xlu0 %2267
      %2274 = vrot.lane.b32.xlu0 %v2177, 124
      %v2275 = vpop.permute.xlu0 %2274
      %2276 = vrot.lane.b32.xlu0 %v2178, 124
      %v2277 = vpop.permute.xlu0 %2276
      %2278 = vrot.lane.b32.xlu0 %v2179, 124
      %v2279 = vpop.permute.xlu0 %2278
      %2280 = vrot.lane.b32.xlu0 %v2180, 124
      %v2281 = vpop.permute.xlu0 %2280
      %2282 = vrot.lane.b32.xlu0 %v2181, 124
      %v2283 = vpop.permute.xlu0 %2282
      %2284 = vrot.lane.b32.xlu0 %v2182, 124
      %v2285 = vpop.permute.xlu0 %2284
      %vm2291 = vcmask 1041408
      %v2294 = vsel %vm2291, %v2182, %v2202
      %v2298 = vsel %vm1726, %v2212, %v2230
      %v2302 = vsel %vm2091, %v2240, %v2258
      %v2304 = vld [vmem:[%s5] sm:$0xff]
      %v2305 = vld [vmem:[%s5 + $0x8] sm:$0xff]
      %v2306 = vld [vmem:[%s5 + $0x10] sm:$0xff]
      %v2307 = vld [vmem:[%s5 + $0x18] sm:$0xff]
      %v2308 = vld [vmem:[%s5 + $0x20] sm:$0xff]
      %v2309 = vld [vmem:[%s5 + $0x28] sm:$0xff]
      %v2310 = vld [vmem:[%s5 + $0x30] sm:$0xff]
      %v2311 = vld [vmem:[%s5 + $0x38] sm:$0xff]
      %v2312 = vld [vmem:[%s5 + $0x40] sm:$0xff]
      %v2313 = vld [vmem:[%s5 + $0x48] sm:$0xff]
      %v2314 = vld [vmem:[%s5 + $0x50] sm:$0xff]
      %v2315 = vld [vmem:[%s5 + $0x58] sm:$0xff]
      %v2316 = vld [vmem:[%s5 + $0x60] sm:$0xff]
      %v2317 = vld [vmem:[%s5 + $0x68] sm:$0xff]
      %v2318 = vld [vmem:[%s5 + $0x70] sm:$0xff]
      %v2319 = vld [vmem:[%s5 + $0x78] sm:$0xff]
      %v2320 = vld [vmem:[%s5 + $0x80] sm:$0xff]
      %v2321 = vld [vmem:[%s5 + $0x88] sm:$0xff]
      %v2322 = vld [vmem:[%s5 + $0x90] sm:$0xff]
      %v2323 = vld [vmem:[%s5 + $0x98] sm:$0xff]
      %v2324 = vld [vmem:[%s5 + $0xa0] sm:$0xff]
      %v2325 = vld [vmem:[%s5 + $0xa8] sm:$0xff]
      %v2326 = vld [vmem:[%s5 + $0xb0] sm:$0xff]
      %v2327 = vld [vmem:[%s5 + $0xb8] sm:$0xff]
      %v2328 = vld [vmem:[%s5 + $0xc0] sm:$0xff]
      %v2329 = vld [vmem:[%s5 + $0xc8] sm:$0xff]
      %v2330 = vld [vmem:[%s5 + $0xd0] sm:$0xff]
      %v2331 = vld [vmem:[%s5 + $0xd8] sm:$0xff]
      %v2332 = vld [vmem:[%s5 + $0xe0] sm:$0xff]
      %v2333 = vld [vmem:[%s5 + $0xe8] sm:$0xff]
      %v2334 = vld [vmem:[%s6] sm:$0xff]
      %v2335 = vld [vmem:[%s6 + $0x8] sm:$0xff]
      %v2336 = vld [vmem:[%s6 + $0x10] sm:$0xff]
      %v2337 = vld [vmem:[%s6 + $0x18] sm:$0xff]
      %v2338 = vld [vmem:[%s6 + $0x20] sm:$0xff]
      %v2339 = vld [vmem:[%s6 + $0x28] sm:$0xff]
      %v2340 = vld [vmem:[%s6 + $0x30] sm:$0xff]
      %v2341 = vld [vmem:[%s6 + $0x38] sm:$0xff]
      %v2342 = vld [vmem:[%s6 + $0x40] sm:$0xff]
      %v2343 = vld [vmem:[%s6 + $0x48] sm:$0xff]
      %v2344 = vld [vmem:[%s6 + $0x50] sm:$0xff]
      %v2345 = vld [vmem:[%s6 + $0x58] sm:$0xff]
      %v2346 = vld [vmem:[%s6 + $0x60] sm:$0xff]
      %v2347 = vld [vmem:[%s6 + $0x68] sm:$0xff]
      %v2348 = vld [vmem:[%s6 + $0x70] sm:$0xff]
      %2350 = vset.pattern.permute.xlu0 0
      %2351 = vperm.xlu0 %2350, %v2334
      %v2352 = vpop.permute.xlu0 %2351
      %2355 = vset.pattern.permute.xlu0 0
      %2356 = vperm.xlu0 %2355, %v2335
      %v2357 = vpop.permute.xlu0 %2356
      %2360 = vset.pattern.permute.xlu0 0
      %2361 = vperm.xlu0 %2360, %v2336
      %v2362 = vpop.permute.xlu0 %2361
      %2365 = vset.pattern.permute.xlu0 0
      %2366 = vperm.xlu0 %2365, %v2337
      %v2367 = vpop.permute.xlu0 %2366
      %2370 = vset.pattern.permute.xlu0 0
      %2371 = vperm.xlu0 %2370, %v2338
      %v2372 = vpop.permute.xlu0 %2371
      %2375 = vset.pattern.permute.xlu0 0
      %2376 = vperm.xlu0 %2375, %v2339
      %v2377 = vpop.permute.xlu0 %2376
      %2380 = vset.pattern.permute.xlu0 0
      %2381 = vperm.xlu0 %2380, %v2340
      %v2382 = vpop.permute.xlu0 %2381
      %2385 = vset.pattern.permute.xlu0 0
      %2386 = vperm.xlu0 %2385, %v2341
      %v2387 = vpop.permute.xlu0 %2386
      %2390 = vset.pattern.permute.xlu0 0
      %2391 = vperm.xlu0 %2390, %v2342
      %v2392 = vpop.permute.xlu0 %2391
      %2395 = vset.pattern.permute.xlu0 0
      %2396 = vperm.xlu0 %2395, %v2343
      %v2397 = vpop.permute.xlu0 %2396
      %2400 = vset.pattern.permute.xlu0 0
      %2401 = vperm.xlu0 %2400, %v2344
      %v2402 = vpop.permute.xlu0 %2401
      %2405 = vset.pattern.permute.xlu0 0
      %2406 = vperm.xlu0 %2405, %v2345
      %v2407 = vpop.permute.xlu0 %2406
      %2410 = vset.pattern.permute.xlu0 0
      %2411 = vperm.xlu0 %2410, %v2346
      %v2412 = vpop.permute.xlu0 %2411
      %2415 = vset.pattern.permute.xlu0 0
      %2416 = vperm.xlu0 %2415, %v2347
      %v2417 = vpop.permute.xlu0 %2416
      %2420 = vset.pattern.permute.xlu0 0
      %2421 = vperm.xlu0 %2420, %v2348
      %v2422 = vpop.permute.xlu0 %2421
      %v2454 = vunpack.c.l.b16 %v2304
      %v2455 = vunpack.c.h.b16 %v2304
      %v2456 = vunpack.c.l.b16 %v2305
      %v2457 = vunpack.c.h.b16 %v2305
      %v2458 = vunpack.c.l.b16 %v2306
      %v2459 = vunpack.c.h.b16 %v2306
      %v2460 = vunpack.c.l.b16 %v2307
      %v2461 = vunpack.c.h.b16 %v2307
      %v2462 = vunpack.c.l.b16 %v2308
      %v2463 = vunpack.c.h.b16 %v2308
      %v2464 = vunpack.c.l.b16 %v2309
      %v2465 = vunpack.c.h.b16 %v2309
      %v2466 = vunpack.c.l.b16 %v2310
      %v2467 = vunpack.c.h.b16 %v2310
      %v2468 = vunpack.c.l.b16 %v2311
      %v2469 = vunpack.c.h.b16 %v2311
      %v2470 = vunpack.c.l.b16 %v2312
      %v2471 = vunpack.c.h.b16 %v2312
      %v2472 = vunpack.c.l.b16 %v2313
      %v2473 = vunpack.c.h.b16 %v2313
      %v2474 = vunpack.c.l.b16 %v2314
      %v2475 = vunpack.c.h.b16 %v2314
      %v2476 = vunpack.c.l.b16 %v2315
      %v2477 = vunpack.c.h.b16 %v2315
      %v2478 = vunpack.c.l.b16 %v2316
      %v2479 = vunpack.c.h.b16 %v2316
      %v2480 = vunpack.c.l.b16 %v2317
      %v2481 = vunpack.c.h.b16 %v2317
      %v2482 = vunpack.c.l.b16 %v2318
      %v2483 = vunpack.c.h.b16 %v2318
      %v2484 = vunpack.c.l.b16 %v2319
      %v2485 = vunpack.c.h.b16 %v2319
      %v2486 = vunpack.c.l.b16 %v2320
      %v2487 = vunpack.c.h.b16 %v2320
      %v2488 = vunpack.c.l.b16 %v2321
      %v2489 = vunpack.c.h.b16 %v2321
      %v2490 = vunpack.c.l.b16 %v2322
      %v2491 = vunpack.c.h.b16 %v2322
      %v2492 = vunpack.c.l.b16 %v2323
      %v2493 = vunpack.c.h.b16 %v2323
      %v2494 = vunpack.c.l.b16 %v2324
      %v2495 = vunpack.c.h.b16 %v2324
      %v2496 = vunpack.c.l.b16 %v2325
      %v2497 = vunpack.c.h.b16 %v2325
      %v2498 = vunpack.c.l.b16 %v2326
      %v2499 = vunpack.c.h.b16 %v2326
      %v2500 = vunpack.c.l.b16 %v2327
      %v2501 = vunpack.c.h.b16 %v2327
      %v2502 = vunpack.c.l.b16 %v2328
      %v2503 = vunpack.c.h.b16 %v2328
      %v2504 = vunpack.c.l.b16 %v2329
      %v2505 = vunpack.c.h.b16 %v2329
      %v2506 = vunpack.c.l.b16 %v2330
      %v2507 = vunpack.c.h.b16 %v2330
      %v2508 = vunpack.c.l.b16 %v2331
      %v2509 = vunpack.c.h.b16 %v2331
      %v2510 = vunpack.c.l.b16 %v2332
      %v2511 = vunpack.c.h.b16 %v2332
      %v2512 = vunpack.c.l.b16 %v2333
      %v2513 = vunpack.c.h.b16 %v2333
      %v2514 = vpack.c.b16 %v2458, %v2454
      %v2515 = vpack.c.b16 %v2459, %v2455
      %v2516 = vpack.c.b16 %v2460, %v2456
      %v2517 = vpack.c.b16 %v2461, %v2457
      %v2518 = vpack.c.b16 %v2466, %v2462
      %v2519 = vpack.c.b16 %v2467, %v2463
      %v2520 = vpack.c.b16 %v2468, %v2464
      %v2521 = vpack.c.b16 %v2469, %v2465
      %v2522 = vpack.c.b16 %v2474, %v2470
      %v2523 = vpack.c.b16 %v2475, %v2471
      %v2524 = vpack.c.b16 %v2476, %v2472
      %v2525 = vpack.c.b16 %v2477, %v2473
      %v2526 = vpack.c.b16 %v2482, %v2478
      %v2527 = vpack.c.b16 %v2483, %v2479
      %v2528 = vpack.c.b16 %v2484, %v2480
      %v2529 = vpack.c.b16 %v2485, %v2481
      %v2530 = vpack.c.b16 %v2490, %v2486
      %v2531 = vpack.c.b16 %v2491, %v2487
      %v2532 = vpack.c.b16 %v2492, %v2488
      %v2533 = vpack.c.b16 %v2493, %v2489
      %v2534 = vpack.c.b16 %v2498, %v2494
      %v2535 = vpack.c.b16 %v2499, %v2495
      %v2536 = vpack.c.b16 %v2500, %v2496
      %v2537 = vpack.c.b16 %v2501, %v2497
      %v2538 = vpack.c.b16 %v2506, %v2502
      %v2539 = vpack.c.b16 %v2507, %v2503
      %v2540 = vpack.c.b16 %v2508, %v2504
      %v2541 = vpack.c.b16 %v2509, %v2505
      %v2542 = vpack.c.b16 %v2510, %v2510
      %v2543 = vpack.c.b16 %v2511, %v2511
      %v2544 = vpack.c.b16 %v2512, %v2512
      %v2545 = vpack.c.b16 %v2513, %v2513
      %vm2570 = vcmask 293888
      %v2572 = vsel %vm2570, %v2517, 0
      %v2575 = vsel %vm2570, %v2521, 0
      %v2578 = vsel %vm2570, %v2525, 0
      %v2581 = vsel %vm2570, %v2529, 0
      %v2584 = vsel %vm2570, %v2533, 0
      %v2587 = vsel %vm2570, %v2537, 0
      %v2590 = vsel %vm2570, %v2541, 0
      %v2593 = vsel %vm2570, %v2545, 0
      %v2596 = vsel %vm2291, %v2285, 0
      %2598 = vmatprep.subr.bf16.mxu0 0
      %2599 = vmatpush1.bf16.msra.mxu0 %v2177
      %2600 = vmatprep.subr.bf16.mxu0 0
      %2601 = vmatpush1.bf16.msra.mxu0 %v2178
      %2602 = vmatprep.subr.bf16.mxu0 0
      %2603 = vmatpush1.bf16.msra.mxu0 %v2179
      %2604 = vmatprep.subr.bf16.mxu0 0
      %2605 = vmatpush1.bf16.msra.mxu0 %v2180
      %2606 = vmatprep.subr.bf16.mxu0 0
      %2607 = vmatpush1.bf16.msra.mxu0 %v2181
      %2608 = vmatprep.subr.bf16.mxu0 0
      %2609 = vmatpush1.bf16.msra.mxu0 %v2294
      %2610 = vmatprep.subr.bf16.mxu0 0
      %2611 = vmatpush1.bf16.msra.mxu0 %v2204
      %2612 = vmatprep.subr.bf16.mxu0 0
      %2613 = vmatpush1.bf16.msra.mxu0 %v2206
      %2614 = vmatprep.subr.bf16.mxu0 0
      %2615 = vmatpush1.bf16.msra.mxu0 %v2208
      %2616 = vmatprep.subr.bf16.mxu0 0
      %2617 = vmatpush1.bf16.msra.mxu0 %v2210
      %2618 = vmatprep.subr.bf16.mxu0 0
      %2619 = vmatpush1.bf16.msra.mxu0 %v2298
      %2620 = vmatprep.subr.bf16.mxu0 0
      %2621 = vmatpush1.bf16.msra.mxu0 %v2232
      %2622 = vmatprep.subr.bf16.mxu0 0
      %2623 = vmatpush1.bf16.msra.mxu0 %v2234
      %2624 = vmatprep.subr.bf16.mxu0 0
      %2625 = vmatpush1.bf16.msra.mxu0 %v2236
      %2626 = vmatprep.subr.bf16.mxu0 0
      %2627 = vmatpush1.bf16.msra.mxu0 %v2238
      %2628 = vmatprep.subr.bf16.mxu0 0
      %2629 = vmatpush1.bf16.msra.mxu0 %v2302
      %2630 = vmatprep.mubr.bf16.mxu0 %v2515
      %2631 = vmatmul.mubr.bf16.gmra.mrb[0].mxu0 %v2514
      %v2632 = vpop.f32.mrb[0].mxu0
      %v2633 = vadd.f32 %v2352, %v2632
      %v2634 = vpop.f32.mrb[0].mxu0
      %v2635 = vpop.f32.mrb[0].mxu0
      %v2636 = vadd.f32 %v2357, %v2635
      %v2637 = vpop.f32.mrb[0].mxu0
      %2638 = vmatprep.mubr.bf16.mxu0 %v2519
      %2639 = vmatmul.mubr.bf16.gmra.mrb[0].mxu0 %v2518
      %v2640 = vpop.f32.mrb[0].mxu0
      %v2641 = vadd.f32 %v2362, %v2640
      %v2642 = vpop.f32.mrb[0].mxu0
      %v2643 = vpop.f32.mrb[0].mxu0
      %v2644 = vadd.f32 %v2367, %v2643
      %v2645 = vpop.f32.mrb[0].mxu0
      %2646 = vmatprep.mubr.bf16.mxu0 %v2523
      %2647 = vmatmul.mubr.bf16.gmra.mrb[0].mxu0 %v2522
      %v2648 = vpop.f32.mrb[0].mxu0
      %v2649 = vadd.f32 %v2372, %v2648
      %v2650 = vpop.f32.mrb[0].mxu0
      %v2651 = vpop.f32.mrb[0].mxu0
      %v2652 = vadd.f32 %v2377, %v2651
      %v2653 = vpop.f32.mrb[0].mxu0
      %2654 = vmatprep.mubr.bf16.mxu0 %v2527
      %2655 = vmatmul.mubr.bf16.gmra.mrb[0].mxu0 %v2526
      %v2656 = vpop.f32.mrb[0].mxu0
      %v2657 = vadd.f32 %v2382, %v2656
      %v2658 = vpop.f32.mrb[0].mxu0
      %v2659 = vpop.f32.mrb[0].mxu0
      %v2660 = vadd.f32 %v2387, %v2659
      %v2661 = vpop.f32.mrb[0].mxu0
      %2662 = vmatprep.mubr.bf16.mxu0 %v2531
      %2663 = vmatmul.mubr.bf16.gmra.mrb[0].mxu0 %v2530
      %v2664 = vpop.f32.mrb[0].mxu0
      %v2665 = vadd.f32 %v2392, %v2664
      %v2666 = vpop.f32.mrb[0].mxu0
      %v2667 = vpop.f32.mrb[0].mxu0
      %v2668 = vadd.f32 %v2397, %v2667
      %v2669 = vpop.f32.mrb[0].mxu0
      %2670 = vmatprep.mubr.bf16.mxu0 %v2535
      %2671 = vmatmul.mubr.bf16.gmra.mrb[0].mxu0 %v2534
      %v2672 = vpop.f32.mrb[0].mxu0
      %v2673 = vadd.f32 %v2402, %v2672
      %v2674 = vpop.f32.mrb[0].mxu0
      %v2675 = vpop.f32.mrb[0].mxu0
      %v2676 = vadd.f32 %v2407, %v2675
      %v2677 = vpop.f32.mrb[0].mxu0
      %2678 = vmatprep.mubr.bf16.mxu0 %v2539
      %2679 = vmatmul.mubr.bf16.gmra.mrb[0].mxu0 %v2538
      %v2680 = vpop.f32.mrb[0].mxu0
      %v2681 = vadd.f32 %v2412, %v2680
      %v2682 = vpop.f32.mrb[0].mxu0
      %v2683 = vpop.f32.mrb[0].mxu0
      %v2684 = vadd.f32 %v2417, %v2683
      %v2685 = vpop.f32.mrb[0].mxu0
      %2686 = vmatprep.mubr.bf16.mxu0 %v2543
      %2687 = vmatmul.mubr.bf16.gmra.mrb[0].mxu0 %v2542
      %v2688 = vpop.f32.mrb[0].mxu0
      %v2689 = vadd.f32 %v2422, %v2688
      %v2690 = vpop.f32.mrb[0].mxu0
      %v2691 = vpop.f32.mrb[0].mxu0
      %v2692 = vpop.f32.mrb[0].mxu0
      %2693 = vdwg.mxu0
      %2694 = vmatprep.subr.bf16.mxu0 0
      %2695 = vmatpush1.bf16.msra.mxu0 %v2260
      %2696 = vmatprep.subr.bf16.mxu0 0
      %2697 = vmatpush1.bf16.msra.mxu0 %v2262
      %2698 = vmatprep.subr.bf16.mxu0 0
      %2699 = vmatpush1.bf16.msra.mxu0 %v2264
      %2700 = vmatprep.subr.bf16.mxu0 0
      %2701 = vmatpush1.bf16.msra.mxu0 %v2266
      %2702 = vmatprep.subr.bf16.mxu0 0
      %2703 = vmatpush1.bf16.msra.mxu0 %v2268
      %2704 = vmatprep.subr.bf16.mxu0 0
      %2705 = vmatpush1.bf16.msra.mxu0 %v2275
      %2706 = vmatprep.subr.bf16.mxu0 0
      %2707 = vmatpush1.bf16.msra.mxu0 %v2277
      %2708 = vmatprep.subr.bf16.mxu0 0
      %2709 = vmatpush1.bf16.msra.mxu0 %v2279
      %2710 = vmatprep.subr.bf16.mxu0 0
      %2711 = vmatpush1.bf16.msra.mxu0 %v2281
      %2712 = vmatprep.subr.bf16.mxu0 0
      %2713 = vmatpush1.bf16.msra.mxu0 %v2283
      %2714 = vmatprep.subr.bf16.mxu0 0
      %2715 = vmatpush1.bf16.msra.mxu0 %v2596
      %2716 = vmatprep.subr.bf16.mxu0 0
      %2717 = vmatpush1.bf16.msra.mxu0 0
      %2718 = vmatprep.subr.bf16.mxu0 0
      %2719 = vmatpush1.bf16.msra.mxu0 0
      %2720 = vmatprep.subr.bf16.mxu0 0
      %2721 = vmatpush1.bf16.msra.mxu0 0
      %2722 = vmatprep.subr.bf16.mxu0 0
      %2723 = vmatpush1.bf16.msra.mxu0 0
      %2724 = vmatprep.subr.bf16.mxu0 0
      %2725 = vmatpush1.bf16.msra.mxu0 0
      %2726 = vmatprep.mubr.bf16.mxu0 %v2572
      %2727 = vmatmul.mubr.bf16.gmra.mrb[0].mxu0 %v2516
      %v2728 = vpop.f32.mrb[0].mxu0
      %v2729 = vadd.f32 %v2633, %v2728
      %v2730 = vpop.f32.mrb[0].mxu0
      %v2731 = vpop.f32.mrb[0].mxu0
      %v2732 = vadd.f32 %v2636, %v2731
      %v2733 = vpop.f32.mrb[0].mxu0
      %2734 = vmatprep.mubr.bf16.mxu0 %v2575
      %2735 = vmatmul.mubr.bf16.gmra.mrb[0].mxu0 %v2520
      %v2736 = vpop.f32.mrb[0].mxu0
      %v2737 = vadd.f32 %v2641, %v2736
      %v2738 = vpop.f32.mrb[0].mxu0
      %v2739 = vpop.f32.mrb[0].mxu0
      %v2740 = vadd.f32 %v2644, %v2739
      %v2741 = vpop.f32.mrb[0].mxu0
      %2742 = vmatprep.mubr.bf16.mxu0 %v2578
      %2743 = vmatmul.mubr.bf16.gmra.mrb[0].mxu0 %v2524
      %v2744 = vpop.f32.mrb[0].mxu0
      %v2745 = vadd.f32 %v2649, %v2744
      %v2746 = vpop.f32.mrb[0].mxu0
      %v2747 = vpop.f32.mrb[0].mxu0
      %v2748 = vadd.f32 %v2652, %v2747
      %v2749 = vpop.f32.mrb[0].mxu0
      %2750 = vmatprep.mubr.bf16.mxu0 %v2581
      %2751 = vmatmul.mubr.bf16.gmra.mrb[0].mxu0 %v2528
      %v2752 = vpop.f32.mrb[0].mxu0
      %v2753 = vadd.f32 %v2657, %v2752
      %v2754 = vpop.f32.mrb[0].mxu0
      %v2755 = vpop.f32.mrb[0].mxu0
      %v2756 = vadd.f32 %v2660, %v2755
      %v2757 = vpop.f32.mrb[0].mxu0
      %2758 = vmatprep.mubr.bf16.mxu0 %v2584
      %2759 = vmatmul.mubr.bf16.gmra.mrb[0].mxu0 %v2532
      %v2760 = vpop.f32.mrb[0].mxu0
      %v2761 = vadd.f32 %v2665, %v2760
      %v2762 = vpop.f32.mrb[0].mxu0
      %v2763 = vpop.f32.mrb[0].mxu0
      %v2764 = vadd.f32 %v2668, %v2763
      %v2765 = vpop.f32.mrb[0].mxu0
      %2766 = vmatprep.mubr.bf16.mxu0 %v2587
      %2767 = vmatmul.mubr.bf16.gmra.mrb[0].mxu0 %v2536
      %v2768 = vpop.f32.mrb[0].mxu0
      %v2769 = vadd.f32 %v2673, %v2768
      %v2770 = vpop.f32.mrb[0].mxu0
      %v2771 = vpop.f32.mrb[0].mxu0
      %v2772 = vadd.f32 %v2676, %v2771
      %v2773 = vpop.f32.mrb[0].mxu0
      %2774 = vmatprep.mubr.bf16.mxu0 %v2590
      %2775 = vmatmul.mubr.bf16.gmra.mrb[0].mxu0 %v2540
      %v2776 = vpop.f32.mrb[0].mxu0
      %v2777 = vadd.f32 %v2681, %v2776
      %v2778 = vpop.f32.mrb[0].mxu0
      %v2779 = vpop.f32.mrb[0].mxu0
      %v2780 = vadd.f32 %v2684, %v2779
      %v2781 = vpop.f32.mrb[0].mxu0
      %2782 = vmatprep.mubr.bf16.mxu0 %v2593
      %2783 = vmatmul.mubr.bf16.gmra.mrb[0].mxu0 %v2544
      %v2784 = vpop.f32.mrb[0].mxu0
      %v2785 = vadd.f32 %v2689, %v2784
      %v2786 = vpop.f32.mrb[0].mxu0
      %v2787 = vpop.f32.mrb[0].mxu0
      %v2788 = vpop.f32.mrb[0].mxu0
      %2789 = vdwg.mxu0
      %v2790 = vmax.f32 %v2729, 0.0
      %v2791 = vmax.f32 %v2732, 0.0
      %v2792 = vmax.f32 %v2737, 0.0
      %v2793 = vmax.f32 %v2740, 0.0
      %v2794 = vmax.f32 %v2745, 0.0
      %v2795 = vmax.f32 %v2748, 0.0
      %v2796 = vmax.f32 %v2753, 0.0
      %v2797 = vmax.f32 %v2756, 0.0
      %v2798 = vmax.f32 %v2761, 0.0
      %v2799 = vmax.f32 %v2764, 0.0
      %v2800 = vmax.f32 %v2769, 0.0
      %v2801 = vmax.f32 %v2772, 0.0
      %v2802 = vmax.f32 %v2777, 0.0
      %v2803 = vmax.f32 %v2780, 0.0
      %v2804 = vmax.f32 %v2785, 0.0
      %v2820 = vrot.slane %v2790, 1
      %v2821 = vrot.slane %v2791, 1
      %v2822 = vsel %vm1455, %v2820, %v2821
      %v2823 = vrot.slane %v2792, 1
      %v2824 = vsel %vm1455, %v2821, %v2823
      %v2825 = vrot.slane %v2793, 1
      %v2826 = vsel %vm1455, %v2823, %v2825
      %v2827 = vrot.slane %v2794, 1
      %v2828 = vsel %vm1455, %v2825, %v2827
      %v2829 = vrot.slane %v2795, 1
      %v2830 = vsel %vm1455, %v2827, %v2829
      %v2831 = vrot.slane %v2796, 1
      %v2832 = vsel %vm1455, %v2829, %v2831
      %v2833 = vrot.slane %v2797, 1
      %v2834 = vsel %vm1455, %v2831, %v2833
      %v2835 = vrot.slane %v2798, 1
      %v2836 = vsel %vm1455, %v2833, %v2835
      %v2837 = vrot.slane %v2799, 1
      %v2838 = vsel %vm1455, %v2835, %v2837
      %v2839 = vrot.slane %v2800, 1
      %v2840 = vsel %vm1455, %v2837, %v2839
      %v2841 = vrot.slane %v2801, 1
      %v2842 = vsel %vm1455, %v2839, %v2841
      %v2843 = vrot.slane %v2802, 1
      %v2844 = vsel %vm1455, %v2841, %v2843
      %v2845 = vrot.slane %v2803, 1
      %v2846 = vsel %vm1455, %v2843, %v2845
      %v2847 = vrot.slane %v2804, 1
      %v2848 = vsel %vm1455, %v2845, %v2847
      %v2864 = vmax.f32 %v2790, %v2822
      %v2865 = vmax.f32 %v2791, %v2824
      %v2866 = vmax.f32 %v2792, %v2826
      %v2867 = vmax.f32 %v2793, %v2828
      %v2868 = vmax.f32 %v2794, %v2830
      %v2869 = vmax.f32 %v2795, %v2832
      %v2870 = vmax.f32 %v2796, %v2834
      %v2871 = vmax.f32 %v2797, %v2836
      %v2872 = vmax.f32 %v2798, %v2838
      %v2873 = vmax.f32 %v2799, %v2840
      %v2874 = vmax.f32 %v2800, %v2842
      %v2875 = vmax.f32 %v2801, %v2844
      %v2876 = vmax.f32 %v2802, %v2846
      %v2877 = vmax.f32 %v2803, %v2848
      %v2878 = vmax.f32 %v2804, %v2847
      %v2879 = vld [vmem:[%s7] sm:$0xf]
      %v2880 = vld [vmem:[%s7 + $0x4] sm:$0xf]
      %v2881 = vld [vmem:[%s7 + $0x8] sm:$0xf]
      %v2882 = vld [vmem:[%s7 + $0xc] sm:$0xf]
      %v2883 = vld [vmem:[%s7 + $0x10] sm:$0xf]
      %v2884 = vld [vmem:[%s7 + $0x14] sm:$0xf]
      %v2885 = vld [vmem:[%s7 + $0x18] sm:$0xf]
      %v2886 = vld [vmem:[%s7 + $0x1c] sm:$0x3]
      %v2887 = vpack.c.bf16 %v2865, %v2864
      %v2888 = vpack.c.bf16 %v2867, %v2866
      %v2889 = vpack.c.bf16 %v2869, %v2868
      %v2890 = vpack.c.bf16 %v2871, %v2870
      %v2891 = vpack.c.bf16 %v2873, %v2872
      %v2892 = vpack.c.bf16 %v2875, %v2874
      %v2893 = vpack.c.bf16 %v2877, %v2876
      %v2894 = vpack.c.bf16 %v2878, %v2878
      %v2903 = vunpack.c.l.b16 %v2879
      %v2904 = vunpack.c.l.b16 %v2880
      %v2905 = vunpack.c.l.b16 %v2881
      %v2906 = vunpack.c.l.b16 %v2882
      %v2907 = vunpack.c.l.b16 %v2883
      %v2908 = vunpack.c.l.b16 %v2884
      %v2909 = vunpack.c.l.b16 %v2885
      %v2910 = vunpack.c.l.b16 %v2886
      %v2911 = vpack.c.b16 %v2904, %v2903
      %v2912 = vpack.c.b16 %v2906, %v2905
      %v2913 = vpack.c.b16 %v2908, %v2907
      %v2914 = vpack.c.b16 %v2910, %v2909
      %vm2915 = vcmask 973824
      %v2917 = vsel %vm2915, %v2911, 0
      %v2920 = vsel %vm2915, %v2912, 0
      %v2923 = vsel %vm2915, %v2913, 0
      %v2926 = vsel %vm2915, %v2914, 0
      %v2929 = vand.u32 %v2894, %v1728
      %2931 = vmatprep.subr.bf16.mxu0 0
      %2932 = vmatpush1.bf16.msra.mxu0 %v2887
      %2933 = vmatprep.subr.bf16.mxu0 0
      %2934 = vmatpush1.bf16.msra.mxu0 %v2888
      %2935 = vmatprep.subr.bf16.mxu0 0
      %2936 = vmatpush1.bf16.msra.mxu0 %v2889
      %2937 = vmatprep.subr.bf16.mxu0 0
      %2938 = vmatpush1.bf16.msra.mxu0 %v2890
      %2939 = vmatprep.subr.bf16.mxu0 0
      %2940 = vmatpush1.bf16.msra.mxu0 %v2891
      %2941 = vmatprep.subr.bf16.mxu0 0
      %2942 = vmatpush1.bf16.msra.mxu0 %v2892
      %2943 = vmatprep.subr.bf16.mxu0 0
      %2944 = vmatpush1.bf16.msra.mxu0 %v2893
      %2945 = vmatprep.subr.bf16.mxu0 0
      %2946 = vmatpush1.bf16.msra.mxu0 %v2929
      %2947 = vmatprep.subr.bf16.mxu0 0
      %2948 = vmatpush1.bf16.msra.mxu0 0
      %2949 = vmatprep.subr.bf16.mxu0 0
      %2950 = vmatpush1.bf16.msra.mxu0 0
      %2951 = vmatprep.subr.bf16.mxu0 0
      %2952 = vmatpush1.bf16.msra.mxu0 0
      %2953 = vmatprep.subr.bf16.mxu0 0
      %2954 = vmatpush1.bf16.msra.mxu0 0
      %2955 = vmatprep.subr.bf16.mxu0 0
      %2956 = vmatpush1.bf16.msra.mxu0 0
      %2957 = vmatprep.subr.bf16.mxu0 0
      %2958 = vmatpush1.bf16.msra.mxu0 0
      %2959 = vmatprep.subr.bf16.mxu0 0
      %2960 = vmatpush1.bf16.msra.mxu0 0
      %2961 = vmatprep.subr.bf16.mxu0 0
      %2962 = vmatpush1.bf16.msra.mxu0 0
      %2963 = vmatprep.mubr.bf16.mxu0 0
      %2964 = vmatmul.mubr.bf16.gmra.mrb[0].mxu0 %v2917
      %v2965 = vpop.f32.mrb[0].mxu0
      %v2966 = vadd.f32 0.0, %v2965
      %v2967 = vpop.f32.mrb[0].mxu0
      %v2968 = vpop.f32.mrb[0].mxu0
      %v2969 = vadd.f32 0.0, %v2968
      %v2970 = vpop.f32.mrb[0].mxu0
      %2971 = vmatprep.mubr.bf16.mxu0 0
      %2972 = vmatmul.mubr.bf16.gmra.mrb[0].mxu0 %v2920
      %v2973 = vpop.f32.mrb[0].mxu0
      %v2974 = vadd.f32 0.0, %v2973
      %v2975 = vpop.f32.mrb[0].mxu0
      %v2976 = vpop.f32.mrb[0].mxu0
      %v2977 = vadd.f32 0.0, %v2976
      %v2978 = vpop.f32.mrb[0].mxu0
      %2979 = vmatprep.mubr.bf16.mxu0 0
      %2980 = vmatmul.mubr.bf16.gmra.mrb[0].mxu0 %v2923
      %v2981 = vpop.f32.mrb[0].mxu0
      %v2982 = vadd.f32 0.0, %v2981
      %v2983 = vpop.f32.mrb[0].mxu0
      %v2984 = vpop.f32.mrb[0].mxu0
      %v2985 = vadd.f32 0.0, %v2984
      %v2986 = vpop.f32.mrb[0].mxu0
      %2987 = vmatprep.mubr.bf16.mxu0 0
      %2988 = vmatmul.mubr.bf16.gmra.mrb[0].mxu0 %v2926
      %v2989 = vpop.f32.mrb[0].mxu0
      %v2990 = vadd.f32 0.0, %v2989
      %v2991 = vpop.f32.mrb[0].mxu0
      %v2992 = vpop.f32.mrb[0].mxu0
      %v2993 = vadd.f32 0.0, %v2992
      %v2994 = vpop.f32.mrb[0].mxu0
      %2995 = vdwg.mxu0
      %3004 = vrot.lane.b32.xlu0 %v2966, 127
      %v3005 = vpop.permute.xlu0 %3004
      %3006 = vrot.lane.b32.xlu0 %v2969, 127
      %v3007 = vpop.permute.xlu0 %3006
      %3008 = vrot.lane.b32.xlu0 %v2974, 127
      %v3009 = vpop.permute.xlu0 %3008
      %3010 = vrot.lane.b32.xlu0 %v2977, 127
      %v3011 = vpop.permute.xlu0 %3010
      %3012 = vrot.lane.b32.xlu0 %v2982, 127
      %v3013 = vpop.permute.xlu0 %3012
      %3014 = vrot.lane.b32.xlu0 %v2985, 127
      %v3015 = vpop.permute.xlu0 %3014
      %3016 = vrot.lane.b32.xlu0 %v2990, 127
      %v3017 = vpop.permute.xlu0 %3016
      %3018 = vrot.lane.b32.xlu0 %v2993, 127
      %v3019 = vpop.permute.xlu0 %3018
      %v3028 = vmax.f32 %v2966, %v3005
      %v3029 = vmax.f32 %v2969, %v3007
      %v3030 = vmax.f32 %v2974, %v3009
      %v3031 = vmax.f32 %v2977, %v3011
      %v3032 = vmax.f32 %v2982, %v3013
      %v3033 = vmax.f32 %v2985, %v3015
      %v3034 = vmax.f32 %v2990, %v3017
      %v3035 = vmax.f32 %v2993, %v3019
      %v3036 = vpack.c.bf16 %v3029, %v3028
      %v3037 = vpack.c.bf16 %v3031, %v3030
      %v3038 = vpack.c.bf16 %v3033, %v3032
      %v3039 = vpack.c.bf16 %v3035, %v3034
      %v3040 = vld [vmem:[%s8] sm:$0xf]
      %v3041 = vld [vmem:[%s8 + $0x4] sm:$0xf]
      %v3042 = vld [vmem:[%s8 + $0x8] sm:$0xf]
      %v3043 = vld [vmem:[%s8 + $0xc] sm:$0xf]
      %v3044 = vld [vmem:[%s8 + $0x10] sm:$0xf]
      %v3045 = vld [vmem:[%s8 + $0x14] sm:$0xf]
      %v3046 = vld [vmem:[%s8 + $0x18] sm:$0xf]
      %v3047 = vld [vmem:[%s8 + $0x1c] sm:$0xf]
      %v3048 = vld [vmem:[%s8 + $0x20] sm:$0xf]
      %v3049 = vld [vmem:[%s8 + $0x24] sm:$0xf]
      %v3050 = vld [vmem:[%s8 + $0x28] sm:$0xf]
      %v3051 = vld [vmem:[%s8 + $0x2c] sm:$0xf]
      %v3052 = vld [vmem:[%s8 + $0x30] sm:$0xf]
      %v3066 = vunpack.c.l.b16 %v3040
      %v3067 = vunpack.c.l.b16 %v3041
      %v3068 = vunpack.c.l.b16 %v3042
      %v3069 = vunpack.c.l.b16 %v3043
      %v3070 = vunpack.c.l.b16 %v3044
      %v3071 = vunpack.c.l.b16 %v3045
      %v3072 = vunpack.c.l.b16 %v3046
      %v3073 = vunpack.c.l.b16 %v3047
      %v3074 = vunpack.c.l.b16 %v3048
      %v3075 = vunpack.c.l.b16 %v3049
      %v3076 = vunpack.c.l.b16 %v3050
      %v3077 = vunpack.c.l.b16 %v3051
      %v3078 = vunpack.c.l.b16 %v3052
      %v3079 = vpack.c.b16 %v3067, %v3066
      %v3080 = vpack.c.b16 %v3069, %v3068
      %v3081 = vpack.c.b16 %v3071, %v3070
      %v3082 = vpack.c.b16 %v3073, %v3072
      %v3083 = vpack.c.b16 %v3075, %v3074
      %v3084 = vpack.c.b16 %v3077, %v3076
      %v3085 = vpack.c.b16 %v3078, %v3078
      %vm3092 = vcmask 842752
      %v3094 = vsel %vm3092, %v3036, 0
      %v3097 = vsel %vm3092, %v3037, 0
      %v3100 = vsel %vm3092, %v3038, 0
      %v3103 = vsel %vm3092, %v3039, 0
      %v3106 = vand.u32 %v3085, %v1728
      %3108 = vmatprep.subr.bf16.mxu0 0
      %3109 = vmatpush1.bf16.msra.mxu0 %v3079
      %3110 = vmatprep.subr.bf16.mxu0 0
      %3111 = vmatpush1.bf16.msra.mxu0 %v3080
      %3112 = vmatprep.subr.bf16.mxu0 0
      %3113 = vmatpush1.bf16.msra.mxu0 %v3081
      %3114 = vmatprep.subr.bf16.mxu0 0
      %3115 = vmatpush1.bf16.msra.mxu0 %v3082
      %3116 = vmatprep.subr.bf16.mxu0 0
      %3117 = vmatpush1.bf16.msra.mxu0 %v3083
      %3118 = vmatprep.subr.bf16.mxu0 0
      %3119 = vmatpush1.bf16.msra.mxu0 %v3084
      %3120 = vmatprep.subr.bf16.mxu0 0
      %3121 = vmatpush1.bf16.msra.mxu0 %v3106
      %3122 = vmatprep.subr.bf16.mxu0 0
      %3123 = vmatpush1.bf16.msra.mxu0 0
      %3124 = vmatprep.subr.bf16.mxu0 0
      %3125 = vmatpush1.bf16.msra.mxu0 0
      %3126 = vmatprep.subr.bf16.mxu0 0
      %3127 = vmatpush1.bf16.msra.mxu0 0
      %3128 = vmatprep.subr.bf16.mxu0 0
      %3129 = vmatpush1.bf16.msra.mxu0 0
      %3130 = vmatprep.subr.bf16.mxu0 0
      %3131 = vmatpush1.bf16.msra.mxu0 0
      %3132 = vmatprep.subr.bf16.mxu0 0
      %3133 = vmatpush1.bf16.msra.mxu0 0
      %3134 = vmatprep.subr.bf16.mxu0 0
      %3135 = vmatpush1.bf16.msra.mxu0 0
      %3136 = vmatprep.subr.bf16.mxu0 0
      %3137 = vmatpush1.bf16.msra.mxu0 0
      %3138 = vmatprep.subr.bf16.mxu0 0
      %3139 = vmatpush1.bf16.msra.mxu0 0
      %3140 = vmatprep.mubr.bf16.mxu0 0
      %3141 = vmatmul.mubr.bf16.gmra.mrb[0].mxu0 %v3094
      %v3142 = vpop.f32.mrb[0].mxu0
      %v3143 = vadd.f32 0.0, %v3142
      %v3144 = vpop.f32.mrb[0].mxu0
      %v3145 = vpop.f32.mrb[0].mxu0
      %v3146 = vadd.f32 0.0, %v3145
      %v3147 = vpop.f32.mrb[0].mxu0
      %3148 = vmatprep.mubr.bf16.mxu0 0
      %3149 = vmatmul.mubr.bf16.gmra.mrb[0].mxu0 %v3097
      %v3150 = vpop.f32.mrb[0].mxu0
      %v3151 = vadd.f32 0.0, %v3150
      %v3152 = vpop.f32.mrb[0].mxu0
      %v3153 = vpop.f32.mrb[0].mxu0
      %v3154 = vadd.f32 0.0, %v3153
      %v3155 = vpop.f32.mrb[0].mxu0
      %3156 = vmatprep.mubr.bf16.mxu0 0
      %3157 = vmatmul.mubr.bf16.gmra.mrb[0].mxu0 %v3100
      %v3158 = vpop.f32.mrb[0].mxu0
      %v3159 = vadd.f32 0.0, %v3158
      %v3160 = vpop.f32.mrb[0].mxu0
      %v3161 = vpop.f32.mrb[0].mxu0
      %v3162 = vadd.f32 0.0, %v3161
      %v3163 = vpop.f32.mrb[0].mxu0
      %3164 = vmatprep.mubr.bf16.mxu0 0
      %3165 = vmatmul.mubr.bf16.gmra.mrb[0].mxu0 %v3103
      %v3166 = vpop.f32.mrb[0].mxu0
      %v3167 = vadd.f32 0.0, %v3166
      %v3168 = vpop.f32.mrb[0].mxu0
      %v3169 = vpop.f32.mrb[0].mxu0
      %v3170 = vadd.f32 0.0, %v3169
      %v3171 = vpop.f32.mrb[0].mxu0
      %3172 = vdwg.mxu0
      %v3173 = vpack.c.bf16 %v3146, %v3143
      %v3174 = vpack.c.bf16 %v3154, %v3151
      %v3175 = vpack.c.bf16 %v3162, %v3159
      %v3176 = vpack.c.bf16 %v3170, %v3167
      %v3181 = vrot.slane %v3173, 2
      %v3182 = vrot.slane %v3174, 2
      %v3183 = vsel %vm2245, %v3181, %v3182
      %v3184 = vrot.slane %v3175, 2
      %v3185 = vsel %vm2245, %v3182, %v3184
      %v3186 = vrot.slane %v3176, 2
      %v3187 = vsel %vm2245, %v3184, %v3186
      %3188 = vrot.lane.b32.xlu0 %v3181, 126
      %v3189 = vpop.permute.xlu0 %3188
      %3190 = vrot.lane.b32.xlu0 %v3183, 126
      %v3191 = vpop.permute.xlu0 %3190
      %3192 = vrot.lane.b32.xlu0 %v3185, 126
      %v3193 = vpop.permute.xlu0 %3192
      %3194 = vrot.lane.b32.xlu0 %v3187, 126
      %v3195 = vpop.permute.xlu0 %3194
      %3196 = vrot.lane.b32.xlu0 %v3186, 126
      %v3197 = vpop.permute.xlu0 %3196
      %v3201 = vrot.slane %v3173, 4
      %v3202 = vrot.slane %v3174, 4
      %v3203 = vsel %vm2217, %v3201, %v3202
      %v3204 = vrot.slane %v3175, 4
      %v3205 = vsel %vm2217, %v3202, %v3204
      %v3206 = vrot.slane %v3176, 4
      %v3207 = vsel %vm2217, %v3204, %v3206
      %3208 = vrot.lane.b32.xlu0 %v3201, 124
      %v3209 = vpop.permute.xlu0 %3208
      %3210 = vrot.lane.b32.xlu0 %v3203, 124
      %v3211 = vpop.permute.xlu0 %3210
      %3212 = vrot.lane.b32.xlu0 %v3205, 124
      %v3213 = vpop.permute.xlu0 %3212
      %3214 = vrot.lane.b32.xlu0 %v3207, 124
      %v3215 = vpop.permute.xlu0 %3214
      %3216 = vrot.lane.b32.xlu0 %v3206, 124
      %v3217 = vpop.permute.xlu0 %3216
      %v3221 = vrot.slane %v3173, 6
      %v3222 = vrot.slane %v3174, 6
      %v3223 = vsel %vm2189, %v3221, %v3222
      %v3224 = vrot.slane %v3175, 6
      %v3225 = vsel %vm2189, %v3222, %v3224
      %v3226 = vrot.slane %v3176, 6
      %v3227 = vsel %vm2189, %v3224, %v3226
      %3228 = vrot.lane.b32.xlu0 %v3221, 122
      %v3229 = vpop.permute.xlu0 %3228
      %3230 = vrot.lane.b32.xlu0 %v3223, 122
      %v3231 = vpop.permute.xlu0 %3230
      %3232 = vrot.lane.b32.xlu0 %v3225, 122
      %v3233 = vpop.permute.xlu0 %3232
      %3234 = vrot.lane.b32.xlu0 %v3227, 122
      %v3235 = vpop.permute.xlu0 %3234
      %3239 = vrot.lane.b32.xlu0 %v3173, 120
      %v3240 = vpop.permute.xlu0 %3239
      %3241 = vrot.lane.b32.xlu0 %v3174, 120
      %v3242 = vpop.permute.xlu0 %3241
      %3243 = vrot.lane.b32.xlu0 %v3175, 120
      %v3244 = vpop.permute.xlu0 %3243
      %3245 = vrot.lane.b32.xlu0 %v3176, 120
      %v3246 = vpop.permute.xlu0 %3245
      %3250 = vrot.lane.b32.xlu0 %v3181, 118
      %v3251 = vpop.permute.xlu0 %3250
      %3252 = vrot.lane.b32.xlu0 %v3183, 118
      %v3253 = vpop.permute.xlu0 %3252
      %3254 = vrot.lane.b32.xlu0 %v3185, 118
      %v3255 = vpop.permute.xlu0 %3254
      %3256 = vrot.lane.b32.xlu0 %v3187, 118
      %v3257 = vpop.permute.xlu0 %3256
      %3258 = vrot.lane.b32.xlu0 %v3186, 118
      %v3259 = vpop.permute.xlu0 %3258
      %3263 = vrot.lane.b32.xlu0 %v3201, 116
      %v3264 = vpop.permute.xlu0 %3263
      %3265 = vrot.lane.b32.xlu0 %v3203, 116
      %v3266 = vpop.permute.xlu0 %3265
      %3267 = vrot.lane.b32.xlu0 %v3205, 116
      %v3268 = vpop.permute.xlu0 %3267
      %3269 = vrot.lane.b32.xlu0 %v3207, 116
      %v3270 = vpop.permute.xlu0 %3269
      %3271 = vrot.lane.b32.xlu0 %v3206, 116
      %v3272 = vpop.permute.xlu0 %3271
      %3276 = vrot.lane.b32.xlu0 %v3221, 114
      %v3277 = vpop.permute.xlu0 %3276
      %3278 = vrot.lane.b32.xlu0 %v3223, 114
      %v3279 = vpop.permute.xlu0 %3278
      %3280 = vrot.lane.b32.xlu0 %v3225, 114
      %v3281 = vpop.permute.xlu0 %3280
      %3282 = vrot.lane.b32.xlu0 %v3227, 114
      %v3283 = vpop.permute.xlu0 %3282
      %3287 = vrot.lane.b32.xlu0 %v3173, 112
      %v3288 = vpop.permute.xlu0 %3287
      %3289 = vrot.lane.b32.xlu0 %v3174, 112
      %v3290 = vpop.permute.xlu0 %3289
      %3291 = vrot.lane.b32.xlu0 %v3175, 112
      %v3292 = vpop.permute.xlu0 %3291
      %3293 = vrot.lane.b32.xlu0 %v3176, 112
      %v3294 = vpop.permute.xlu0 %3293
      %3298 = vrot.lane.b32.xlu0 %v3181, 110
      %v3299 = vpop.permute.xlu0 %3298
      %3300 = vrot.lane.b32.xlu0 %v3183, 110
      %v3301 = vpop.permute.xlu0 %3300
      %3302 = vrot.lane.b32.xlu0 %v3185, 110
      %v3303 = vpop.permute.xlu0 %3302
      %3304 = vrot.lane.b32.xlu0 %v3187, 110
      %v3305 = vpop.permute.xlu0 %3304
      %3306 = vrot.lane.b32.xlu0 %v3186, 110
      %v3307 = vpop.permute.xlu0 %3306
      %3311 = vrot.lane.b32.xlu0 %v3201, 108
      %v3312 = vpop.permute.xlu0 %3311
      %3313 = vrot.lane.b32.xlu0 %v3203, 108
      %v3314 = vpop.permute.xlu0 %3313
      %3315 = vrot.lane.b32.xlu0 %v3205, 108
      %v3316 = vpop.permute.xlu0 %3315
      %3317 = vrot.lane.b32.xlu0 %v3207, 108
      %v3318 = vpop.permute.xlu0 %3317
      %3319 = vrot.lane.b32.xlu0 %v3206, 108
      %v3320 = vpop.permute.xlu0 %3319
      %3324 = vrot.lane.b32.xlu0 %v3221, 106
      %v3325 = vpop.permute.xlu0 %3324
      %3326 = vrot.lane.b32.xlu0 %v3223, 106
      %v3327 = vpop.permute.xlu0 %3326
      %3328 = vrot.lane.b32.xlu0 %v3225, 106
      %v3329 = vpop.permute.xlu0 %3328
      %3330 = vrot.lane.b32.xlu0 %v3227, 106
      %v3331 = vpop.permute.xlu0 %3330
      %3335 = vrot.lane.b32.xlu0 %v3173, 104
      %v3336 = vpop.permute.xlu0 %3335
      %3337 = vrot.lane.b32.xlu0 %v3174, 104
      %v3338 = vpop.permute.xlu0 %3337
      %3339 = vrot.lane.b32.xlu0 %v3175, 104
      %v3340 = vpop.permute.xlu0 %3339
      %3341 = vrot.lane.b32.xlu0 %v3176, 104
      %v3342 = vpop.permute.xlu0 %3341
      %3346 = vrot.lane.b32.xlu0 %v3181, 102
      %v3347 = vpop.permute.xlu0 %3346
      %3348 = vrot.lane.b32.xlu0 %v3183, 102
      %v3349 = vpop.permute.xlu0 %3348
      %3350 = vrot.lane.b32.xlu0 %v3185, 102
      %v3351 = vpop.permute.xlu0 %3350
      %3352 = vrot.lane.b32.xlu0 %v3187, 102
      %v3353 = vpop.permute.xlu0 %3352
      %3354 = vrot.lane.b32.xlu0 %v3186, 102
      %v3355 = vpop.permute.xlu0 %3354
      %3359 = vrot.lane.b32.xlu0 %v3201, 100
      %v3360 = vpop.permute.xlu0 %3359
      %3361 = vrot.lane.b32.xlu0 %v3203, 100
      %v3362 = vpop.permute.xlu0 %3361
      %3363 = vrot.lane.b32.xlu0 %v3205, 100
      %v3364 = vpop.permute.xlu0 %3363
      %3365 = vrot.lane.b32.xlu0 %v3207, 100
      %v3366 = vpop.permute.xlu0 %3365
      %3367 = vrot.lane.b32.xlu0 %v3206, 100
      %v3368 = vpop.permute.xlu0 %3367
      %3372 = vrot.lane.b32.xlu0 %v3221, 98
      %v3373 = vpop.permute.xlu0 %3372
      %3374 = vrot.lane.b32.xlu0 %v3223, 98
      %v3375 = vpop.permute.xlu0 %3374
      %3376 = vrot.lane.b32.xlu0 %v3225, 98
      %v3377 = vpop.permute.xlu0 %3376
      %3378 = vrot.lane.b32.xlu0 %v3227, 98
      %v3379 = vpop.permute.xlu0 %3378
      %v3385 = vsel %vm2091, %v3176, %v3189
      %v3389 = vsel %vm1726, %v3197, %v3209
      %v3393 = vsel %vm2291, %v3217, %v3229
      %v3397 = vsel %vm2091, %v3246, %v3251
      %v3401 = vsel %vm1726, %v3259, %v3264
      %v3405 = vsel %vm2291, %v3272, %v3277
      %v3409 = vsel %vm2091, %v3294, %v3299
      %v3413 = vsel %vm1726, %v3307, %v3312
      %v3417 = vsel %vm2291, %v3320, %v3325
      %v3421 = vsel %vm2091, %v3342, %v3347
      %v3425 = vsel %vm1726, %v3355, %v3360
      %v3429 = vsel %vm2291, %v3368, %v3373
      %3437 = vrot.lane.b32.xlu0 %v3173, 96
      %v3438 = vpop.permute.xlu0 %3437
      %3439 = vrot.lane.b32.xlu0 %v3174, 96
      %v3440 = vpop.permute.xlu0 %3439
      %3441 = vrot.lane.b32.xlu0 %v3175, 96
      %v3442 = vpop.permute.xlu0 %3441
      %3443 = vrot.lane.b32.xlu0 %v3385, 96
      %v3444 = vpop.permute.xlu0 %3443
      %3445 = vrot.lane.b32.xlu0 %v3191, 96
      %v3446 = vpop.permute.xlu0 %3445
      %3447 = vrot.lane.b32.xlu0 %v3193, 96
      %v3448 = vpop.permute.xlu0 %3447
      %3449 = vrot.lane.b32.xlu0 %v3195, 96
      %v3450 = vpop.permute.xlu0 %3449
      %3451 = vrot.lane.b32.xlu0 %v3389, 96
      %v3452 = vpop.permute.xlu0 %3451
      %3453 = vrot.lane.b32.xlu0 %v3211, 96
      %v3454 = vpop.permute.xlu0 %3453
      %3455 = vrot.lane.b32.xlu0 %v3213, 96
      %v3456 = vpop.permute.xlu0 %3455
      %3457 = vrot.lane.b32.xlu0 %v3215, 96
      %v3458 = vpop.permute.xlu0 %3457
      %3459 = vrot.lane.b32.xlu0 %v3393, 96
      %v3460 = vpop.permute.xlu0 %3459
      %3461 = vrot.lane.b32.xlu0 %v3231, 96
      %v3462 = vpop.permute.xlu0 %3461
      %3463 = vrot.lane.b32.xlu0 %v3233, 96
      %v3464 = vpop.permute.xlu0 %3463
      %3465 = vrot.lane.b32.xlu0 %v3235, 96
      %v3466 = vpop.permute.xlu0 %3465
      %3467 = vrot.lane.b32.xlu0 %v3240, 96
      %v3468 = vpop.permute.xlu0 %3467
      %3469 = vrot.lane.b32.xlu0 %v3242, 96
      %v3470 = vpop.permute.xlu0 %3469
      %3471 = vrot.lane.b32.xlu0 %v3244, 96
      %v3472 = vpop.permute.xlu0 %3471
      %3473 = vrot.lane.b32.xlu0 %v3397, 96
      %v3474 = vpop.permute.xlu0 %3473
      %3475 = vrot.lane.b32.xlu0 %v3253, 96
      %v3476 = vpop.permute.xlu0 %3475
      %3477 = vrot.lane.b32.xlu0 %v3255, 96
      %v3478 = vpop.permute.xlu0 %3477
      %3479 = vrot.lane.b32.xlu0 %v3257, 96
      %v3480 = vpop.permute.xlu0 %3479
      %3481 = vrot.lane.b32.xlu0 %v3401, 96
      %v3482 = vpop.permute.xlu0 %3481
      %3483 = vrot.lane.b32.xlu0 %v3266, 96
      %v3484 = vpop.permute.xlu0 %3483
      %3485 = vrot.lane.b32.xlu0 %v3268, 96
      %v3486 = vpop.permute.xlu0 %3485
      %3487 = vrot.lane.b32.xlu0 %v3270, 96
      %v3488 = vpop.permute.xlu0 %3487
      %3489 = vrot.lane.b32.xlu0 %v3405, 96
      %v3490 = vpop.permute.xlu0 %3489
      %3491 = vrot.lane.b32.xlu0 %v3279, 96
      %v3492 = vpop.permute.xlu0 %3491
      %3493 = vrot.lane.b32.xlu0 %v3281, 96
      %v3494 = vpop.permute.xlu0 %3493
      %3495 = vrot.lane.b32.xlu0 %v3283, 96
      %v3496 = vpop.permute.xlu0 %3495
      %3497 = vrot.lane.b32.xlu0 %v3288, 96
      %v3498 = vpop.permute.xlu0 %3497
      %3499 = vrot.lane.b32.xlu0 %v3290, 96
      %v3500 = vpop.permute.xlu0 %3499
      %3501 = vrot.lane.b32.xlu0 %v3292, 96
      %v3502 = vpop.permute.xlu0 %3501
      %3503 = vrot.lane.b32.xlu0 %v3294, 96
      %v3504 = vpop.permute.xlu0 %3503
      %v3538 = vld [vmem:[%s9] sm:$0xff]
      %v3539 = vld [vmem:[%s9 + $0x8] sm:$0xff]
      %v3540 = vld [vmem:[%s9 + $0x10] sm:$0xff]
      %v3541 = vld [vmem:[%s9 + $0x18] sm:$0xff]
      %v3542 = vld [vmem:[%s9 + $0x20] sm:$0xff]
      %v3543 = vld [vmem:[%s9 + $0x28] sm:$0xff]
      %v3544 = vld [vmem:[%s9 + $0x30] sm:$0xff]
      %v3545 = vld [vmem:[%s9 + $0x38] sm:$0xff]
      %v3546 = vld [vmem:[%s9 + $0x40] sm:$0xff]
      %v3547 = vld [vmem:[%s9 + $0x48] sm:$0xff]
      %v3548 = vld [vmem:[%s9 + $0x50] sm:$0xff]
      %v3549 = vld [vmem:[%s9 + $0x58] sm:$0xff]
      %v3550 = vld [vmem:[%s9 + $0x60] sm:$0xff]
      %v3551 = vld [vmem:[%s9 + $0x68] sm:$0xff]
      %v3552 = vld [vmem:[%s9 + $0x70] sm:$0xff]
      %v3553 = vld [vmem:[%s9 + $0x78] sm:$0xff]
      %v3554 = vld [vmem:[%s9 + $0x80] sm:$0xff]
      %v3555 = vld [vmem:[%s9 + $0x88] sm:$0xff]
      %v3556 = vld [vmem:[%s9 + $0x90] sm:$0xff]
      %v3557 = vld [vmem:[%s9 + $0x98] sm:$0xff]
      %v3558 = vld [vmem:[%s9 + $0xa0] sm:$0xff]
      %v3559 = vld [vmem:[%s9 + $0xa8] sm:$0xff]
      %v3560 = vld [vmem:[%s9 + $0xb0] sm:$0xff]
      %v3561 = vld [vmem:[%s9 + $0xb8] sm:$0xff]
      %v3562 = vld [vmem:[%s9 + $0xc0] sm:$0xff]
      %v3563 = vld [vmem:[%s9 + $0xc8] sm:$0xff]
      %v3564 = vld [vmem:[%s9 + $0xd0] sm:$0xff]
      %v3565 = vld [vmem:[%s9 + $0xd8] sm:$0xff]
      %v3566 = vld [vmem:[%s9 + $0xe0] sm:$0xff]
      %v3567 = vld [vmem:[%s9 + $0xe8] sm:$0xff]
      %v3568 = vld [vmem:[%s9 + $0xf0] sm:$0xff]
      %v3569 = vld [vmem:[%s9 + $0xf8] sm:$0xff]
      %v3570 = vld [vmem:[%s9 + $0x100] sm:$0xff]
      %v3571 = vld [vmem:[%s9 + $0x108] sm:$0xff]
      %v3572 = vld [vmem:[%s9 + $0x110] sm:$0xff]
      %v3573 = vld [vmem:[%s9 + $0x118] sm:$0xff]
      %v3574 = vld [vmem:[%s9 + $0x120] sm:$0xff]
      %v3575 = vld [vmem:[%s9 + $0x128] sm:$0xff]
      %v3576 = vld [vmem:[%s9 + $0x130] sm:$0xff]
      %v3577 = vld [vmem:[%s9 + $0x138] sm:$0xff]
      %v3578 = vld [vmem:[%s9 + $0x140] sm:$0xff]
      %v3579 = vld [vmem:[%s9 + $0x148] sm:$0xff]
      %v3580 = vld [vmem:[%s9 + $0x150] sm:$0xff]
      %v3581 = vld [vmem:[%s9 + $0x158] sm:$0xff]
      %v3582 = vld [vmem:[%s9 + $0x160] sm:$0xff]
      %v3583 = vld [vmem:[%s9 + $0x168] sm:$0xff]
      %v3584 = vld [vmem:[%s9 + $0x170] sm:$0xff]
      %v3585 = vld [vmem:[%s9 + $0x178] sm:$0xff]
      %v3586 = vld [vmem:[%s9 + $0x180] sm:$0xff]
      %v3587 = vld [vmem:[%s9 + $0x188] sm:$0xff]
      %v3588 = vld [vmem:[%s9 + $0x190] sm:$0xff]
      %v3589 = vld [vmem:[%s9 + $0x198] sm:$0xff]
      %v3590 = vld [vmem:[%s9 + $0x1a0] sm:$0xff]
      %v3591 = vld [vmem:[%s9 + $0x1a8] sm:$0xff]
      %v3592 = vld [vmem:[%s9 + $0x1b0] sm:$0xff]
      %v3593 = vld [vmem:[%s9 + $0x1b8] sm:$0xff]
      %v3594 = vld [vmem:[%s9 + $0x1c0] sm:$0xff]
      %v3595 = vld [vmem:[%s9 + $0x1c8] sm:$0xff]
      %v3596 = vld [vmem:[%s9 + $0x1d0] sm:$0xff]
      %v3597 = vld [vmem:[%s9 + $0x1d8] sm:$0xff]
      %v3598 = vld [vmem:[%s9 + $0x1e0] sm:$0xff]
      %v3599 = vld [vmem:[%s9 + $0x1e8] sm:$0xff]
      %v3600 = vld [vmem:[%s9 + $0x1f0] sm:$0xff]
      %v3601 = vld [vmem:[%s9 + $0x1f8] sm:$0xff]
      %v3602 = vld [vmem:[%s9 + $0x200] sm:$0xff]
      %v3603 = vld [vmem:[%s9 + $0x208] sm:$0xff]
      %v3604 = vld [vmem:[%s9 + $0x210] sm:$0xff]
      %v3605 = vld [vmem:[%s9 + $0x218] sm:$0xff]
      %v3606 = vld [vmem:[%s9 + $0x220] sm:$0xff]
      %v3607 = vld [vmem:[%s9 + $0x228] sm:$0xff]
      %v3608 = vld [vmem:[%s9 + $0x230] sm:$0xff]
      %v3609 = vld [vmem:[%s9 + $0x238] sm:$0xff]
      %v3610 = vld [vmem:[%s9 + $0x240] sm:$0xff]
      %v3611 = vld [vmem:[%s9 + $0x248] sm:$0xff]
      %v3612 = vld [vmem:[%s9 + $0x250] sm:$0xff]
      %v3613 = vld [vmem:[%s9 + $0x258] sm:$0xff]
      %v3614 = vld [vmem:[%s9 + $0x260] sm:$0xff]
      %v3615 = vld [vmem:[%s9 + $0x268] sm:$0xff]
      %v3616 = vld [vmem:[%s9 + $0x270] sm:$0xff]
      %v3617 = vld [vmem:[%s9 + $0x278] sm:$0xff]
      %v3618 = vld [vmem:[%s9 + $0x280] sm:$0xff]
      %v3619 = vld [vmem:[%s9 + $0x288] sm:$0xff]
      %v3620 = vld [vmem:[%s9 + $0x290] sm:$0xff]
      %v3621 = vld [vmem:[%s9 + $0x298] sm:$0xff]
      %v3622 = vld [vmem:[%s9 + $0x2a0] sm:$0xff]
      %v3623 = vld [vmem:[%s9 + $0x2a8] sm:$0xff]
      %v3624 = vld [vmem:[%s9 + $0x2b0] sm:$0xff]
      %v3625 = vld [vmem:[%s9 + $0x2b8] sm:$0xff]
      %v3626 = vld [vmem:[%s9 + $0x2c0] sm:$0xff]
      %v3627 = vld [vmem:[%s9 + $0x2c8] sm:$0xff]
      %v3628 = vld [vmem:[%s9 + $0x2d0] sm:$0xff]
      %v3629 = vld [vmem:[%s9 + $0x2d8] sm:$0xff]
      %v3630 = vld [vmem:[%s9 + $0x2e0] sm:$0xff]
      %v3631 = vld [vmem:[%s9 + $0x2e8] sm:$0xff]
      %v3632 = vld [vmem:[%s9 + $0x2f0] sm:$0xff]
      %v3633 = vld [vmem:[%s9 + $0x2f8] sm:$0xff]
      %v3634 = vld [vmem:[%s9 + $0x300] sm:$0xff]
      %v3635 = vld [vmem:[%s9 + $0x308] sm:$0xff]
      %v3636 = vld [vmem:[%s9 + $0x310] sm:$0xff]
      %v3637 = vld [vmem:[%s9 + $0x318] sm:$0xff]
      %v3638 = vld [vmem:[%s9 + $0x320] sm:$0xff]
      %v3639 = vld [vmem:[%s9 + $0x328] sm:$0xff]
      %v3640 = vld [vmem:[%s9 + $0x330] sm:$0xff]
      %v3641 = vld [vmem:[%s9 + $0x338] sm:$0xff]
      %v3642 = vld [vmem:[%s9 + $0x340] sm:$0xff]
      %v3643 = vld [vmem:[%s9 + $0x348] sm:$0xff]
      %v3644 = vld [vmem:[%s9 + $0x350] sm:$0xff]
      %v3645 = vld [vmem:[%s9 + $0x358] sm:$0xff]
      %v3646 = vld [vmem:[%s9 + $0x360] sm:$0x77]
      %v3647 = vld [vmem:[%s9 + $0x368] sm:$0x77]
      %v3648 = vld [vmem:[%s9 + $0x370] sm:$0x77]
      %v3649 = vld [vmem:[%s9 + $0x378] sm:$0x77]
      %v3650 = vld [vmem:[%s9 + $0x380] sm:$0x77]
      %v3651 = vld [vmem:[%s9 + $0x388] sm:$0x77]
      %v3652 = vld [vmem:[%s10] sm:$0xff]
      %v3653 = vld [vmem:[%s10 + $0x8] sm:$0xff]
      %v3654 = vld [vmem:[%s10 + $0x10] sm:$0xff]
      %v3655 = vld [vmem:[%s10 + $0x18] sm:$0xff]
      %v3656 = vld [vmem:[%s10 + $0x20] sm:$0xff]
      %v3657 = vld [vmem:[%s10 + $0x28] sm:$0xff]
      %v3658 = vld [vmem:[%s10 + $0x30] sm:$0xff]
      %v3659 = vld [vmem:[%s10 + $0x38] sm:$0xff]
      %v3660 = vld [vmem:[%s10 + $0x40] sm:$0xff]
      %v3661 = vld [vmem:[%s10 + $0x48] sm:$0xff]
      %v3662 = vld [vmem:[%s10 + $0x50] sm:$0xff]
      %v3663 = vld [vmem:[%s10 + $0x58] sm:$0xff]
      %v3664 = vld [vmem:[%s10 + $0x60] sm:$0xff]
      %v3665 = vld [vmem:[%s10 + $0x68] sm:$0xff]
      %v3666 = vld [vmem:[%s10 + $0x70] sm:$0xff]
      %v3667 = vld [vmem:[%s10 + $0x78] sm:$0xff]
      %v3668 = vld [vmem:[%s10 + $0x80] sm:$0xff]
      %v3669 = vld [vmem:[%s10 + $0x88] sm:$0xff]
      %v3670 = vld [vmem:[%s10 + $0x90] sm:$0x3f]
      %3672 = vset.pattern.permute.xlu0 0
      %3673 = vperm.xlu0 %3672, %v3652
      %v3674 = vpop.permute.xlu0 %3673
      %3677 = vset.pattern.permute.xlu0 0
      %3678 = vperm.xlu0 %3677, %v3653
      %v3679 = vpop.permute.xlu0 %3678
      %3682 = vset.pattern.permute.xlu0 0
      %3683 = vperm.xlu0 %3682, %v3654
      %v3684 = vpop.permute.xlu0 %3683
      %3687 = vset.pattern.permute.xlu0 0
      %3688 = vperm.xlu0 %3687, %v3655
      %v3689 = vpop.permute.xlu0 %3688
      %3692 = vset.pattern.permute.xlu0 0
      %3693 = vperm.xlu0 %3692, %v3656
      %v3694 = vpop.permute.xlu0 %3693
      %3697 = vset.pattern.permute.xlu0 0
      %3698 = vperm.xlu0 %3697, %v3657
      %v3699 = vpop.permute.xlu0 %3698
      %3702 = vset.pattern.permute.xlu0 0
      %3703 = vperm.xlu0 %3702, %v3658
      %v3704 = vpop.permute.xlu0 %3703
      %3707 = vset.pattern.permute.xlu0 0
      %3708 = vperm.xlu0 %3707, %v3659
      %v3709 = vpop.permute.xlu0 %3708
      %3712 = vset.pattern.permute.xlu0 0
      %3713 = vperm.xlu0 %3712, %v3660
      %v3714 = vpop.permute.xlu0 %3713
      %3717 = vset.pattern.permute.xlu0 0
      %3718 = vperm.xlu0 %3717, %v3661
      %v3719 = vpop.permute.xlu0 %3718
      %3722 = vset.pattern.permute.xlu0 0
      %3723 = vperm.xlu0 %3722, %v3662
      %v3724 = vpop.permute.xlu0 %3723
      %3727 = vset.pattern.permute.xlu0 0
      %3728 = vperm.xlu0 %3727, %v3663
      %v3729 = vpop.permute.xlu0 %3728
      %3732 = vset.pattern.permute.xlu0 0
      %3733 = vperm.xlu0 %3732, %v3664
      %v3734 = vpop.permute.xlu0 %3733
      %3737 = vset.pattern.permute.xlu0 0
      %3738 = vperm.xlu0 %3737, %v3665
      %v3739 = vpop.permute.xlu0 %3738
      %3742 = vset.pattern.permute.xlu0 0
      %3743 = vperm.xlu0 %3742, %v3666
      %v3744 = vpop.permute.xlu0 %3743
      %3747 = vset.pattern.permute.xlu0 0
      %3748 = vperm.xlu0 %3747, %v3667
      %v3749 = vpop.permute.xlu0 %3748
      %3752 = vset.pattern.permute.xlu0 0
      %3753 = vperm.xlu0 %3752, %v3668
      %v3754 = vpop.permute.xlu0 %3753
      %3757 = vset.pattern.permute.xlu0 0
      %3758 = vperm.xlu0 %3757, %v3669
      %v3759 = vpop.permute.xlu0 %3758
      %3762 = vset.pattern.permute.xlu0 0
      %3763 = vperm.xlu0 %3762, %v3670
      %v3764 = vpop.permute.xlu0 %3763
      %v3880 = vunpack.c.l.b16 %v3538
      %v3881 = vunpack.c.h.b16 %v3538
      %v3882 = vunpack.c.l.b16 %v3539
      %v3883 = vunpack.c.h.b16 %v3539
      %v3884 = vunpack.c.l.b16 %v3540
      %v3885 = vunpack.c.h.b16 %v3540
      %v3886 = vunpack.c.l.b16 %v3541
      %v3887 = vunpack.c.h.b16 %v3541
      %v3888 = vunpack.c.l.b16 %v3542
      %v3889 = vunpack.c.h.b16 %v3542
      %v3890 = vunpack.c.l.b16 %v3543
      %v3891 = vunpack.c.h.b16 %v3543
      %v3892 = vunpack.c.l.b16 %v3544
      %v3893 = vunpack.c.h.b16 %v3544
      %v3894 = vunpack.c.l.b16 %v3545
      %v3895 = vunpack.c.h.b16 %v3545
      %v3896 = vunpack.c.l.b16 %v3546
      %v3897 = vunpack.c.h.b16 %v3546
      %v3898 = vunpack.c.l.b16 %v3547
      %v3899 = vunpack.c.h.b16 %v3547
      %v3900 = vunpack.c.l.b16 %v3548
      %v3901 = vunpack.c.h.b16 %v3548
      %v3902 = vunpack.c.l.b16 %v3549
      %v3903 = vunpack.c.h.b16 %v3549
      %v3904 = vunpack.c.l.b16 %v3550
      %v3905 = vunpack.c.h.b16 %v3550
      %v3906 = vunpack.c.l.b16 %v3551
      %v3907 = vunpack.c.h.b16 %v3551
      %v3908 = vunpack.c.l.b16 %v3552
      %v3909 = vunpack.c.h.b16 %v3552
      %v3910 = vunpack.c.l.b16 %v3553
      %v3911 = vunpack.c.h.b16 %v3553
      %v3912 = vunpack.c.l.b16 %v3554
      %v3913 = vunpack.c.h.b16 %v3554
      %v3914 = vunpack.c.l.b16 %v3555
      %v3915 = vunpack.c.h.b16 %v3555
      %v3916 = vunpack.c.l.b16 %v3556
      %v3917 = vunpack.c.h.b16 %v3556
      %v3918 = vunpack.c.l.b16 %v3557
      %v3919 = vunpack.c.h.b16 %v3557
      %v3920 = vunpack.c.l.b16 %v3558
      %v3921 = vunpack.c.h.b16 %v3558
      %v3922 = vunpack.c.l.b16 %v3559
      %v3923 = vunpack.c.h.b16 %v3559
      %v3924 = vunpack.c.l.b16 %v3560
      %v3925 = vunpack.c.h.b16 %v3560
      %v3926 = vunpack.c.l.b16 %v3561
      %v3927 = vunpack.c.h.b16 %v3561
      %v3928 = vunpack.c.l.b16 %v3562
      %v3929 = vunpack.c.h.b16 %v3562
      %v3930 = vunpack.c.l.b16 %v3563
      %v3931 = vunpack.c.h.b16 %v3563
      %v3932 = vunpack.c.l.b16 %v3564
      %v3933 = vunpack.c.h.b16 %v3564
      %v3934 = vunpack.c.l.b16 %v3565
      %v3935 = vunpack.c.h.b16 %v3565
      %v3936 = vunpack.c.l.b16 %v3566
      %v3937 = vunpack.c.h.b16 %v3566
      %v3938 = vunpack.c.l.b16 %v3567
      %v3939 = vunpack.c.h.b16 %v3567
      %v3940 = vunpack.c.l.b16 %v3568
      %v3941 = vunpack.c.h.b16 %v3568
      %v3942 = vunpack.c.l.b16 %v3569
      %v3943 = vunpack.c.h.b16 %v3569
      %v3944 = vunpack.c.l.b16 %v3570
      %v3945 = vunpack.c.h.b16 %v3570
      %v3946 = vunpack.c.l.b16 %v3571
      %v3947 = vunpack.c.h.b16 %v3571
      %v3948 = vunpack.c.l.b16 %v3572
      %v3949 = vunpack.c.h.b16 %v3572
      %v3950 = vunpack.c.l.b16 %v3573
      %v3951 = vunpack.c.h.b16 %v3573
      %v3952 = vunpack.c.l.b16 %v3574
      %v3953 = vunpack.c.h.b16 %v3574
      %v3954 = vunpack.c.l.b16 %v3575
      %v3955 = vunpack.c.h.b16 %v3575
      %v3956 = vunpack.c.l.b16 %v3576
      %v3957 = vunpack.c.h.b16 %v3576
      %v3958 = vunpack.c.l.b16 %v3577
      %v3959 = vunpack.c.h.b16 %v3577
      %v3960 = vunpack.c.l.b16 %v3578
      %v3961 = vunpack.c.h.b16 %v3578
      %v3962 = vunpack.c.l.b16 %v3579
      %v3963 = vunpack.c.h.b16 %v3579
      %v3964 = vunpack.c.l.b16 %v3580
      %v3965 = vunpack.c.h.b16 %v3580
      %v3966 = vunpack.c.l.b16 %v3581
      %v3967 = vunpack.c.h.b16 %v3581
      %v3968 = vunpack.c.l.b16 %v3582
      %v3969 = vunpack.c.h.b16 %v3582
      %v3970 = vunpack.c.l.b16 %v3583
      %v3971 = vunpack.c.h.b16 %v3583
      %v3972 = vunpack.c.l.b16 %v3584
      %v3973 = vunpack.c.h.b16 %v3584
      %v3974 = vunpack.c.l.b16 %v3585
      %v3975 = vunpack.c.h.b16 %v3585
      %v3976 = vunpack.c.l.b16 %v3586
      %v3977 = vunpack.c.h.b16 %v3586
      %v3978 = vunpack.c.l.b16 %v3587
      %v3979 = vunpack.c.h.b16 %v3587
      %v3980 = vunpack.c.l.b16 %v3588
      %v3981 = vunpack.c.h.b16 %v3588
      %v3982 = vunpack.c.l.b16 %v3589
      %v3983 = vunpack.c.h.b16 %v3589
      %v3984 = vunpack.c.l.b16 %v3590
      %v3985 = vunpack.c.h.b16 %v3590
      %v3986 = vunpack.c.l.b16 %v3591
      %v3987 = vunpack.c.h.b16 %v3591
      %v3988 = vunpack.c.l.b16 %v3592
      %v3989 = vunpack.c.h.b16 %v3592
      %v3990 = vunpack.c.l.b16 %v3593
      %v3991 = vunpack.c.h.b16 %v3593
      %v3992 = vunpack.c.l.b16 %v3594
      %v3993 = vunpack.c.h.b16 %v3594
      %v3994 = vunpack.c.l.b16 %v3595
      %v3995 = vunpack.c.h.b16 %v3595
      %v3996 = vunpack.c.l.b16 %v3596
      %v3997 = vunpack.c.h.b16 %v3596
      %v3998 = vunpack.c.l.b16 %v3597
      %v3999 = vunpack.c.h.b16 %v3597
      %v4000 = vunpack.c.l.b16 %v3598
      %v4001 = vunpack.c.h.b16 %v3598
      %v4002 = vunpack.c.l.b16 %v3599
      %v4003 = vunpack.c.h.b16 %v3599
      %v4004 = vunpack.c.l.b16 %v3600
      %v4005 = vunpack.c.h.b16 %v3600
      %v4006 = vunpack.c.l.b16 %v3601
      %v4007 = vunpack.c.h.b16 %v3601
      %v4008 = vunpack.c.l.b16 %v3602
      %v4009 = vunpack.c.h.b16 %v3602
      %v4010 = vunpack.c.l.b16 %v3603
      %v4011 = vunpack.c.h.b16 %v3603
      %v4012 = vunpack.c.l.b16 %v3604
      %v4013 = vunpack.c.h.b16 %v3604
      %v4014 = vunpack.c.l.b16 %v3605
      %v4015 = vunpack.c.h.b16 %v3605
      %v4016 = vunpack.c.l.b16 %v3606
      %v4017 = vunpack.c.h.b16 %v3606
      %v4018 = vunpack.c.l.b16 %v3607
      %v4019 = vunpack.c.h.b16 %v3607
      %v4020 = vunpack.c.l.b16 %v3608
      %v4021 = vunpack.c.h.b16 %v3608
      %v4022 = vunpack.c.l.b16 %v3609
      %v4023 = vunpack.c.h.b16 %v3609
      %v4024 = vunpack.c.l.b16 %v3610
      %v4025 = vunpack.c.h.b16 %v3610
      %v4026 = vunpack.c.l.b16 %v3611
      %v4027 = vunpack.c.h.b16 %v3611
      %v4028 = vunpack.c.l.b16 %v3612
      %v4029 = vunpack.c.h.b16 %v3612
      %v4030 = vunpack.c.l.b16 %v3613
      %v4031 = vunpack.c.h.b16 %v3613
      %v4032 = vunpack.c.l.b16 %v3614
      %v4033 = vunpack.c.h.b16 %v3614
      %v4034 = vunpack.c.l.b16 %v3615
      %v4035 = vunpack.c.h.b16 %v3615
      %v4036 = vunpack.c.l.b16 %v3616
      %v4037 = vunpack.c.h.b16 %v3616
      %v4038 = vunpack.c.l.b16 %v3617
      %v4039 = vunpack.c.h.b16 %v3617
      %v4040 = vunpack.c.l.b16 %v3618
      %v4041 = vunpack.c.h.b16 %v3618
      %v4042 = vunpack.c.l.b16 %v3619
      %v4043 = vunpack.c.h.b16 %v3619
      %v4044 = vunpack.c.l.b16 %v3620
      %v4045 = vunpack.c.h.b16 %v3620
      %v4046 = vunpack.c.l.b16 %v3621
      %v4047 = vunpack.c.h.b16 %v3621
      %v4048 = vunpack.c.l.b16 %v3622
      %v4049 = vunpack.c.h.b16 %v3622
      %v4050 = vunpack.c.l.b16 %v3623
      %v4051 = vunpack.c.h.b16 %v3623
      %v4052 = vunpack.c.l.b16 %v3624
      %v4053 = vunpack.c.h.b16 %v3624
      %v4054 = vunpack.c.l.b16 %v3625
      %v4055 = vunpack.c.h.b16 %v3625
      %v4056 = vunpack.c.l.b16 %v3626
      %v4057 = vunpack.c.h.b16 %v3626
      %v4058 = vunpack.c.l.b16 %v3627
      %v4059 = vunpack.c.h.b16 %v3627
      %v4060 = vunpack.c.l.b16 %v3628
      %v4061 = vunpack.c.h.b16 %v3628
      %v4062 = vunpack.c.l.b16 %v3629
      %v4063 = vunpack.c.h.b16 %v3629
      %v4064 = vunpack.c.l.b16 %v3630
      %v4065 = vunpack.c.h.b16 %v3630
      %v4066 = vunpack.c.l.b16 %v3631
      %v4067 = vunpack.c.h.b16 %v3631
      %v4068 = vunpack.c.l.b16 %v3632
      %v4069 = vunpack.c.h.b16 %v3632
      %v4070 = vunpack.c.l.b16 %v3633
      %v4071 = vunpack.c.h.b16 %v3633
      %v4072 = vunpack.c.l.b16 %v3634
      %v4073 = vunpack.c.h.b16 %v3634
      %v4074 = vunpack.c.l.b16 %v3635
      %v4075 = vunpack.c.h.b16 %v3635
      %v4076 = vunpack.c.l.b16 %v3636
      %v4077 = vunpack.c.h.b16 %v3636
      %v4078 = vunpack.c.l.b16 %v3637
      %v4079 = vunpack.c.h.b16 %v3637
      %v4080 = vunpack.c.l.b16 %v3638
      %v4081 = vunpack.c.h.b16 %v3638
      %v4082 = vunpack.c.l.b16 %v3639
      %v4083 = vunpack.c.h.b16 %v3639
      %v4084 = vunpack.c.l.b16 %v3640
      %v4085 = vunpack.c.h.b16 %v3640
      %v4086 = vunpack.c.l.b16 %v3641
      %v4087 = vunpack.c.h.b16 %v3641
      %v4088 = vunpack.c.l.b16 %v3642
      %v4089 = vunpack.c.h.b16 %v3642
      %v4090 = vunpack.c.l.b16 %v3643
      %v4091 = vunpack.c.h.b16 %v3643
      %v4092 = vunpack.c.l.b16 %v3644
      %v4093 = vunpack.c.h.b16 %v3644
      %v4094 = vunpack.c.l.b16 %v3645
      %v4095 = vunpack.c.h.b16 %v3645
      %v4096 = vunpack.c.l.b16 %v3646
      %v4097 = vunpack.c.h.b16 %v3646
      %v4098 = vunpack.c.l.b16 %v3647
      %v4099 = vunpack.c.h.b16 %v3647
      %v4100 = vunpack.c.l.b16 %v3648
      %v4101 = vunpack.c.h.b16 %v3648
      %v4102 = vunpack.c.l.b16 %v3649
      %v4103 = vunpack.c.h.b16 %v3649
      %v4104 = vunpack.c.l.b16 %v3650
      %v4105 = vunpack.c.h.b16 %v3650
      %v4106 = vunpack.c.l.b16 %v3651
      %v4107 = vunpack.c.h.b16 %v3651
      %v4108 = vpack.c.b16 %v3892, %v3880
      %v4109 = vpack.c.b16 %v3893, %v3881
      %v4110 = vpack.c.b16 %v3894, %v3882
      %v4111 = vpack.c.b16 %v3895, %v3883
      %v4112 = vpack.c.b16 %v3896, %v3884
      %v4113 = vpack.c.b16 %v3897, %v3885
      %v4114 = vpack.c.b16 %v3898, %v3886
      %v4115 = vpack.c.b16 %v3899, %v3887
      %v4116 = vpack.c.b16 %v3900, %v3888
      %v4117 = vpack.c.b16 %v3901, %v3889
      %v4118 = vpack.c.b16 %v3902, %v3890
      %v4119 = vpack.c.b16 %v3903, %v3891
      %v4120 = vpack.c.b16 %v3916, %v3904
      %v4121 = vpack.c.b16 %v3917, %v3905
      %v4122 = vpack.c.b16 %v3918, %v3906
      %v4123 = vpack.c.b16 %v3919, %v3907
      %v4124 = vpack.c.b16 %v3920, %v3908
      %v4125 = vpack.c.b16 %v3921, %v3909
      %v4126 = vpack.c.b16 %v3922, %v3910
      %v4127 = vpack.c.b16 %v3923, %v3911
      %v4128 = vpack.c.b16 %v3924, %v3912
      %v4129 = vpack.c.b16 %v3925, %v3913
      %v4130 = vpack.c.b16 %v3926, %v3914
      %v4131 = vpack.c.b16 %v3927, %v3915
      %v4132 = vpack.c.b16 %v3940, %v3928
      %v4133 = vpack.c.b16 %v3941, %v3929
      %v4134 = vpack.c.b16 %v3942, %v3930
      %v4135 = vpack.c.b16 %v3943, %v3931
      %v4136 = vpack.c.b16 %v3944, %v3932
      %v4137 = vpack.c.b16 %v3945, %v3933
      %v4138 = vpack.c.b16 %v3946, %v3934
      %v4139 = vpack.c.b16 %v3947, %v3935
      %v4140 = vpack.c.b16 %v3948, %v3936
      %v4141 = vpack.c.b16 %v3949, %v3937
      %v4142 = vpack.c.b16 %v3950, %v3938
      %v4143 = vpack.c.b16 %v3951, %v3939
      %v4144 = vpack.c.b16 %v3964, %v3952
      %v4145 = vpack.c.b16 %v3965, %v3953
      %v4146 = vpack.c.b16 %v3966, %v3954
      %v4147 = vpack.c.b16 %v3967, %v3955
      %v4148 = vpack.c.b16 %v3968, %v3956
      %v4149 = vpack.c.b16 %v3969, %v3957
      %v4150 = vpack.c.b16 %v3970, %v3958
      %v4151 = vpack.c.b16 %v3971, %v3959
      %v4152 = vpack.c.b16 %v3972, %v3960
      %v4153 = vpack.c.b16 %v3973, %v3961
      %v4154 = vpack.c.b16 %v3974, %v3962
      %v4155 = vpack.c.b16 %v3975, %v3963
      %v4156 = vpack.c.b16 %v3988, %v3976
      %v4157 = vpack.c.b16 %v3989, %v3977
      %v4158 = vpack.c.b16 %v3990, %v3978
      %v4159 = vpack.c.b16 %v3991, %v3979
      %v4160 = vpack.c.b16 %v3992, %v3980
      %v4161 = vpack.c.b16 %v3993, %v3981
      %v4162 = vpack.c.b16 %v3994, %v3982
      %v4163 = vpack.c.b16 %v3995, %v3983
      %v4164 = vpack.c.b16 %v3996, %v3984
      %v4165 = vpack.c.b16 %v3997, %v3985
      %v4166 = vpack.c.b16 %v3998, %v3986
      %v4167 = vpack.c.b16 %v3999, %v3987
      %v4168 = vpack.c.b16 %v4012, %v4000
      %v4169 = vpack.c.b16 %v4013, %v4001
      %v4170 = vpack.c.b16 %v4014, %v4002
      %v4171 = vpack.c.b16 %v4015, %v4003
      %v4172 = vpack.c.b16 %v4016, %v4004
      %v4173 = vpack.c.b16 %v4017, %v4005
      %v4174 = vpack.c.b16 %v4018, %v4006
      %v4175 = vpack.c.b16 %v4019, %v4007
      %v4176 = vpack.c.b16 %v4020, %v4008
      %v4177 = vpack.c.b16 %v4021, %v4009
      %v4178 = vpack.c.b16 %v4022, %v4010
      %v4179 = vpack.c.b16 %v4023, %v4011
      %v4180 = vpack.c.b16 %v4036, %v4024
      %v4181 = vpack.c.b16 %v4037, %v4025
      %v4182 = vpack.c.b16 %v4038, %v4026
      %v4183 = vpack.c.b16 %v4039, %v4027
      %v4184 = vpack.c.b16 %v4040, %v4028
      %v4185 = vpack.c.b16 %v4041, %v4029
      %v4186 = vpack.c.b16 %v4042, %v4030
      %v4187 = vpack.c.b16 %v4043, %v4031
      %v4188 = vpack.c.b16 %v4044, %v4032
      %v4189 = vpack.c.b16 %v4045, %v4033
      %v4190 = vpack.c.b16 %v4046, %v4034
      %v4191 = vpack.c.b16 %v4047, %v4035
      %v4192 = vpack.c.b16 %v4060, %v4048
      %v4193 = vpack.c.b16 %v4061, %v4049
      %v4194 = vpack.c.b16 %v4062, %v4050
      %v4195 = vpack.c.b16 %v4063, %v4051
      %v4196 = vpack.c.b16 %v4064, %v4052
      %v4197 = vpack.c.b16 %v4065, %v4053
      %v4198 = vpack.c.b16 %v4066, %v4054
      %v4199 = vpack.c.b16 %v4067, %v4055
      %v4200 = vpack.c.b16 %v4068, %v4056
      %v4201 = vpack.c.b16 %v4069, %v4057
      %v4202 = vpack.c.b16 %v4070, %v4058
      %v4203 = vpack.c.b16 %v4071, %v4059
      %v4204 = vpack.c.b16 %v4084, %v4072
      %v4205 = vpack.c.b16 %v4085, %v4073
      %v4206 = vpack.c.b16 %v4086, %v4074
      %v4207 = vpack.c.b16 %v4087, %v4075
      %v4208 = vpack.c.b16 %v4088, %v4076
      %v4209 = vpack.c.b16 %v4089, %v4077
      %v4210 = vpack.c.b16 %v4090, %v4078
      %v4211 = vpack.c.b16 %v4091, %v4079
      %v4212 = vpack.c.b16 %v4092, %v4080
      %v4213 = vpack.c.b16 %v4093, %v4081
      %v4214 = vpack.c.b16 %v4094, %v4082
      %v4215 = vpack.c.b16 %v4095, %v4083
      %v4216 = vpack.c.b16 %v4096, %v4096
      %v4217 = vpack.c.b16 %v4097, %v4097
      %v4218 = vpack.c.b16 %v4098, %v4098
      %v4219 = vpack.c.b16 %v4099, %v4099
      %v4220 = vpack.c.b16 %v4100, %v4100
      %v4221 = vpack.c.b16 %v4101, %v4101
      %v4222 = vpack.c.b16 %v4102, %v4102
      %v4223 = vpack.c.b16 %v4103, %v4103
      %v4224 = vpack.c.b16 %v4104, %v4104
      %v4225 = vpack.c.b16 %v4105, %v4105
      %v4226 = vpack.c.b16 %v4106, %v4106
      %v4227 = vpack.c.b16 %v4107, %v4107
      %vm4338 = vcmask 752640
      %v4340 = vsel %vm4338, %v4119, 0
      %v4343 = vsel %vm4338, %v4131, 0
      %v4346 = vsel %vm4338, %v4143, 0
      %v4349 = vsel %vm4338, %v4155, 0
      %v4352 = vsel %vm4338, %v4167, 0
      %v4355 = vsel %vm4338, %v4179, 0
      %v4358 = vsel %vm4338, %v4191, 0
      %v4361 = vsel %vm4338, %v4203, 0
      %v4364 = vsel %vm4338, %v4215, 0
      %v4367 = vsel %vm4338, %v4227, 0
      %v4370 = vsel %vm2091, %v3504, 0
      %4372 = vmatprep.subr.bf16.mxu0 0
      %4373 = vmatpush1.bf16.msra.mxu0 %v3173
      %4374 = vmatprep.subr.bf16.mxu0 0
      %4375 = vmatpush1.bf16.msra.mxu0 %v3174
      %4376 = vmatprep.subr.bf16.mxu0 0
      %4377 = vmatpush1.bf16.msra.mxu0 %v3175
      %4378 = vmatprep.subr.bf16.mxu0 0
      %4379 = vmatpush1.bf16.msra.mxu0 %v3385
      %4380 = vmatprep.subr.bf16.mxu0 0
      %4381 = vmatpush1.bf16.msra.mxu0 %v3191
      %4382 = vmatprep.subr.bf16.mxu0 0
      %4383 = vmatpush1.bf16.msra.mxu0 %v3193
      %4384 = vmatprep.subr.bf16.mxu0 0
      %4385 = vmatpush1.bf16.msra.mxu0 %v3195
      %4386 = vmatprep.subr.bf16.mxu0 0
      %4387 = vmatpush1.bf16.msra.mxu0 %v3389
      %4388 = vmatprep.subr.bf16.mxu0 0
      %4389 = vmatpush1.bf16.msra.mxu0 %v3211
      %4390 = vmatprep.subr.bf16.mxu0 0
      %4391 = vmatpush1.bf16.msra.mxu0 %v3213
      %4392 = vmatprep.subr.bf16.mxu0 0
      %4393 = vmatpush1.bf16.msra.mxu0 %v3215
      %4394 = vmatprep.subr.bf16.mxu0 0
      %4395 = vmatpush1.bf16.msra.mxu0 %v3393
      %4396 = vmatprep.subr.bf16.mxu0 0
      %4397 = vmatpush1.bf16.msra.mxu0 %v3231
      %4398 = vmatprep.subr.bf16.mxu0 0
      %4399 = vmatpush1.bf16.msra.mxu0 %v3233
      %4400 = vmatprep.subr.bf16.mxu0 0
      %4401 = vmatpush1.bf16.msra.mxu0 %v3235
      %4402 = vmatprep.subr.bf16.mxu0 0
      %4403 = vmatpush1.bf16.msra.mxu0 %v3240
      %4404 = vmatprep.mubr.bf16.mxu0 %v4109
      %4405 = vmatmul.mubr.bf16.gmra.mrb[0].mxu0 %v4108
      %v4406 = vpop.f32.mrb[0].mxu0
      %v4407 = vadd.f32 %v3674, %v4406
      %v4408 = vpop.f32.mrb[0].mxu0
      %v4409 = vpop.f32.mrb[0].mxu0
      %v4410 = vadd.f32 %v3679, %v4409
      %v4411 = vpop.f32.mrb[0].mxu0
      %4412 = vmatprep.mubr.bf16.mxu0 %v4121
      %4413 = vmatmul.mubr.bf16.gmra.mrb[0].mxu0 %v4120
      %v4414 = vpop.f32.mrb[0].mxu0
      %v4415 = vadd.f32 %v3684, %v4414
      %v4416 = vpop.f32.mrb[0].mxu0
      %v4417 = vpop.f32.mrb[0].mxu0
      %v4418 = vadd.f32 %v3689, %v4417
      %v4419 = vpop.f32.mrb[0].mxu0
      %4420 = vmatprep.mubr.bf16.mxu0 %v4133
      %4421 = vmatmul.mubr.bf16.gmra.mrb[0].mxu0 %v4132
      %v4422 = vpop.f32.mrb[0].mxu0
      %v4423 = vadd.f32 %v3694, %v4422
      %v4424 = vpop.f32.mrb[0].mxu0
      %v4425 = vpop.f32.mrb[0].mxu0
      %v4426 = vadd.f32 %v3699, %v4425
      %v4427 = vpop.f32.mrb[0].mxu0
      %4428 = vmatprep.mubr.bf16.mxu0 %v4145
      %4429 = vmatmul.mubr.bf16.gmra.mrb[0].mxu0 %v4144
      %v4430 = vpop.f32.mrb[0].mxu0
      %v4431 = vadd.f32 %v3704, %v4430
      %v4432 = vpop.f32.mrb[0].mxu0
      %v4433 = vpop.f32.mrb[0].mxu0
      %v4434 = vadd.f32 %v3709, %v4433
      %v4435 = vpop.f32.mrb[0].mxu0
      %4436 = vmatprep.mubr.bf16.mxu0 %v4157
      %4437 = vmatmul.mubr.bf16.gmra.mrb[0].mxu0 %v4156
      %v4438 = vpop.f32.mrb[0].mxu0
      %v4439 = vadd.f32 %v3714, %v4438
      %v4440 = vpop.f32.mrb[0].mxu0
      %v4441 = vpop.f32.mrb[0].mxu0
      %v4442 = vadd.f32 %v3719, %v4441
      %v4443 = vpop.f32.mrb[0].mxu0
      %4444 = vmatprep.mubr.bf16.mxu0 %v4169
      %4445 = vmatmul.mubr.bf16.gmra.mrb[0].mxu0 %v4168
      %v4446 = vpop.f32.mrb[0].mxu0
      %v4447 = vadd.f32 %v3724, %v4446
      %v4448 = vpop.f32.mrb[0].mxu0
      %v4449 = vpop.f32.mrb[0].mxu0
      %v4450 = vadd.f32 %v3729, %v4449
      %v4451 = vpop.f32.mrb[0].mxu0
      %4452 = vmatprep.mubr.bf16.mxu0 %v4181
      %4453 = vmatmul.mubr.bf16.gmra.mrb[0].mxu0 %v4180
      %v4454 = vpop.f32.mrb[0].mxu0
      %v4455 = vadd.f32 %v3734, %v4454
      %v4456 = vpop.f32.mrb[0].mxu0
      %v4457 = vpop.f32.mrb[0].mxu0
      %v4458 = vadd.f32 %v3739, %v4457
      %v4459 = vpop.f32.mrb[0].mxu0
      %4460 = vmatprep.mubr.bf16.mxu0 %v4193
      %4461 = vmatmul.mubr.bf16.gmra.mrb[0].mxu0 %v4192
      %v4462 = vpop.f32.mrb[0].mxu0
      %v4463 = vadd.f32 %v3744, %v4462
      %v4464 = vpop.f32.mrb[0].mxu0
      %v4465 = vpop.f32.mrb[0].mxu0
      %v4466 = vadd.f32 %v3749, %v4465
      %v4467 = vpop.f32.mrb[0].mxu0
      %4468 = vmatprep.mubr.bf16.mxu0 %v4205
      %4469 = vmatmul.mubr.bf16.gmra.mrb[0].mxu0 %v4204
      %v4470 = vpop.f32.mrb[0].mxu0
      %v4471 = vadd.f32 %v3754, %v4470
      %v4472 = vpop.f32.mrb[0].mxu0
      %v4473 = vpop.f32.mrb[0].mxu0
      %v4474 = vadd.f32 %v3759, %v4473
      %v4475 = vpop.f32.mrb[0].mxu0
      %4476 = vmatprep.mubr.bf16.mxu0 %v4217
      %4477 = vmatmul.mubr.bf16.gmra.mrb[0].mxu0 %v4216
      %v4478 = vpop.f32.mrb[0].mxu0
      %v4479 = vadd.f32 %v3764, %v4478
      %v4480 = vpop.f32.mrb[0].mxu0
      %v4481 = vpop.f32.mrb[0].mxu0
      %v4482 = vpop.f32.mrb[0].mxu0
      %4483 = vdwg.mxu0
      %4484 = vmatprep.subr.bf16.mxu0 0
      %4485 = vmatpush1.bf16.msra.mxu0 %v3242
      %4486 = vmatprep.subr.bf16.mxu0 0
      %4487 = vmatpush1.bf16.msra.mxu0 %v3244
      %4488 = vmatprep.subr.bf16.mxu0 0
      %4489 = vmatpush1.bf16.msra.mxu0 %v3397
      %4490 = vmatprep.subr.bf16.mxu0 0
      %4491 = vmatpush1.bf16.msra.mxu0 %v3253
      %4492 = vmatprep.subr.bf16.mxu0 0
      %4493 = vmatpush1.bf16.msra.mxu0 %v3255
      %4494 = vmatprep.subr.bf16.mxu0 0
      %4495 = vmatpush1.bf16.msra.mxu0 %v3257
      %4496 = vmatprep.subr.bf16.mxu0 0
      %4497 = vmatpush1.bf16.msra.mxu0 %v3401
      %4498 = vmatprep.subr.bf16.mxu0 0
      %4499 = vmatpush1.bf16.msra.mxu0 %v3266
      %4500 = vmatprep.subr.bf16.mxu0 0
      %4501 = vmatpush1.bf16.msra.mxu0 %v3268
      %4502 = vmatprep.subr.bf16.mxu0 0
      %4503 = vmatpush1.bf16.msra.mxu0 %v3270
      %4504 = vmatprep.subr.bf16.mxu0 0
      %4505 = vmatpush1.bf16.msra.mxu0 %v3405
      %4506 = vmatprep.subr.bf16.mxu0 0
      %4507 = vmatpush1.bf16.msra.mxu0 %v3279
      %4508 = vmatprep.subr.bf16.mxu0 0
      %4509 = vmatpush1.bf16.msra.mxu0 %v3281
      %4510 = vmatprep.subr.bf16.mxu0 0
      %4511 = vmatpush1.bf16.msra.mxu0 %v3283
      %4512 = vmatprep.subr.bf16.mxu0 0
      %4513 = vmatpush1.bf16.msra.mxu0 %v3288
      %4514 = vmatprep.subr.bf16.mxu0 0
      %4515 = vmatpush1.bf16.msra.mxu0 %v3290
      %4516 = vmatprep.mubr.bf16.mxu0 %v4111
      %4517 = vmatmul.mubr.bf16.gmra.mrb[0].mxu0 %v4110
      %v4518 = vpop.f32.mrb[0].mxu0
      %v4519 = vadd.f32 %v4407, %v4518
      %v4520 = vpop.f32.mrb[0].mxu0
      %v4521 = vpop.f32.mrb[0].mxu0
      %v4522 = vadd.f32 %v4410, %v4521
      %v4523 = vpop.f32.mrb[0].mxu0
      %4524 = vmatprep.mubr.bf16.mxu0 %v4123
      %4525 = vmatmul.mubr.bf16.gmra.mrb[0].mxu0 %v4122
      %v4526 = vpop.f32.mrb[0].mxu0
      %v4527 = vadd.f32 %v4415, %v4526
      %v4528 = vpop.f32.mrb[0].mxu0
      %v4529 = vpop.f32.mrb[0].mxu0
      %v4530 = vadd.f32 %v4418, %v4529
      %v4531 = vpop.f32.mrb[0].mxu0
      %4532 = vmatprep.mubr.bf16.mxu0 %v4135
      %4533 = vmatmul.mubr.bf16.gmra.mrb[0].mxu0 %v4134
      %v4534 = vpop.f32.mrb[0].mxu0
      %v4535 = vadd.f32 %v4423, %v4534
      %v4536 = vpop.f32.mrb[0].mxu0
      %v4537 = vpop.f32.mrb[0].mxu0
      %v4538 = vadd.f32 %v4426, %v4537
      %v4539 = vpop.f32.mrb[0].mxu0
      %4540 = vmatprep.mubr.bf16.mxu0 %v4147
      %4541 = vmatmul.mubr.bf16.gmra.mrb[0].mxu0 %v4146
      %v4542 = vpop.f32.mrb[0].mxu0
      %v4543 = vadd.f32 %v4431, %v4542
      %v4544 = vpop.f32.mrb[0].mxu0
      %v4545 = vpop.f32.mrb[0].mxu0
      %v4546 = vadd.f32 %v4434, %v4545
      %v4547 = vpop.f32.mrb[0].mxu0
      %4548 = vmatprep.mubr.bf16.mxu0 %v4159
      %4549 = vmatmul.mubr.bf16.gmra.mrb[0].mxu0 %v4158
      %v4550 = vpop.f32.mrb[0].mxu0
      %v4551 = vadd.f32 %v4439, %v4550
      %v4552 = vpop.f32.mrb[0].mxu0
      %v4553 = vpop.f32.mrb[0].mxu0
      %v4554 = vadd.f32 %v4442, %v4553
      %v4555 = vpop.f32.mrb[0].mxu0
      %4556 = vmatprep.mubr.bf16.mxu0 %v4171
      %4557 = vmatmul.mubr.bf16.gmra.mrb[0].mxu0 %v4170
      %v4558 = vpop.f32.mrb[0].mxu0
      %v4559 = vadd.f32 %v4447, %v4558
      %v4560 = vpop.f32.mrb[0].mxu0
      %v4561 = vpop.f32.mrb[0].mxu0
      %v4562 = vadd.f32 %v4450, %v4561
      %v4563 = vpop.f32.mrb[0].mxu0
      %4564 = vmatprep.mubr.bf16.mxu0 %v4183
      %4565 = vmatmul.mubr.bf16.gmra.mrb[0].mxu0 %v4182
      %v4566 = vpop.f32.mrb[0].mxu0
      %v4567 = vadd.f32 %v4455, %v4566
      %v4568 = vpop.f32.mrb[0].mxu0
      %v4569 = vpop.f32.mrb[0].mxu0
      %v4570 = vadd.f32 %v4458, %v4569
      %v4571 = vpop.f32.mrb[0].mxu0
      %4572 = vmatprep.mubr.bf16.mxu0 %v4195
      %4573 = vmatmul.mubr.bf16.gmra.mrb[0].mxu0 %v4194
      %v4574 = vpop.f32.mrb[0].mxu0
      %v4575 = vadd.f32 %v4463, %v4574
      %v4576 = vpop.f32.mrb[0].mxu0
      %v4577 = vpop.f32.mrb[0].mxu0
      %v4578 = vadd.f32 %v4466, %v4577
      %v4579 = vpop.f32.mrb[0].mxu0
      %4580 = vmatprep.mubr.bf16.mxu0 %v4207
      %4581 = vmatmul.mubr.bf16.gmra.mrb[0].mxu0 %v4206
      %v4582 = vpop.f32.mrb[0].mxu0
      %v4583 = vadd.f32 %v4471, %v4582
      %v4584 = vpop.f32.mrb[0].mxu0
      %v4585 = vpop.f32.mrb[0].mxu0
      %v4586 = vadd.f32 %v4474, %v4585
      %v4587 = vpop.f32.mrb[0].mxu0
      %4588 = vmatprep.mubr.bf16.mxu0 %v4219
      %4589 = vmatmul.mubr.bf16.gmra.mrb[0].mxu0 %v4218
      %v4590 = vpop.f32.mrb[0].mxu0
      %v4591 = vadd.f32 %v4479, %v4590
      %v4592 = vpop.f32.mrb[0].mxu0
      %v4593 = vpop.f32.mrb[0].mxu0
      %v4594 = vpop.f32.mrb[0].mxu0
      %4595 = vdwg.mxu0
      %4596 = vmatprep.subr.bf16.mxu0 0
      %4597 = vmatpush1.bf16.msra.mxu0 %v3292
      %4598 = vmatprep.subr.bf16.mxu0 0
      %4599 = vmatpush1.bf16.msra.mxu0 %v3409
      %4600 = vmatprep.subr.bf16.mxu0 0
      %4601 = vmatpush1.bf16.msra.mxu0 %v3301
      %4602 = vmatprep.subr.bf16.mxu0 0
      %4603 = vmatpush1.bf16.msra.mxu0 %v3303
      %4604 = vmatprep.subr.bf16.mxu0 0
      %4605 = vmatpush1.bf16.msra.mxu0 %v3305
      %4606 = vmatprep.subr.bf16.mxu0 0
      %4607 = vmatpush1.bf16.msra.mxu0 %v3413
      %4608 = vmatprep.subr.bf16.mxu0 0
      %4609 = vmatpush1.bf16.msra.mxu0 %v3314
      %4610 = vmatprep.subr.bf16.mxu0 0
      %4611 = vmatpush1.bf16.msra.mxu0 %v3316
      %4612 = vmatprep.subr.bf16.mxu0 0
      %4613 = vmatpush1.bf16.msra.mxu0 %v3318
      %4614 = vmatprep.subr.bf16.mxu0 0
      %4615 = vmatpush1.bf16.msra.mxu0 %v3417
      %4616 = vmatprep.subr.bf16.mxu0 0
      %4617 = vmatpush1.bf16.msra.mxu0 %v3327
      %4618 = vmatprep.subr.bf16.mxu0 0
      %4619 = vmatpush1.bf16.msra.mxu0 %v3329
      %4620 = vmatprep.subr.bf16.mxu0 0
      %4621 = vmatpush1.bf16.msra.mxu0 %v3331
      %4622 = vmatprep.subr.bf16.mxu0 0
      %4623 = vmatpush1.bf16.msra.mxu0 %v3336
      %4624 = vmatprep.subr.bf16.mxu0 0
      %4625 = vmatpush1.bf16.msra.mxu0 %v3338
      %4626 = vmatprep.subr.bf16.mxu0 0
      %4627 = vmatpush1.bf16.msra.mxu0 %v3340
      %4628 = vmatprep.mubr.bf16.mxu0 %v4113
      %4629 = vmatmul.mubr.bf16.gmra.mrb[0].mxu0 %v4112
      %v4630 = vpop.f32.mrb[0].mxu0
      %v4631 = vadd.f32 %v4519, %v4630
      %v4632 = vpop.f32.mrb[0].mxu0
      %v4633 = vpop.f32.mrb[0].mxu0
      %v4634 = vadd.f32 %v4522, %v4633
      %v4635 = vpop.f32.mrb[0].mxu0
      %4636 = vmatprep.mubr.bf16.mxu0 %v4125
      %4637 = vmatmul.mubr.bf16.gmra.mrb[0].mxu0 %v4124
      %v4638 = vpop.f32.mrb[0].mxu0
      %v4639 = vadd.f32 %v4527, %v4638
      %v4640 = vpop.f32.mrb[0].mxu0
      %v4641 = vpop.f32.mrb[0].mxu0
      %v4642 = vadd.f32 %v4530, %v4641
      %v4643 = vpop.f32.mrb[0].mxu0
      %4644 = vmatprep.mubr.bf16.mxu0 %v4137
      %4645 = vmatmul.mubr.bf16.gmra.mrb[0].mxu0 %v4136
      %v4646 = vpop.f32.mrb[0].mxu0
      %v4647 = vadd.f32 %v4535, %v4646
      %v4648 = vpop.f32.mrb[0].mxu0
      %v4649 = vpop.f32.mrb[0].mxu0
      %v4650 = vadd.f32 %v4538, %v4649
      %v4651 = vpop.f32.mrb[0].mxu0
      %4652 = vmatprep.mubr.bf16.mxu0 %v4149
      %4653 = vmatmul.mubr.bf16.gmra.mrb[0].mxu0 %v4148
      %v4654 = vpop.f32.mrb[0].mxu0
      %v4655 = vadd.f32 %v4543, %v4654
      %v4656 = vpop.f32.mrb[0].mxu0
      %v4657 = vpop.f32.mrb[0].mxu0
      %v4658 = vadd.f32 %v4546, %v4657
      %v4659 = vpop.f32.mrb[0].mxu0
      %4660 = vmatprep.mubr.bf16.mxu0 %v4161
      %4661 = vmatmul.mubr.bf16.gmra.mrb[0].mxu0 %v4160
      %v4662 = vpop.f32.mrb[0].mxu0
      %v4663 = vadd.f32 %v4551, %v4662
      %v4664 = vpop.f32.mrb[0].mxu0
      %v4665 = vpop.f32.mrb[0].mxu0
      %v4666 = vadd.f32 %v4554, %v4665
      %v4667 = vpop.f32.mrb[0].mxu0
      %4668 = vmatprep.mubr.bf16.mxu0 %v4173
      %4669 = vmatmul.mubr.bf16.gmra.mrb[0].mxu0 %v4172
      %v4670 = vpop.f32.mrb[0].mxu0
      %v4671 = vadd.f32 %v4559, %v4670
      %v4672 = vpop.f32.mrb[0].mxu0
      %v4673 = vpop.f32.mrb[0].mxu0
      %v4674 = vadd.f32 %v4562, %v4673
      %v4675 = vpop.f32.mrb[0].mxu0
      %4676 = vmatprep.mubr.bf16.mxu0 %v4185
      %4677 = vmatmul.mubr.bf16.gmra.mrb[0].mxu0 %v4184
      %v4678 = vpop.f32.mrb[0].mxu0
      %v4679 = vadd.f32 %v4567, %v4678
      %v4680 = vpop.f32.mrb[0].mxu0
      %v4681 = vpop.f32.mrb[0].mxu0
      %v4682 = vadd.f32 %v4570, %v4681
      %v4683 = vpop.f32.mrb[0].mxu0
      %4684 = vmatprep.mubr.bf16.mxu0 %v4197
      %4685 = vmatmul.mubr.bf16.gmra.mrb[0].mxu0 %v4196
      %v4686 = vpop.f32.mrb[0].mxu0
      %v4687 = vadd.f32 %v4575, %v4686
      %v4688 = vpop.f32.mrb[0].mxu0
      %v4689 = vpop.f32.mrb[0].mxu0
      %v4690 = vadd.f32 %v4578, %v4689
      %v4691 = vpop.f32.mrb[0].mxu0
      %4692 = vmatprep.mubr.bf16.mxu0 %v4209
      %4693 = vmatmul.mubr.bf16.gmra.mrb[0].mxu0 %v4208
      %v4694 = vpop.f32.mrb[0].mxu0
      %v4695 = vadd.f32 %v4583, %v4694
      %v4696 = vpop.f32.mrb[0].mxu0
      %v4697 = vpop.f32.mrb[0].mxu0
      %v4698 = vadd.f32 %v4586, %v4697
      %v4699 = vpop.f32.mrb[0].mxu0
      %4700 = vmatprep.mubr.bf16.mxu0 %v4221
      %4701 = vmatmul.mubr.bf16.gmra.mrb[0].mxu0 %v4220
      %v4702 = vpop.f32.mrb[0].mxu0
      %v4703 = vadd.f32 %v4591, %v4702
      %v4704 = vpop.f32.mrb[0].mxu0
      %v4705 = vpop.f32.mrb[0].mxu0
      %v4706 = vpop.f32.mrb[0].mxu0
      %4707 = vdwg.mxu0
      %4708 = vmatprep.subr.bf16.mxu0 0
      %4709 = vmatpush1.bf16.msra.mxu0 %v3421
      %4710 = vmatprep.subr.bf16.mxu0 0
      %4711 = vmatpush1.bf16.msra.mxu0 %v3349
      %4712 = vmatprep.subr.bf16.mxu0 0
      %4713 = vmatpush1.bf16.msra.mxu0 %v3351
      %4714 = vmatprep.subr.bf16.mxu0 0
      %4715 = vmatpush1.bf16.msra.mxu0 %v3353
      %4716 = vmatprep.subr.bf16.mxu0 0
      %4717 = vmatpush1.bf16.msra.mxu0 %v3425
      %4718 = vmatprep.subr.bf16.mxu0 0
      %4719 = vmatpush1.bf16.msra.mxu0 %v3362
      %4720 = vmatprep.subr.bf16.mxu0 0
      %4721 = vmatpush1.bf16.msra.mxu0 %v3364
      %4722 = vmatprep.subr.bf16.mxu0 0
      %4723 = vmatpush1.bf16.msra.mxu0 %v3366
      %4724 = vmatprep.subr.bf16.mxu0 0
      %4725 = vmatpush1.bf16.msra.mxu0 %v3429
      %4726 = vmatprep.subr.bf16.mxu0 0
      %4727 = vmatpush1.bf16.msra.mxu0 %v3375
      %4728 = vmatprep.subr.bf16.mxu0 0
      %4729 = vmatpush1.bf16.msra.mxu0 %v3377
      %4730 = vmatprep.subr.bf16.mxu0 0
      %4731 = vmatpush1.bf16.msra.mxu0 %v3379
      %4732 = vmatprep.subr.bf16.mxu0 0
      %4733 = vmatpush1.bf16.msra.mxu0 %v3438
      %4734 = vmatprep.subr.bf16.mxu0 0
      %4735 = vmatpush1.bf16.msra.mxu0 %v3440
      %4736 = vmatprep.subr.bf16.mxu0 0
      %4737 = vmatpush1.bf16.msra.mxu0 %v3442
      %4738 = vmatprep.subr.bf16.mxu0 0
      %4739 = vmatpush1.bf16.msra.mxu0 %v3444
      %4740 = vmatprep.mubr.bf16.mxu0 %v4115
      %4741 = vmatmul.mubr.bf16.gmra.mrb[0].mxu0 %v4114
      %v4742 = vpop.f32.mrb[0].mxu0
      %v4743 = vadd.f32 %v4631, %v4742
      %v4744 = vpop.f32.mrb[0].mxu0
      %v4745 = vpop.f32.mrb[0].mxu0
      %v4746 = vadd.f32 %v4634, %v4745
      %v4747 = vpop.f32.mrb[0].mxu0
      %4748 = vmatprep.mubr.bf16.mxu0 %v4127
      %4749 = vmatmul.mubr.bf16.gmra.mrb[0].mxu0 %v4126
      %v4750 = vpop.f32.mrb[0].mxu0
      %v4751 = vadd.f32 %v4639, %v4750
      %v4752 = vpop.f32.mrb[0].mxu0
      %v4753 = vpop.f32.mrb[0].mxu0
      %v4754 = vadd.f32 %v4642, %v4753
      %v4755 = vpop.f32.mrb[0].mxu0
      %4756 = vmatprep.mubr.bf16.mxu0 %v4139
      %4757 = vmatmul.mubr.bf16.gmra.mrb[0].mxu0 %v4138
      %v4758 = vpop.f32.mrb[0].mxu0
      %v4759 = vadd.f32 %v4647, %v4758
      %v4760 = vpop.f32.mrb[0].mxu0
      %v4761 = vpop.f32.mrb[0].mxu0
      %v4762 = vadd.f32 %v4650, %v4761
      %v4763 = vpop.f32.mrb[0].mxu0
      %4764 = vmatprep.mubr.bf16.mxu0 %v4151
      %4765 = vmatmul.mubr.bf16.gmra.mrb[0].mxu0 %v4150
      %v4766 = vpop.f32.mrb[0].mxu0
      %v4767 = vadd.f32 %v4655, %v4766
      %v4768 = vpop.f32.mrb[0].mxu0
      %v4769 = vpop.f32.mrb[0].mxu0
      %v4770 = vadd.f32 %v4658, %v4769
      %v4771 = vpop.f32.mrb[0].mxu0
      %4772 = vmatprep.mubr.bf16.mxu0 %v4163
      %4773 = vmatmul.mubr.bf16.gmra.mrb[0].mxu0 %v4162
      %v4774 = vpop.f32.mrb[0].mxu0
      %v4775 = vadd.f32 %v4663, %v4774
      %v4776 = vpop.f32.mrb[0].mxu0
      %v4777 = vpop.f32.mrb[0].mxu0
      %v4778 = vadd.f32 %v4666, %v4777
      %v4779 = vpop.f32.mrb[0].mxu0
      %4780 = vmatprep.mubr.bf16.mxu0 %v4175
      %4781 = vmatmul.mubr.bf16.gmra.mrb[0].mxu0 %v4174
      %v4782 = vpop.f32.mrb[0].mxu0
      %v4783 = vadd.f32 %v4671, %v4782
      %v4784 = vpop.f32.mrb[0].mxu0
      %v4785 = vpop.f32.mrb[0].mxu0
      %v4786 = vadd.f32 %v4674, %v4785
      %v4787 = vpop.f32.mrb[0].mxu0
      %4788 = vmatprep.mubr.bf16.mxu0 %v4187
      %4789 = vmatmul.mubr.bf16.gmra.mrb[0].mxu0 %v4186
      %v4790 = vpop.f32.mrb[0].mxu0
      %v4791 = vadd.f32 %v4679, %v4790
      %v4792 = vpop.f32.mrb[0].mxu0
      %v4793 = vpop.f32.mrb[0].mxu0
      %v4794 = vadd.f32 %v4682, %v4793
      %v4795 = vpop.f32.mrb[0].mxu0
      %4796 = vmatprep.mubr.bf16.mxu0 %v4199
      %4797 = vmatmul.mubr.bf16.gmra.mrb[0].mxu0 %v4198
      %v4798 = vpop.f32.mrb[0].mxu0
      %v4799 = vadd.f32 %v4687, %v4798
      %v4800 = vpop.f32.mrb[0].mxu0
      %v4801 = vpop.f32.mrb[0].mxu0
      %v4802 = vadd.f32 %v4690, %v4801
      %v4803 = vpop.f32.mrb[0].mxu0
      %4804 = vmatprep.mubr.bf16.mxu0 %v4211
      %4805 = vmatmul.mubr.bf16.gmra.mrb[0].mxu0 %v4210
      %v4806 = vpop.f32.mrb[0].mxu0
      %v4807 = vadd.f32 %v4695, %v4806
      %v4808 = vpop.f32.mrb[0].mxu0
      %v4809 = vpop.f32.mrb[0].mxu0
      %v4810 = vadd.f32 %v4698, %v4809
      %v4811 = vpop.f32.mrb[0].mxu0
      %4812 = vmatprep.mubr.bf16.mxu0 %v4223
      %4813 = vmatmul.mubr.bf16.gmra.mrb[0].mxu0 %v4222
      %v4814 = vpop.f32.mrb[0].mxu0
      %v4815 = vadd.f32 %v4703, %v4814
      %v4816 = vpop.f32.mrb[0].mxu0
      %v4817 = vpop.f32.mrb[0].mxu0
      %v4818 = vpop.f32.mrb[0].mxu0
      %4819 = vdwg.mxu0
      %4820 = vmatprep.subr.bf16.mxu0 0
      %4821 = vmatpush1.bf16.msra.mxu0 %v3446
      %4822 = vmatprep.subr.bf16.mxu0 0
      %4823 = vmatpush1.bf16.msra.mxu0 %v3448
      %4824 = vmatprep.subr.bf16.mxu0 0
      %4825 = vmatpush1.bf16.msra.mxu0 %v3450
      %4826 = vmatprep.subr.bf16.mxu0 0
      %4827 = vmatpush1.bf16.msra.mxu0 %v3452
      %4828 = vmatprep.subr.bf16.mxu0 0
      %4829 = vmatpush1.bf16.msra.mxu0 %v3454
      %4830 = vmatprep.subr.bf16.mxu0 0
      %4831 = vmatpush1.bf16.msra.mxu0 %v3456
      %4832 = vmatprep.subr.bf16.mxu0 0
      %4833 = vmatpush1.bf16.msra.mxu0 %v3458
      %4834 = vmatprep.subr.bf16.mxu0 0
      %4835 = vmatpush1.bf16.msra.mxu0 %v3460
      %4836 = vmatprep.subr.bf16.mxu0 0
      %4837 = vmatpush1.bf16.msra.mxu0 %v3462
      %4838 = vmatprep.subr.bf16.mxu0 0
      %4839 = vmatpush1.bf16.msra.mxu0 %v3464
      %4840 = vmatprep.subr.bf16.mxu0 0
      %4841 = vmatpush1.bf16.msra.mxu0 %v3466
      %4842 = vmatprep.subr.bf16.mxu0 0
      %4843 = vmatpush1.bf16.msra.mxu0 %v3468
      %4844 = vmatprep.subr.bf16.mxu0 0
      %4845 = vmatpush1.bf16.msra.mxu0 %v3470
      %4846 = vmatprep.subr.bf16.mxu0 0
      %4847 = vmatpush1.bf16.msra.mxu0 %v3472
      %4848 = vmatprep.subr.bf16.mxu0 0
      %4849 = vmatpush1.bf16.msra.mxu0 %v3474
      %4850 = vmatprep.subr.bf16.mxu0 0
      %4851 = vmatpush1.bf16.msra.mxu0 %v3476
      %4852 = vmatprep.mubr.bf16.mxu0 %v4117
      %4853 = vmatmul.mubr.bf16.gmra.mrb[0].mxu0 %v4116
      %v4854 = vpop.f32.mrb[0].mxu0
      %v4855 = vadd.f32 %v4743, %v4854
      %v4856 = vpop.f32.mrb[0].mxu0
      %v4857 = vpop.f32.mrb[0].mxu0
      %v4858 = vadd.f32 %v4746, %v4857
      %v4859 = vpop.f32.mrb[0].mxu0
      %4860 = vmatprep.mubr.bf16.mxu0 %v4129
      %4861 = vmatmul.mubr.bf16.gmra.mrb[0].mxu0 %v4128
      %v4862 = vpop.f32.mrb[0].mxu0
      %v4863 = vadd.f32 %v4751, %v4862
      %v4864 = vpop.f32.mrb[0].mxu0
      %v4865 = vpop.f32.mrb[0].mxu0
      %v4866 = vadd.f32 %v4754, %v4865
      %v4867 = vpop.f32.mrb[0].mxu0
      %4868 = vmatprep.mubr.bf16.mxu0 %v4141
      %4869 = vmatmul.mubr.bf16.gmra.mrb[0].mxu0 %v4140
      %v4870 = vpop.f32.mrb[0].mxu0
      %v4871 = vadd.f32 %v4759, %v4870
      %v4872 = vpop.f32.mrb[0].mxu0
      %v4873 = vpop.f32.mrb[0].mxu0
      %v4874 = vadd.f32 %v4762, %v4873
      %v4875 = vpop.f32.mrb[0].mxu0
      %4876 = vmatprep.mubr.bf16.mxu0 %v4153
      %4877 = vmatmul.mubr.bf16.gmra.mrb[0].mxu0 %v4152
      %v4878 = vpop.f32.mrb[0].mxu0
      %v4879 = vadd.f32 %v4767, %v4878
      %v4880 = vpop.f32.mrb[0].mxu0
      %v4881 = vpop.f32.mrb[0].mxu0
      %v4882 = vadd.f32 %v4770, %v4881
      %v4883 = vpop.f32.mrb[0].mxu0
      %4884 = vmatprep.mubr.bf16.mxu0 %v4165
      %4885 = vmatmul.mubr.bf16.gmra.mrb[0].mxu0 %v4164
      %v4886 = vpop.f32.mrb[0].mxu0
      %v4887 = vadd.f32 %v4775, %v4886
      %v4888 = vpop.f32.mrb[0].mxu0
      %v4889 = vpop.f32.mrb[0].mxu0
      %v4890 = vadd.f32 %v4778, %v4889
      %v4891 = vpop.f32.mrb[0].mxu0
      %4892 = vmatprep.mubr.bf16.mxu0 %v4177
      %4893 = vmatmul.mubr.bf16.gmra.mrb[0].mxu0 %v4176
      %v4894 = vpop.f32.mrb[0].mxu0
      %v4895 = vadd.f32 %v4783, %v4894
      %v4896 = vpop.f32.mrb[0].mxu0
      %v4897 = vpop.f32.mrb[0].mxu0
      %v4898 = vadd.f32 %v4786, %v4897
      %v4899 = vpop.f32.mrb[0].mxu0
      %4900 = vmatprep.mubr.bf16.mxu0 %v4189
      %4901 = vmatmul.mubr.bf16.gmra.mrb[0].mxu0 %v4188
      %v4902 = vpop.f32.mrb[0].mxu0
      %v4903 = vadd.f32 %v4791, %v4902
      %v4904 = vpop.f32.mrb[0].mxu0
      %v4905 = vpop.f32.mrb[0].mxu0
      %v4906 = vadd.f32 %v4794, %v4905
      %v4907 = vpop.f32.mrb[0].mxu0
      %4908 = vmatprep.mubr.bf16.mxu0 %v4201
      %4909 = vmatmul.mubr.bf16.gmra.mrb[0].mxu0 %v4200
      %v4910 = vpop.f32.mrb[0].mxu0
      %v4911 = vadd.f32 %v4799, %v4910
      %v4912 = vpop.f32.mrb[0].mxu0
      %v4913 = vpop.f32.mrb[0].mxu0
      %v4914 = vadd.f32 %v4802, %v4913
      %v4915 = vpop.f32.mrb[0].mxu0
      %4916 = vmatprep.mubr.bf16.mxu0 %v4213
      %4917 = vmatmul.mubr.bf16.gmra.mrb[0].mxu0 %v4212
      %v4918 = vpop.f32.mrb[0].mxu0
      %v4919 = vadd.f32 %v4807, %v4918
      %v4920 = vpop.f32.mrb[0].mxu0
      %v4921 = vpop.f32.mrb[0].mxu0
      %v4922 = vadd.f32 %v4810, %v4921
      %v4923 = vpop.f32.mrb[0].mxu0
      %4924 = vmatprep.mubr.bf16.mxu0 %v4225
      %4925 = vmatmul.mubr.bf16.gmra.mrb[0].mxu0 %v4224
      %v4926 = vpop.f32.mrb[0].mxu0
      %v4927 = vadd.f32 %v4815, %v4926
      %v4928 = vpop.f32.mrb[0].mxu0
      %v4929 = vpop.f32.mrb[0].mxu0
      %v4930 = vpop.f32.mrb[0].mxu0
      %4931 = vdwg.mxu0
      %4932 = vmatprep.subr.bf16.mxu0 0
      %4933 = vmatpush1.bf16.msra.mxu0 %v3478
      %4934 = vmatprep.subr.bf16.mxu0 0
      %4935 = vmatpush1.bf16.msra.mxu0 %v3480
      %4936 = vmatprep.subr.bf16.mxu0 0
      %4937 = vmatpush1.bf16.msra.mxu0 %v3482
      %4938 = vmatprep.subr.bf16.mxu0 0
      %4939 = vmatpush1.bf16.msra.mxu0 %v3484
      %4940 = vmatprep.subr.bf16.mxu0 0
      %4941 = vmatpush1.bf16.msra.mxu0 %v3486
      %4942 = vmatprep.subr.bf16.mxu0 0
      %4943 = vmatpush1.bf16.msra.mxu0 %v3488
      %4944 = vmatprep.subr.bf16.mxu0 0
      %4945 = vmatpush1.bf16.msra.mxu0 %v3490
      %4946 = vmatprep.subr.bf16.mxu0 0
      %4947 = vmatpush1.bf16.msra.mxu0 %v3492
      %4948 = vmatprep.subr.bf16.mxu0 0
      %4949 = vmatpush1.bf16.msra.mxu0 %v3494
      %4950 = vmatprep.subr.bf16.mxu0 0
      %4951 = vmatpush1.bf16.msra.mxu0 %v3496
      %4952 = vmatprep.subr.bf16.mxu0 0
      %4953 = vmatpush1.bf16.msra.mxu0 %v3498
      %4954 = vmatprep.subr.bf16.mxu0 0
      %4955 = vmatpush1.bf16.msra.mxu0 %v3500
      %4956 = vmatprep.subr.bf16.mxu0 0
      %4957 = vmatpush1.bf16.msra.mxu0 %v3502
      %4958 = vmatprep.subr.bf16.mxu0 0
      %4959 = vmatpush1.bf16.msra.mxu0 %v4370
      %4960 = vmatprep.subr.bf16.mxu0 0
      %4961 = vmatpush1.bf16.msra.mxu0 0
      %4962 = vmatprep.subr.bf16.mxu0 0
      %4963 = vmatpush1.bf16.msra.mxu0 0
      %4964 = vmatprep.mubr.bf16.mxu0 %v4340
      %4965 = vmatmul.mubr.bf16.gmra.mrb[0].mxu0 %v4118
      %v4966 = vpop.f32.mrb[0].mxu0
      %v4967 = vadd.f32 %v4855, %v4966
      %v4968 = vpop.f32.mrb[0].mxu0
      %v4969 = vpop.f32.mrb[0].mxu0
      %v4970 = vadd.f32 %v4858, %v4969
      %v4971 = vpop.f32.mrb[0].mxu0
      %4972 = vmatprep.mubr.bf16.mxu0 %v4343
      %4973 = vmatmul.mubr.bf16.gmra.mrb[0].mxu0 %v4130
      %v4974 = vpop.f32.mrb[0].mxu0
      %v4975 = vadd.f32 %v4863, %v4974
      %v4976 = vpop.f32.mrb[0].mxu0
      %v4977 = vpop.f32.mrb[0].mxu0
      %v4978 = vadd.f32 %v4866, %v4977
      %v4979 = vpop.f32.mrb[0].mxu0
      %4980 = vmatprep.mubr.bf16.mxu0 %v4346
      %4981 = vmatmul.mubr.bf16.gmra.mrb[0].mxu0 %v4142
      %v4982 = vpop.f32.mrb[0].mxu0
      %v4983 = vadd.f32 %v4871, %v4982
      %v4984 = vpop.f32.mrb[0].mxu0
      %v4985 = vpop.f32.mrb[0].mxu0
      %v4986 = vadd.f32 %v4874, %v4985
      %v4987 = vpop.f32.mrb[0].mxu0
      %4988 = vmatprep.mubr.bf16.mxu0 %v4349
      %4989 = vmatmul.mubr.bf16.gmra.mrb[0].mxu0 %v4154
      %v4990 = vpop.f32.mrb[0].mxu0
      %v4991 = vadd.f32 %v4879, %v4990
      %v4992 = vpop.f32.mrb[0].mxu0
      %v4993 = vpop.f32.mrb[0].mxu0
      %v4994 = vadd.f32 %v4882, %v4993
      %v4995 = vpop.f32.mrb[0].mxu0
      %4996 = vmatprep.mubr.bf16.mxu0 %v4352
      %4997 = vmatmul.mubr.bf16.gmra.mrb[0].mxu0 %v4166
      %v4998 = vpop.f32.mrb[0].mxu0
      %v4999 = vadd.f32 %v4887, %v4998
      %v5000 = vpop.f32.mrb[0].mxu0
      %v5001 = vpop.f32.mrb[0].mxu0
      %v5002 = vadd.f32 %v4890, %v5001
      %v5003 = vpop.f32.mrb[0].mxu0
      %5004 = vmatprep.mubr.bf16.mxu0 %v4355
      %5005 = vmatmul.mubr.bf16.gmra.mrb[0].mxu0 %v4178
      %v5006 = vpop.f32.mrb[0].mxu0
      %v5007 = vadd.f32 %v4895, %v5006
      %v5008 = vpop.f32.mrb[0].mxu0
      %v5009 = vpop.f32.mrb[0].mxu0
      %v5010 = vadd.f32 %v4898, %v5009
      %v5011 = vpop.f32.mrb[0].mxu0
      %5012 = vmatprep.mubr.bf16.mxu0 %v4358
      %5013 = vmatmul.mubr.bf16.gmra.mrb[0].mxu0 %v4190
      %v5014 = vpop.f32.mrb[0].mxu0
      %v5015 = vadd.f32 %v4903, %v5014
      %v5016 = vpop.f32.mrb[0].mxu0
      %v5017 = vpop.f32.mrb[0].mxu0
      %v5018 = vadd.f32 %v4906, %v5017
      %v5019 = vpop.f32.mrb[0].mxu0
      %5020 = vmatprep.mubr.bf16.mxu0 %v4361
      %5021 = vmatmul.mubr.bf16.gmra.mrb[0].mxu0 %v4202
      %v5022 = vpop.f32.mrb[0].mxu0
      %v5023 = vadd.f32 %v4911, %v5022
      %v5024 = vpop.f32.mrb[0].mxu0
      %v5025 = vpop.f32.mrb[0].mxu0
      %v5026 = vadd.f32 %v4914, %v5025
      %v5027 = vpop.f32.mrb[0].mxu0
      %5028 = vmatprep.mubr.bf16.mxu0 %v4364
      %5029 = vmatmul.mubr.bf16.gmra.mrb[0].mxu0 %v4214
      %v5030 = vpop.f32.mrb[0].mxu0
      %v5031 = vadd.f32 %v4919, %v5030
      %v5032 = vpop.f32.mrb[0].mxu0
      %v5033 = vpop.f32.mrb[0].mxu0
      %v5034 = vadd.f32 %v4922, %v5033
      %v5035 = vpop.f32.mrb[0].mxu0
      %5036 = vmatprep.mubr.bf16.mxu0 %v4367
      %5037 = vmatmul.mubr.bf16.gmra.mrb[0].mxu0 %v4226
      %v5038 = vpop.f32.mrb[0].mxu0
      %v5039 = vadd.f32 %v4927, %v5038
      %v5040 = vpop.f32.mrb[0].mxu0
      %v5041 = vpop.f32.mrb[0].mxu0
      %v5042 = vpop.f32.mrb[0].mxu0
      %5043 = vdwg.mxu0
      %v5044 = vmax.f32 %v4967, 0.0
      %v5045 = vmax.f32 %v4970, 0.0
      %v5046 = vmax.f32 %v4975, 0.0
      %v5047 = vmax.f32 %v4978, 0.0
      %v5048 = vmax.f32 %v4983, 0.0
      %v5049 = vmax.f32 %v4986, 0.0
      %v5050 = vmax.f32 %v4991, 0.0
      %v5051 = vmax.f32 %v4994, 0.0
      %v5052 = vmax.f32 %v4999, 0.0
      %v5053 = vmax.f32 %v5002, 0.0
      %v5054 = vmax.f32 %v5007, 0.0
      %v5055 = vmax.f32 %v5010, 0.0
      %v5056 = vmax.f32 %v5015, 0.0
      %v5057 = vmax.f32 %v5018, 0.0
      %v5058 = vmax.f32 %v5023, 0.0
      %v5059 = vmax.f32 %v5026, 0.0
      %v5060 = vmax.f32 %v5031, 0.0
      %v5061 = vmax.f32 %v5034, 0.0
      %v5062 = vmax.f32 %v5039, 0.0
      %v5063 = vpack.c.bf16 %v5045, %v5044
      %v5064 = vpack.c.bf16 %v5047, %v5046
      %v5065 = vpack.c.bf16 %v5049, %v5048
      %v5066 = vpack.c.bf16 %v5051, %v5050
      %v5067 = vpack.c.bf16 %v5053, %v5052
      %v5068 = vpack.c.bf16 %v5055, %v5054
      %v5069 = vpack.c.bf16 %v5057, %v5056
      %v5070 = vpack.c.bf16 %v5059, %v5058
      %v5071 = vpack.c.bf16 %v5061, %v5060
      %v5072 = vpack.c.bf16 %v5062, %v5062
      %v5073 = vld [vmem:[%s11] sm:$0xf]
      %v5074 = vld [vmem:[%s12] sm:$0xf]
      %5076 = vset.pattern.permute.xlu0 0
      %5077 = vperm.xlu0 %5076, %v5074
      %v5078 = vpop.permute.xlu0 %5077
      %v5082 = vunpack.c.l.s4 1983009808
      %v5083 = vunpack.c.0.s8 %v5082
      %v5084 = vlaneseq
      %v5085 = vshrl.u32 %v5084, 7
      %v5086 = vsub.s32 %v5083, %v5085
      %v5087 = vrot.slane %v5073, %v5086
      %v5088 = vcombine.high %v5087, %v5087
      %vm5090 = vcmask 179200
      %v5092 = vsel %vm5090, %v5088, 0
      %v5095 = vsel %vm1725, %v5072, 0
      %5097 = vmatprep.subr.bf16.mxu0 0
      %5098 = vmatpush1.bf16.msra.mxu0 %v5063
      %5099 = vmatprep.subr.bf16.mxu0 0
      %5100 = vmatpush1.bf16.msra.mxu0 %v5064
      %5101 = vmatprep.subr.bf16.mxu0 0
      %5102 = vmatpush1.bf16.msra.mxu0 %v5065
      %5103 = vmatprep.subr.bf16.mxu0 0
      %5104 = vmatpush1.bf16.msra.mxu0 %v5066
      %5105 = vmatprep.subr.bf16.mxu0 0
      %5106 = vmatpush1.bf16.msra.mxu0 %v5067
      %5107 = vmatprep.subr.bf16.mxu0 0
      %5108 = vmatpush1.bf16.msra.mxu0 %v5068
      %5109 = vmatprep.subr.bf16.mxu0 0
      %5110 = vmatpush1.bf16.msra.mxu0 %v5069
      %5111 = vmatprep.subr.bf16.mxu0 0
      %5112 = vmatpush1.bf16.msra.mxu0 %v5070
      %5113 = vmatprep.subr.bf16.mxu0 0
      %5114 = vmatpush1.bf16.msra.mxu0 %v5071
      %5115 = vmatprep.subr.bf16.mxu0 0
      %5116 = vmatpush1.bf16.msra.mxu0 %v5095
      %5117 = vmatprep.subr.bf16.mxu0 0
      %5118 = vmatpush1.bf16.msra.mxu0 0
      %5119 = vmatprep.subr.bf16.mxu0 0
      %5120 = vmatpush1.bf16.msra.mxu0 0
      %5121 = vmatprep.subr.bf16.mxu0 0
      %5122 = vmatpush1.bf16.msra.mxu0 0
      %5123 = vmatprep.subr.bf16.mxu0 0
      %5124 = vmatpush1.bf16.msra.mxu0 0
      %5125 = vmatprep.subr.bf16.mxu0 0
      %5126 = vmatpush1.bf16.msra.mxu0 0
      %5127 = vmatprep.subr.bf16.mxu0 0
      %5128 = vmatpush1.bf16.msra.mxu0 0
      %5129 = vmatprep.mubr.bf16.mxu0 %v5092
      %5130 = vmatmul.mubr.bf16.gmra.mrb[0].mxu0 %v5087
      %v5131 = vpop.f32.mrb[0].mxu0
      %v5132 = vadd.f32 %v5078, %v5131
      %v5133 = vpop.f32.mrb[0].mxu0
      %v5134 = vpop.f32.mrb[0].mxu0
      %v5135 = vpop.f32.mrb[0].mxu0
      %5136 = vdwg.mxu0
      %vm5137 = vcmask 11264
      %5138 = vst.msk [vmem:[%s438] sm:$0xf] %vm5137, %v5132
      %p5139 = scmp.lt.s32.totalorder %s24, 1
      %s5140 = scalar_select %p5139, %s24, 1
      %s5141 = smul.addr %s5140, 4
      %s5142 = scalar_lea.vmem %s13, %s5141
      // Predicated region
      $region73: #{net_forward.1} parent=71 // pred_check
        %p5143 = pneg %p320
      $region74: #{net_forward.1} parent=71 // pred_check_branch
        %5145 = sbr.rel (%p5143) target = $region76
      $region75: #{net_forward.1} parent=71 // pred_region
        _
      $region76: #{net_forward.1} parent=71 // pred_fallthru
        _
    $region72: #{net_forward.1} parent=5 // pred_fallthru
      _
    %p5146 = scmp.le.s32.totalorder 2, %s19
    // Predicated region
    $region77: #{net_forward.1} parent=5 // pred_check
      %p5147 = pneg %p5146
    $region78: #{net_forward.1} parent=5 // pred_check_branch
      %5149 = sbr.rel (%p5147) target = $region80
    $region79: #{net_forward.1} parent=5 // pred_region
      %s5150 = ssub.s32 %s19, 2
      // Predicated region
      $region81: #{net_forward.1} parent=79 // pred_check
        %p5151 = pneg %p326
      $region82: #{net_forward.1} parent=79 // pred_check_branch
        %5153 = sbr.rel (%p5151) target = $region84
      $region83: #{net_forward.1} parent=79 // pred_region
        %p5154 = scmp.lt.s32.totalorder %s25, 1
        %s5155 = scalar_select %p5154, %s25, 1
        %s5156 = smul.addr %s5155, 4
        %s5157 = scalar_lea.vmem %s13, %s5156
      $region84: #{net_forward.1} parent=79 // pred_fallthru
        _
    $region80: #{net_forward.1} parent=5 // pred_fallthru
      _
  $region6: #{net_forward.1} parent=0 // loop_footer
    %s23 = sadd.s32 1, %s19
  $region7: #{net_forward.1} parent=0 // loop_footer_branch
    %18 = sbr.rel target = $region3
  $region8: #{net_forward.1} parent=0 // loop_exit
    _

</llo_original>
